<compile_context>
chip_gen: v7x
topology: tpu7x:2x2x1
jax: 0.10.0
libtpu: 0.0.40
codegen_flags: <defaults>
</compile_context>

<pallas_src>
import functools
import math

import jax
import jax.numpy as jnp
from jax import lax
from jax.experimental import pallas as pl
from jax.experimental.pallas import tpu as pltpu


def _attention_block_kernel(x_ref, gamma_ref, beta_ref, wqkv_ref, bqkv_ref,
                            wproj_ref, bproj_ref, out_ref, *,
                            num_heads, eps, approx_recip):
    cdt = wqkv_ref.dtype                       # MXU input dtype (bf16 in the default path)
    bt, t, c = x_ref.shape                     # block_b batch rows per grid step
    hd = c // num_heads
    rows = bt * t

    # ---- LayerNorm over channels (f32 statistics) ----
    x = x_ref[...].reshape(rows, c).astype(jnp.float32)
    mean = jnp.mean(x, axis=-1, keepdims=True)
    var = jnp.mean(jnp.square(x - mean), axis=-1, keepdims=True)
    xn = (x - mean) * lax.rsqrt(var + eps) * gamma_ref[...] + beta_ref[...]   # (rows, c) f32

    # ---- qkv projection for all block rows at once (1/sqrt(hd) folded into Q columns).
    # Single cast to compute dtype right after the bias add: only one (rows, 3c) live
    # intermediate in cdt, no per-slice casts in the head loop.
    qkv = (jnp.dot(xn.astype(cdt), wqkv_ref[...], preferred_element_type=jnp.float32)
           + bqkv_ref[...]).astype(cdt)                                        # (rows, 3c)

    # ---- per-head attention, batched over the bt batch rows ----
    # One static loop over heads only (H is small and compile-time constant); the batch
    # rows go through 3-D batched dot_generals, so unrolled-body count does not scale
    # with block_b.
    head_outs = []
    for h in range(num_heads):
        c0 = h * hd
        q_h = qkv[:, c0:c0 + hd].reshape(bt, t, hd)               # pre-scaled by 1/sqrt(hd)
        k_h = qkv[:, c + c0:c + c0 + hd].reshape(bt, t, hd)
        v_h = qkv[:, 2 * c + c0:2 * c + c0 + hd].reshape(bt, t, hd)

        # scores[b, i, j] = sum_d q[b, i, d] * k[b, j, d]   (no materialized transpose)
        s = lax.dot_general(q_h, k_h, (((2,), (2,)), ((0,), (0,))),
                            preferred_element_type=jnp.float32)   # (bt, t, t) f32
        s = s - jnp.max(s, axis=-1, keepdims=True)
        p = jnp.exp(s)
        denom = jnp.sum(p, axis=-1, keepdims=True)                # (bt, t, 1) f32

        # Unnormalized PV matmul, then scale the (t, hd) outputs instead of the (t, t)
        # probabilities (deferred softmax normalization).
        o_h = lax.dot_general(p.astype(cdt), v_h, (((2,), (1,)), ((0,), (0,))),
                              preferred_element_type=jnp.float32)  # (bt, t, hd) f32
        if approx_recip:
            o_h = o_h * pl.reciprocal(denom, approx=True)          # EUP slot
        else:
            o_h = o_h / denom
        head_outs.append(o_h)

    # ---- pack heads into one (rows, c) slab; single dense output projection ----
    h_slab = jnp.concatenate(head_outs, axis=-1).reshape(rows, c)  # head h -> cols [h*hd, ...)
    y = jnp.dot(h_slab.astype(cdt), wproj_ref[...], preferred_element_type=jnp.float32)

    out_ref[...] = (xn + y + bproj_ref[...]).reshape(bt, t, c).astype(out_ref.dtype)


def _pick_block_b(batch, seq, target_rows=256):
    """Largest divisor of `batch` so block_b*seq ~ target_rows, preferring 256-aligned row
    counts (full MXU passes on v6e/v7x, also 128-aligned for v5e), while keeping at least
    two grid steps when batch >= 2 so v7x's two TensorCores can both be used."""
    limit = batch if batch < 2 else max(1, batch // 2)
    want = max(1, min(limit, target_rows // max(seq, 1)))
    divisors = [d for d in range(1, limit + 1) if batch % d == 0]
    aligned = [d for d in divisors if d <= want and (d * seq) % 256 == 0]
    if aligned:
        return max(aligned)
    fitting = [d for d in divisors if d <= want]
    return max(fitting) if fitting else 1


def _vmem_limit_bytes(block_b, seq, c, x_itemsize, c_itemsize, weight_buffers):
    """Working-set estimate (with headroom) for an explicit vmem_limit_bytes."""
    rows = block_b * seq
    io = 2 * 2 * rows * c * x_itemsize                                   # x + out, 2 buffers
    weights = weight_buffers * ((3 * c * c + c * c) * c_itemsize + 6 * c * 4)
    inter = (rows * c * 4                                                # xn (f32)
             + rows * 3 * c * c_itemsize                                 # qkv (compute dtype)
             + 2 * block_b * seq * seq * 4                               # live score/prob tiles
             + 2 * rows * c * 4)                                         # head slab + projection
    est = io + weights + inter
    # >= 32 MiB (above v5e's 16 MiB scoped default), <= 64 MiB (v7x physical VMEM).
    return int(min(64 << 20, max(32 << 20, 2 * est)))


def attention_block(x, params, *, num_heads=8, eps=1e-5,
                    compute_dtype=jnp.bfloat16, block_b=None,
                    vmem_limit_bytes=None, approx_softmax_recip=None):
    B, T, C = x.shape
    assert C % num_heads == 0, "channels must be divisible by num_heads"
    hd = C // num_heads
    f32 = jnp.float32
    if approx_softmax_recip is None:
        # approx reciprocal (~1e-3 rel error in attn weights) only on the bf16 path; exact
        # division on the f32 path.  Override explicitly if exact softmax is required.
        approx_softmax_recip = (compute_dtype != jnp.float32)

    # Fold the attention scale into the Q columns of the qkv projection (weight AND bias).
    scale = 1.0 / math.sqrt(hd)
    col_scale = jnp.concatenate([jnp.full((C,), scale, f32), jnp.ones((2 * C,), f32)])
    wqkv = (params['wqkv'].astype(f32) * col_scale[None, :]).astype(compute_dtype)  # (C, 3C)
    bqkv = (params['bqkv'].astype(f32) * col_scale).reshape(1, 3 * C)                # f32
    wproj = params['wproj'].astype(compute_dtype)                                    # (C, C)
    bproj = params['bproj'].astype(f32).reshape(1, C)
    gamma = params['gamma'].astype(f32).reshape(1, C)
    beta = params['beta'].astype(f32).reshape(1, C)

    if block_b is None:
        block_b = _pick_block_b(B, T)
    assert B % block_b == 0, "block_b must divide the batch size (trailing rows would be dropped)"
    grid = (B // block_b,)

    kernel = functools.partial(
        _attention_block_kernel, num_heads=num_heads, eps=eps,
        approx_recip=approx_softmax_recip)

    wbytes = jnp.dtype(compute_dtype).itemsize
    xbytes = jnp.dtype(x.dtype).itemsize
    cost = pl.CostEstimate(
        flops=int(B * T * C * (8 * C + 4 * T)),            # qkv + QK^T + PV + proj
        transcendentals=int(B * num_heads * T * T),        # exp in softmax
        bytes_accessed=int(2 * B * T * C * xbytes + 4 * C * C * wbytes + 24 * C),
    )

    def build(single_buffer_weights):
        limit = vmem_limit_bytes
        if limit is None:
            limit = _vmem_limit_bytes(block_b, T, C, xbytes, wbytes,
                                      weight_buffers=1 if single_buffer_weights else 2)

        def const_spec(shape):
            # Grid-invariant inputs: single-buffer them (index_map is constant, so a second
            # buffer is pure VMEM waste — matters most on v7x/64MiB and v5e/16MiB scoped).
            if single_buffer_weights:
                return pl.BlockSpec(shape, lambda i: (0,) * len(shape),
                                    pipeline_mode=pl.Buffered(1))
            return pl.BlockSpec(shape, lambda i: (0,) * len(shape))

        return pl.pallas_call(
            kernel,
            out_shape=jax.ShapeDtypeStruct((B, T, C), x.dtype),
            grid=grid,
            in_specs=[
                pl.BlockSpec((block_b, T, C), lambda i: (i, 0, 0)),   # x: block_b rows per step
                const_spec((1, C)),                                   # gamma
                const_spec((1, C)),                                   # beta
                const_spec((C, 3 * C)),                               # qkv weight (scale folded)
                const_spec((1, 3 * C)),                               # qkv bias   (scale folded)
                const_spec((C, C)),                                   # proj weight
                const_spec((1, C)),                                   # proj bias
            ],
            out_specs=pl.BlockSpec((block_b, T, C), lambda i: (i, 0, 0)),
            compiler_params=pltpu.CompilerParams(
                dimension_semantics=("parallel",),
                vmem_limit_bytes=limit),
            cost_estimate=cost,
        )

    args = (x, gamma, beta, wqkv, bqkv, wproj, bproj)
    try:
        return build(True)(*args)
    except Exception:
        # pipeline_mode=pl.Buffered(1) not supported by this jax/libtpu combo — fall back to
        # default double-buffered weight specs (VMEM-footprint-only difference).
        return build(False)(*args)


def reference(x, params, *, num_heads=8, eps=1e-5):
    """Pure-JAX f32 reference with identical intended semantics."""
    B, T, C = x.shape
    hd = C // num_heads
    mean = x.mean(-1, keepdims=True)
    var = ((x - mean) ** 2).mean(-1, keepdims=True)
    xn = (x - mean) / jnp.sqrt(var + eps) * params['gamma'] + params['beta']
    qkv = xn @ params['wqkv'] + params['bqkv']
    q = qkv[..., :C].reshape(B, T, num_heads, hd)
    k = qkv[..., C:2 * C].reshape(B, T, num_heads, hd)
    v = qkv[..., 2 * C:].reshape(B, T, num_heads, hd)
    s = jnp.einsum('bqhd,bkhd->bhqk', q, k) / math.sqrt(hd)
    p = jax.nn.softmax(s, axis=-1)
    h = jnp.einsum('bhqk,bkhd->bqhd', p, v).reshape(B, T, C)
    return xn + h @ params['wproj'] + params['bproj']


if __name__ == "__main__":
    B, T, C, NUM_HEADS = 2, 8, 32, 8

    key = jax.random.PRNGKey(0)
    kx, kw1, kb1, kw2, kb2 = jax.random.split(key, 5)

    x = jax.random.normal(kx, (B, T, C), dtype=jnp.float32)

    # Deterministic parameter init (shapes follow the module's __init__).
    params = {
        'gamma': jnp.ones((C,), jnp.float32),                       # LayerNorm weight
        'beta': jnp.zeros((C,), jnp.float32),                       # LayerNorm bias
        'wqkv': jax.random.normal(kw1, (C, 3 * C), jnp.float32) * (1.0 / math.sqrt(C)),
        'bqkv': jax.random.normal(kb1, (3 * C,), jnp.float32) * 0.02,
        'wproj': jax.random.normal(kw2, (C, C), jnp.float32) * (1.0 / math.sqrt(C)),
        'bproj': jax.random.normal(kb2, (C,), jnp.float32) * 0.02,
    }

    # Default (production) path: bf16 MXU inputs, f32 accumulation, approx reciprocal.
    out_bf16 = attention_block(x, params, num_heads=NUM_HEADS)
    # Full-precision path: identical structure with f32 MXU inputs / exact division.
    out_f32 = attention_block(x, params, num_heads=NUM_HEADS, compute_dtype=jnp.float32)
    out_bf16, out_f32 = jax.block_until_ready((out_bf16, out_f32))

    ref = reference(x, params, num_heads=NUM_HEADS)
    assert out_bf16.shape == (B, T, C) and out_f32.shape == (B, T, C)
    assert jnp.allclose(out_f32, ref, rtol=1e-4, atol=1e-4), "f32 kernel mismatch vs reference"
    assert jnp.allclose(out_bf16, ref, rtol=5e-2, atol=5e-2), "bf16 kernel mismatch vs reference"

    print("KERNEL_OK")
</pallas_src>

<mosaic_0001>
module attributes {stable_mosaic.version = 11 : i64} {
  func.func @_attention_block_kernel(%arg0: i32, %arg1: memref<1x8x32xf32, #tpu.memory_space<vmem>>, %arg2: memref<1x32xf32, #tpu.memory_space<vmem>>, %arg3: memref<1x32xf32, #tpu.memory_space<vmem>>, %arg4: memref<32x96xbf16, #tpu.memory_space<vmem>>, %arg5: memref<1x96xf32, #tpu.memory_space<vmem>>, %arg6: memref<32x32xbf16, #tpu.memory_space<vmem>>, %arg7: memref<1x32xf32, #tpu.memory_space<vmem>>, %arg8: memref<1x8x32xf32, #tpu.memory_space<vmem>>) attributes {dimension_semantics = [#tpu.dimension_semantics<parallel>], iteration_bounds = array<i64: 2>, scalar_prefetch = 0 : i64, scratch_operands = 0 : i64, tpu.core_type = #tpu.core_type<tc>, window_params = [{transform_indices = @transform_0, window_bounds = array<i64: 1, 8, 32>}, {pipeline_mode = #tpu.pipeline_mode<synchronous>, transform_indices = @transform_1, window_bounds = array<i64: 1, 32>}, {pipeline_mode = #tpu.pipeline_mode<synchronous>, transform_indices = @transform_2, window_bounds = array<i64: 1, 32>}, {pipeline_mode = #tpu.pipeline_mode<synchronous>, transform_indices = @transform_3, window_bounds = array<i64: 32, 96>}, {pipeline_mode = #tpu.pipeline_mode<synchronous>, transform_indices = @transform_4, window_bounds = array<i64: 1, 96>}, {pipeline_mode = #tpu.pipeline_mode<synchronous>, transform_indices = @transform_5, window_bounds = array<i64: 32, 32>}, {pipeline_mode = #tpu.pipeline_mode<synchronous>, transform_indices = @transform_6, window_bounds = array<i64: 1, 32>}, {transform_indices = @transform_7, window_bounds = array<i64: 1, 8, 32>}]} {
    %c0 = arith.constant 0 : index
    %c0_0 = arith.constant 0 : index
    %c0_1 = arith.constant 0 : index
    %0 = vector.load %arg1[%c0, %c0_0, %c0_1] : memref<1x8x32xf32, #tpu.memory_space<vmem>>, vector<1x8x32xf32>
    %1 = vector.shape_cast %0 : vector<1x8x32xf32> to vector<8x32xf32>
    %cst = arith.constant dense<0.000000e+00> : vector<8xf32>
    %2 = vector.multi_reduction <add>, %1, %cst [1] : vector<8x32xf32> to vector<8xf32>
    %3 = vector.shape_cast %2 : vector<8xf32> to vector<8x1xf32>
    %cst_2 = arith.constant 3.200000e+01 : f32
    %4 = vector.broadcast %cst_2 : f32 to vector<8x1xf32>
    %5 = arith.divf %3, %4 : vector<8x1xf32>
    %6 = vector.broadcast %5 : vector<8x1xf32> to vector<8x32xf32>
    %7 = arith.subf %1, %6 : vector<8x32xf32>
    %8 = arith.mulf %7, %7 : vector<8x32xf32>
    %cst_3 = arith.constant dense<0.000000e+00> : vector<8xf32>
    %9 = vector.multi_reduction <add>, %8, %cst_3 [1] : vector<8x32xf32> to vector<8xf32>
    %10 = vector.shape_cast %9 : vector<8xf32> to vector<8x1xf32>
    %cst_4 = arith.constant 3.200000e+01 : f32
    %11 = vector.broadcast %cst_4 : f32 to vector<8x1xf32>
    %12 = arith.divf %10, %11 : vector<8x1xf32>
    %13 = vector.broadcast %5 : vector<8x1xf32> to vector<8x32xf32>
    %14 = arith.subf %1, %13 : vector<8x32xf32>
    %cst_5 = arith.constant 9.99999974E-6 : f32
    %15 = vector.broadcast %cst_5 : f32 to vector<8x1xf32>
    %16 = arith.addf %12, %15 : vector<8x1xf32>
    %17 = math.rsqrt %16 : vector<8x1xf32>
    %18 = vector.broadcast %17 : vector<8x1xf32> to vector<8x32xf32>
    %19 = arith.mulf %14, %18 : vector<8x32xf32>
    %c0_6 = arith.constant 0 : index
    %c0_7 = arith.constant 0 : index
    %20 = vector.load %arg2[%c0_6, %c0_7] : memref<1x32xf32, #tpu.memory_space<vmem>>, vector<1x32xf32>
    %21 = vector.broadcast %20 : vector<1x32xf32> to vector<8x32xf32>
    %22 = arith.mulf %19, %21 : vector<8x32xf32>
    %c0_8 = arith.constant 0 : index
    %c0_9 = arith.constant 0 : index
    %23 = vector.load %arg3[%c0_8, %c0_9] : memref<1x32xf32, #tpu.memory_space<vmem>>, vector<1x32xf32>
    %24 = vector.broadcast %23 : vector<1x32xf32> to vector<8x32xf32>
    %25 = arith.addf %22, %24 : vector<8x32xf32>
    %26 = arith.truncf %25 : vector<8x32xf32> to vector<8x32xbf16>
    %c0_10 = arith.constant 0 : index
    %c0_11 = arith.constant 0 : index
    %27 = vector.load %arg4[%c0_10, %c0_11] : memref<32x96xbf16, #tpu.memory_space<vmem>>, vector<32x96xbf16>
    %cst_12 = arith.constant dense<0.000000e+00> : vector<8x96xf32>
    %28 = tpu.matmul %26, %27, %cst_12 {dimension_numbers = #tpu.dot_dimension_numbers<[1], [0], [0], [1], [0, 0, 1, 1], [], []>} : vector<8x32xbf16>, vector<32x96xbf16>, vector<8x96xf32> -> vector<8x96xf32>
    %c0_13 = arith.constant 0 : index
    %c0_14 = arith.constant 0 : index
    %29 = vector.load %arg5[%c0_13, %c0_14] : memref<1x96xf32, #tpu.memory_space<vmem>>, vector<1x96xf32>
    %30 = vector.broadcast %29 : vector<1x96xf32> to vector<8x96xf32>
    %31 = arith.addf %28, %30 : vector<8x96xf32>
    %32 = arith.truncf %31 : vector<8x96xf32> to vector<8x96xbf16>
    %33 = vector.extract_strided_slice %32 {offsets = [0, 0], sizes = [8, 4], strides = [1, 1]} : vector<8x96xbf16> to vector<8x4xbf16>
    %34 = vector.shape_cast %33 : vector<8x4xbf16> to vector<1x8x4xbf16>
    %35 = vector.extract_strided_slice %32 {offsets = [0, 32], sizes = [8, 4], strides = [1, 1]} : vector<8x96xbf16> to vector<8x4xbf16>
    %36 = vector.shape_cast %35 : vector<8x4xbf16> to vector<1x8x4xbf16>
    %37 = vector.extract_strided_slice %32 {offsets = [0, 64], sizes = [8, 4], strides = [1, 1]} : vector<8x96xbf16> to vector<8x4xbf16>
    %38 = vector.shape_cast %37 : vector<8x4xbf16> to vector<1x8x4xbf16>
    %cst_15 = arith.constant dense<0.000000e+00> : vector<1x8x8xf32>
    %39 = tpu.matmul %34, %36, %cst_15 {dimension_numbers = #tpu.dot_dimension_numbers<[2], [2], [1], [1], [0, 0, 0, 1, 1, 1], [0], [0]>} : vector<1x8x4xbf16>, vector<1x8x4xbf16>, vector<1x8x8xf32> -> vector<1x8x8xf32>
    %cst_16 = arith.constant dense<0xFF800000> : vector<1x8xf32>
    %40 = vector.multi_reduction <maximumf>, %39, %cst_16 [2] : vector<1x8x8xf32> to vector<1x8xf32>
    %41 = vector.shape_cast %40 : vector<1x8xf32> to vector<1x8x1xf32>
    %42 = vector.broadcast %41 : vector<1x8x1xf32> to vector<1x8x8xf32>
    %43 = arith.subf %39, %42 : vector<1x8x8xf32>
    %44 = math.exp %43 : vector<1x8x8xf32>
    %cst_17 = arith.constant dense<0.000000e+00> : vector<1x8xf32>
    %45 = vector.multi_reduction <add>, %44, %cst_17 [2] : vector<1x8x8xf32> to vector<1x8xf32>
    %46 = vector.shape_cast %45 : vector<1x8xf32> to vector<1x8x1xf32>
    %47 = arith.truncf %44 : vector<1x8x8xf32> to vector<1x8x8xbf16>
    %cst_18 = arith.constant dense<0.000000e+00> : vector<1x8x4xf32>
    %48 = tpu.matmul %47, %38, %cst_18 {dimension_numbers = #tpu.dot_dimension_numbers<[2], [1], [1], [2], [0, 0, 0, 1, 1, 2], [0], [0]>} : vector<1x8x8xbf16>, vector<1x8x4xbf16>, vector<1x8x4xf32> -> vector<1x8x4xf32>
    %49 = tpu.reciprocal %46 {approx = true} : vector<1x8x1xf32> -> vector<1x8x1xf32>
    %50 = vector.broadcast %49 : vector<1x8x1xf32> to vector<1x8x4xf32>
    %51 = arith.mulf %48, %50 : vector<1x8x4xf32>
    %52 = vector.extract_strided_slice %32 {offsets = [0, 4], sizes = [8, 4], strides = [1, 1]} : vector<8x96xbf16> to vector<8x4xbf16>
    %53 = vector.shape_cast %52 : vector<8x4xbf16> to vector<1x8x4xbf16>
    %54 = vector.extract_strided_slice %32 {offsets = [0, 36], sizes = [8, 4], strides = [1, 1]} : vector<8x96xbf16> to vector<8x4xbf16>
    %55 = vector.shape_cast %54 : vector<8x4xbf16> to vector<1x8x4xbf16>
    %56 = vector.extract_strided_slice %32 {offsets = [0, 68], sizes = [8, 4], strides = [1, 1]} : vector<8x96xbf16> to vector<8x4xbf16>
    %57 = vector.shape_cast %56 : vector<8x4xbf16> to vector<1x8x4xbf16>
    %cst_19 = arith.constant dense<0.000000e+00> : vector<1x8x8xf32>
    %58 = tpu.matmul %53, %55, %cst_19 {dimension_numbers = #tpu.dot_dimension_numbers<[2], [2], [1], [1], [0, 0, 0, 1, 1, 1], [0], [0]>} : vector<1x8x4xbf16>, vector<1x8x4xbf16>, vector<1x8x8xf32> -> vector<1x8x8xf32>
    %cst_20 = arith.constant dense<0xFF800000> : vector<1x8xf32>
    %59 = vector.multi_reduction <maximumf>, %58, %cst_20 [2] : vector<1x8x8xf32> to vector<1x8xf32>
    %60 = vector.shape_cast %59 : vector<1x8xf32> to vector<1x8x1xf32>
    %61 = vector.broadcast %60 : vector<1x8x1xf32> to vector<1x8x8xf32>
    %62 = arith.subf %58, %61 : vector<1x8x8xf32>
    %63 = math.exp %62 : vector<1x8x8xf32>
    %cst_21 = arith.constant dense<0.000000e+00> : vector<1x8xf32>
    %64 = vector.multi_reduction <add>, %63, %cst_21 [2] : vector<1x8x8xf32> to vector<1x8xf32>
    %65 = vector.shape_cast %64 : vector<1x8xf32> to vector<1x8x1xf32>
    %66 = arith.truncf %63 : vector<1x8x8xf32> to vector<1x8x8xbf16>
    %cst_22 = arith.constant dense<0.000000e+00> : vector<1x8x4xf32>
    %67 = tpu.matmul %66, %57, %cst_22 {dimension_numbers = #tpu.dot_dimension_numbers<[2], [1], [1], [2], [0, 0, 0, 1, 1, 2], [0], [0]>} : vector<1x8x8xbf16>, vector<1x8x4xbf16>, vector<1x8x4xf32> -> vector<1x8x4xf32>
    %68 = tpu.reciprocal %65 {approx = true} : vector<1x8x1xf32> -> vector<1x8x1xf32>
    %69 = vector.broadcast %68 : vector<1x8x1xf32> to vector<1x8x4xf32>
    %70 = arith.mulf %67, %69 : vector<1x8x4xf32>
    %71 = vector.extract_strided_slice %32 {offsets = [0, 8], sizes = [8, 4], strides = [1, 1]} : vector<8x96xbf16> to vector<8x4xbf16>
    %72 = vector.shape_cast %71 : vector<8x4xbf16> to vector<1x8x4xbf16>
    %73 = vector.extract_strided_slice %32 {offsets = [0, 40], sizes = [8, 4], strides = [1, 1]} : vector<8x96xbf16> to vector<8x4xbf16>
    %74 = vector.shape_cast %73 : vector<8x4xbf16> to vector<1x8x4xbf16>
    %75 = vector.extract_strided_slice %32 {offsets = [0, 72], sizes = [8, 4], strides = [1, 1]} : vector<8x96xbf16> to vector<8x4xbf16>
    %76 = vector.shape_cast %75 : vector<8x4xbf16> to vector<1x8x4xbf16>
    %cst_23 = arith.constant dense<0.000000e+00> : vector<1x8x8xf32>
    %77 = tpu.matmul %72, %74, %cst_23 {dimension_numbers = #tpu.dot_dimension_numbers<[2], [2], [1], [1], [0, 0, 0, 1, 1, 1], [0], [0]>} : vector<1x8x4xbf16>, vector<1x8x4xbf16>, vector<1x8x8xf32> -> vector<1x8x8xf32>
    %cst_24 = arith.constant dense<0xFF800000> : vector<1x8xf32>
    %78 = vector.multi_reduction <maximumf>, %77, %cst_24 [2] : vector<1x8x8xf32> to vector<1x8xf32>
    %79 = vector.shape_cast %78 : vector<1x8xf32> to vector<1x8x1xf32>
    %80 = vector.broadcast %79 : vector<1x8x1xf32> to vector<1x8x8xf32>
    %81 = arith.subf %77, %80 : vector<1x8x8xf32>
    %82 = math.exp %81 : vector<1x8x8xf32>
    %cst_25 = arith.constant dense<0.000000e+00> : vector<1x8xf32>
    %83 = vector.multi_reduction <add>, %82, %cst_25 [2] : vector<1x8x8xf32> to vector<1x8xf32>
    %84 = vector.shape_cast %83 : vector<1x8xf32> to vector<1x8x1xf32>
    %85 = arith.truncf %82 : vector<1x8x8xf32> to vector<1x8x8xbf16>
    %cst_26 = arith.constant dense<0.000000e+00> : vector<1x8x4xf32>
    %86 = tpu.matmul %85, %76, %cst_26 {dimension_numbers = #tpu.dot_dimension_numbers<[2], [1], [1], [2], [0, 0, 0, 1, 1, 2], [0], [0]>} : vector<1x8x8xbf16>, vector<1x8x4xbf16>, vector<1x8x4xf32> -> vector<1x8x4xf32>
    %87 = tpu.reciprocal %84 {approx = true} : vector<1x8x1xf32> -> vector<1x8x1xf32>
    %88 = vector.broadcast %87 : vector<1x8x1xf32> to vector<1x8x4xf32>
    %89 = arith.mulf %86, %88 : vector<1x8x4xf32>
    %90 = vector.extract_strided_slice %32 {offsets = [0, 12], sizes = [8, 4], strides = [1, 1]} : vector<8x96xbf16> to vector<8x4xbf16>
    %91 = vector.shape_cast %90 : vector<8x4xbf16> to vector<1x8x4xbf16>
    %92 = vector.extract_strided_slice %32 {offsets = [0, 44], sizes = [8, 4], strides = [1, 1]} : vector<8x96xbf16> to vector<8x4xbf16>
    %93 = vector.shape_cast %92 : vector<8x4xbf16> to vector<1x8x4xbf16>
    %94 = vector.extract_strided_slice %32 {offsets = [0, 76], sizes = [8, 4], strides = [1, 1]} : vector<8x96xbf16> to vector<8x4xbf16>
    %95 = vector.shape_cast %94 : vector<8x4xbf16> to vector<1x8x4xbf16>
    %cst_27 = arith.constant dense<0.000000e+00> : vector<1x8x8xf32>
    %96 = tpu.matmul %91, %93, %cst_27 {dimension_numbers = #tpu.dot_dimension_numbers<[2], [2], [1], [1], [0, 0, 0, 1, 1, 1], [0], [0]>} : vector<1x8x4xbf16>, vector<1x8x4xbf16>, vector<1x8x8xf32> -> vector<1x8x8xf32>
    %cst_28 = arith.constant dense<0xFF800000> : vector<1x8xf32>
    %97 = vector.multi_reduction <maximumf>, %96, %cst_28 [2] : vector<1x8x8xf32> to vector<1x8xf32>
    %98 = vector.shape_cast %97 : vector<1x8xf32> to vector<1x8x1xf32>
    %99 = vector.broadcast %98 : vector<1x8x1xf32> to vector<1x8x8xf32>
    %100 = arith.subf %96, %99 : vector<1x8x8xf32>
    %101 = math.exp %100 : vector<1x8x8xf32>
    %cst_29 = arith.constant dense<0.000000e+00> : vector<1x8xf32>
    %102 = vector.multi_reduction <add>, %101, %cst_29 [2] : vector<1x8x8xf32> to vector<1x8xf32>
    %103 = vector.shape_cast %102 : vector<1x8xf32> to vector<1x8x1xf32>
    %104 = arith.truncf %101 : vector<1x8x8xf32> to vector<1x8x8xbf16>
    %cst_30 = arith.constant dense<0.000000e+00> : vector<1x8x4xf32>
    %105 = tpu.matmul %104, %95, %cst_30 {dimension_numbers = #tpu.dot_dimension_numbers<[2], [1], [1], [2], [0, 0, 0, 1, 1, 2], [0], [0]>} : vector<1x8x8xbf16>, vector<1x8x4xbf16>, vector<1x8x4xf32> -> vector<1x8x4xf32>
    %106 = tpu.reciprocal %103 {approx = true} : vector<1x8x1xf32> -> vector<1x8x1xf32>
    %107 = vector.broadcast %106 : vector<1x8x1xf32> to vector<1x8x4xf32>
    %108 = arith.mulf %105, %107 : vector<1x8x4xf32>
    %109 = vector.extract_strided_slice %32 {offsets = [0, 16], sizes = [8, 4], strides = [1, 1]} : vector<8x96xbf16> to vector<8x4xbf16>
    %110 = vector.shape_cast %109 : vector<8x4xbf16> to vector<1x8x4xbf16>
    %111 = vector.extract_strided_slice %32 {offsets = [0, 48], sizes = [8, 4], strides = [1, 1]} : vector<8x96xbf16> to vector<8x4xbf16>
    %112 = vector.shape_cast %111 : vector<8x4xbf16> to vector<1x8x4xbf16>
    %113 = vector.extract_strided_slice %32 {offsets = [0, 80], sizes = [8, 4], strides = [1, 1]} : vector<8x96xbf16> to vector<8x4xbf16>
    %114 = vector.shape_cast %113 : vector<8x4xbf16> to vector<1x8x4xbf16>
    %cst_31 = arith.constant dense<0.000000e+00> : vector<1x8x8xf32>
    %115 = tpu.matmul %110, %112, %cst_31 {dimension_numbers = #tpu.dot_dimension_numbers<[2], [2], [1], [1], [0, 0, 0, 1, 1, 1], [0], [0]>} : vector<1x8x4xbf16>, vector<1x8x4xbf16>, vector<1x8x8xf32> -> vector<1x8x8xf32>
    %cst_32 = arith.constant dense<0xFF800000> : vector<1x8xf32>
    %116 = vector.multi_reduction <maximumf>, %115, %cst_32 [2] : vector<1x8x8xf32> to vector<1x8xf32>
    %117 = vector.shape_cast %116 : vector<1x8xf32> to vector<1x8x1xf32>
    %118 = vector.broadcast %117 : vector<1x8x1xf32> to vector<1x8x8xf32>
    %119 = arith.subf %115, %118 : vector<1x8x8xf32>
    %120 = math.exp %119 : vector<1x8x8xf32>
    %cst_33 = arith.constant dense<0.000000e+00> : vector<1x8xf32>
    %121 = vector.multi_reduction <add>, %120, %cst_33 [2] : vector<1x8x8xf32> to vector<1x8xf32>
    %122 = vector.shape_cast %121 : vector<1x8xf32> to vector<1x8x1xf32>
    %123 = arith.truncf %120 : vector<1x8x8xf32> to vector<1x8x8xbf16>
    %cst_34 = arith.constant dense<0.000000e+00> : vector<1x8x4xf32>
    %124 = tpu.matmul %123, %114, %cst_34 {dimension_numbers = #tpu.dot_dimension_numbers<[2], [1], [1], [2], [0, 0, 0, 1, 1, 2], [0], [0]>} : vector<1x8x8xbf16>, vector<1x8x4xbf16>, vector<1x8x4xf32> -> vector<1x8x4xf32>
    %125 = tpu.reciprocal %122 {approx = true} : vector<1x8x1xf32> -> vector<1x8x1xf32>
    %126 = vector.broadcast %125 : vector<1x8x1xf32> to vector<1x8x4xf32>
    %127 = arith.mulf %124, %126 : vector<1x8x4xf32>
    %128 = vector.extract_strided_slice %32 {offsets = [0, 20], sizes = [8, 4], strides = [1, 1]} : vector<8x96xbf16> to vector<8x4xbf16>
    %129 = vector.shape_cast %128 : vector<8x4xbf16> to vector<1x8x4xbf16>
    %130 = vector.extract_strided_slice %32 {offsets = [0, 52], sizes = [8, 4], strides = [1, 1]} : vector<8x96xbf16> to vector<8x4xbf16>
    %131 = vector.shape_cast %130 : vector<8x4xbf16> to vector<1x8x4xbf16>
    %132 = vector.extract_strided_slice %32 {offsets = [0, 84], sizes = [8, 4], strides = [1, 1]} : vector<8x96xbf16> to vector<8x4xbf16>
    %133 = vector.shape_cast %132 : vector<8x4xbf16> to vector<1x8x4xbf16>
    %cst_35 = arith.constant dense<0.000000e+00> : vector<1x8x8xf32>
    %134 = tpu.matmul %129, %131, %cst_35 {dimension_numbers = #tpu.dot_dimension_numbers<[2], [2], [1], [1], [0, 0, 0, 1, 1, 1], [0], [0]>} : vector<1x8x4xbf16>, vector<1x8x4xbf16>, vector<1x8x8xf32> -> vector<1x8x8xf32>
    %cst_36 = arith.constant dense<0xFF800000> : vector<1x8xf32>
    %135 = vector.multi_reduction <maximumf>, %134, %cst_36 [2] : vector<1x8x8xf32> to vector<1x8xf32>
    %136 = vector.shape_cast %135 : vector<1x8xf32> to vector<1x8x1xf32>
    %137 = vector.broadcast %136 : vector<1x8x1xf32> to vector<1x8x8xf32>
    %138 = arith.subf %134, %137 : vector<1x8x8xf32>
    %139 = math.exp %138 : vector<1x8x8xf32>
    %cst_37 = arith.constant dense<0.000000e+00> : vector<1x8xf32>
    %140 = vector.multi_reduction <add>, %139, %cst_37 [2] : vector<1x8x8xf32> to vector<1x8xf32>
    %141 = vector.shape_cast %140 : vector<1x8xf32> to vector<1x8x1xf32>
    %142 = arith.truncf %139 : vector<1x8x8xf32> to vector<1x8x8xbf16>
    %cst_38 = arith.constant dense<0.000000e+00> : vector<1x8x4xf32>
    %143 = tpu.matmul %142, %133, %cst_38 {dimension_numbers = #tpu.dot_dimension_numbers<[2], [1], [1], [2], [0, 0, 0, 1, 1, 2], [0], [0]>} : vector<1x8x8xbf16>, vector<1x8x4xbf16>, vector<1x8x4xf32> -> vector<1x8x4xf32>
    %144 = tpu.reciprocal %141 {approx = true} : vector<1x8x1xf32> -> vector<1x8x1xf32>
    %145 = vector.broadcast %144 : vector<1x8x1xf32> to vector<1x8x4xf32>
    %146 = arith.mulf %143, %145 : vector<1x8x4xf32>
    %147 = vector.extract_strided_slice %32 {offsets = [0, 24], sizes = [8, 4], strides = [1, 1]} : vector<8x96xbf16> to vector<8x4xbf16>
    %148 = vector.shape_cast %147 : vector<8x4xbf16> to vector<1x8x4xbf16>
    %149 = vector.extract_strided_slice %32 {offsets = [0, 56], sizes = [8, 4], strides = [1, 1]} : vector<8x96xbf16> to vector<8x4xbf16>
    %150 = vector.shape_cast %149 : vector<8x4xbf16> to vector<1x8x4xbf16>
    %151 = vector.extract_strided_slice %32 {offsets = [0, 88], sizes = [8, 4], strides = [1, 1]} : vector<8x96xbf16> to vector<8x4xbf16>
    %152 = vector.shape_cast %151 : vector<8x4xbf16> to vector<1x8x4xbf16>
    %cst_39 = arith.constant dense<0.000000e+00> : vector<1x8x8xf32>
    %153 = tpu.matmul %148, %150, %cst_39 {dimension_numbers = #tpu.dot_dimension_numbers<[2], [2], [1], [1], [0, 0, 0, 1, 1, 1], [0], [0]>} : vector<1x8x4xbf16>, vector<1x8x4xbf16>, vector<1x8x8xf32> -> vector<1x8x8xf32>
    %cst_40 = arith.constant dense<0xFF800000> : vector<1x8xf32>
    %154 = vector.multi_reduction <maximumf>, %153, %cst_40 [2] : vector<1x8x8xf32> to vector<1x8xf32>
    %155 = vector.shape_cast %154 : vector<1x8xf32> to vector<1x8x1xf32>
    %156 = vector.broadcast %155 : vector<1x8x1xf32> to vector<1x8x8xf32>
    %157 = arith.subf %153, %156 : vector<1x8x8xf32>
    %158 = math.exp %157 : vector<1x8x8xf32>
    %cst_41 = arith.constant dense<0.000000e+00> : vector<1x8xf32>
    %159 = vector.multi_reduction <add>, %158, %cst_41 [2] : vector<1x8x8xf32> to vector<1x8xf32>
    %160 = vector.shape_cast %159 : vector<1x8xf32> to vector<1x8x1xf32>
    %161 = arith.truncf %158 : vector<1x8x8xf32> to vector<1x8x8xbf16>
    %cst_42 = arith.constant dense<0.000000e+00> : vector<1x8x4xf32>
    %162 = tpu.matmul %161, %152, %cst_42 {dimension_numbers = #tpu.dot_dimension_numbers<[2], [1], [1], [2], [0, 0, 0, 1, 1, 2], [0], [0]>} : vector<1x8x8xbf16>, vector<1x8x4xbf16>, vector<1x8x4xf32> -> vector<1x8x4xf32>
    %163 = tpu.reciprocal %160 {approx = true} : vector<1x8x1xf32> -> vector<1x8x1xf32>
    %164 = vector.broadcast %163 : vector<1x8x1xf32> to vector<1x8x4xf32>
    %165 = arith.mulf %162, %164 : vector<1x8x4xf32>
    %166 = vector.extract_strided_slice %32 {offsets = [0, 28], sizes = [8, 4], strides = [1, 1]} : vector<8x96xbf16> to vector<8x4xbf16>
    %167 = vector.shape_cast %166 : vector<8x4xbf16> to vector<1x8x4xbf16>
    %168 = vector.extract_strided_slice %32 {offsets = [0, 60], sizes = [8, 4], strides = [1, 1]} : vector<8x96xbf16> to vector<8x4xbf16>
    %169 = vector.shape_cast %168 : vector<8x4xbf16> to vector<1x8x4xbf16>
    %170 = vector.extract_strided_slice %32 {offsets = [0, 92], sizes = [8, 4], strides = [1, 1]} : vector<8x96xbf16> to vector<8x4xbf16>
    %171 = vector.shape_cast %170 : vector<8x4xbf16> to vector<1x8x4xbf16>
    %cst_43 = arith.constant dense<0.000000e+00> : vector<1x8x8xf32>
    %172 = tpu.matmul %167, %169, %cst_43 {dimension_numbers = #tpu.dot_dimension_numbers<[2], [2], [1], [1], [0, 0, 0, 1, 1, 1], [0], [0]>} : vector<1x8x4xbf16>, vector<1x8x4xbf16>, vector<1x8x8xf32> -> vector<1x8x8xf32>
    %cst_44 = arith.constant dense<0xFF800000> : vector<1x8xf32>
    %173 = vector.multi_reduction <maximumf>, %172, %cst_44 [2] : vector<1x8x8xf32> to vector<1x8xf32>
    %174 = vector.shape_cast %173 : vector<1x8xf32> to vector<1x8x1xf32>
    %175 = vector.broadcast %174 : vector<1x8x1xf32> to vector<1x8x8xf32>
    %176 = arith.subf %172, %175 : vector<1x8x8xf32>
    %177 = math.exp %176 : vector<1x8x8xf32>
    %cst_45 = arith.constant dense<0.000000e+00> : vector<1x8xf32>
    %178 = vector.multi_reduction <add>, %177, %cst_45 [2] : vector<1x8x8xf32> to vector<1x8xf32>
    %179 = vector.shape_cast %178 : vector<1x8xf32> to vector<1x8x1xf32>
    %180 = arith.truncf %177 : vector<1x8x8xf32> to vector<1x8x8xbf16>
    %cst_46 = arith.constant dense<0.000000e+00> : vector<1x8x4xf32>
    %181 = tpu.matmul %180, %171, %cst_46 {dimension_numbers = #tpu.dot_dimension_numbers<[2], [1], [1], [2], [0, 0, 0, 1, 1, 2], [0], [0]>} : vector<1x8x8xbf16>, vector<1x8x4xbf16>, vector<1x8x4xf32> -> vector<1x8x4xf32>
    %182 = tpu.reciprocal %179 {approx = true} : vector<1x8x1xf32> -> vector<1x8x1xf32>
    %183 = vector.broadcast %182 : vector<1x8x1xf32> to vector<1x8x4xf32>
    %184 = arith.mulf %181, %183 : vector<1x8x4xf32>
    %185 = tpu.concatenate %51, %70, %89, %108, %127, %146, %165, %184 in 2 : vector<1x8x4xf32>, vector<1x8x4xf32>, vector<1x8x4xf32>, vector<1x8x4xf32>, vector<1x8x4xf32>, vector<1x8x4xf32>, vector<1x8x4xf32>, vector<1x8x4xf32> -> vector<1x8x32xf32>
    %186 = vector.shape_cast %185 : vector<1x8x32xf32> to vector<8x32xf32>
    %187 = arith.truncf %186 : vector<8x32xf32> to vector<8x32xbf16>
    %c0_47 = arith.constant 0 : index
    %c0_48 = arith.constant 0 : index
    %188 = vector.load %arg6[%c0_47, %c0_48] : memref<32x32xbf16, #tpu.memory_space<vmem>>, vector<32x32xbf16>
    %cst_49 = arith.constant dense<0.000000e+00> : vector<8x32xf32>
    %189 = tpu.matmul %187, %188, %cst_49 {dimension_numbers = #tpu.dot_dimension_numbers<[1], [0], [0], [1], [0, 0, 1, 1], [], []>} : vector<8x32xbf16>, vector<32x32xbf16>, vector<8x32xf32> -> vector<8x32xf32>
    %190 = arith.addf %25, %189 : vector<8x32xf32>
    %c0_50 = arith.constant 0 : index
    %c0_51 = arith.constant 0 : index
    %191 = vector.load %arg7[%c0_50, %c0_51] : memref<1x32xf32, #tpu.memory_space<vmem>>, vector<1x32xf32>
    %192 = vector.broadcast %191 : vector<1x32xf32> to vector<8x32xf32>
    %193 = arith.addf %190, %192 : vector<8x32xf32>
    %194 = vector.shape_cast %193 : vector<8x32xf32> to vector<1x8x32xf32>
    %c0_52 = arith.constant 0 : index
    %c0_53 = arith.constant 0 : index
    %c0_54 = arith.constant 0 : index
    %195 = vector.load %arg8[%c0_52, %c0_53, %c0_54] : memref<1x8x32xf32, #tpu.memory_space<vmem>>, vector<1x8x32xf32>
    tpu.vector_store %arg8[%c0_52, %c0_53, %c0_54], %194 {strides = array<i32>} : memref<1x8x32xf32, #tpu.memory_space<vmem>>, vector<1x8x32xf32>,
    return
  }
  func.func @transform_0(%arg0: i32) -> (i32, i32, i32) {
    %c0_i32 = arith.constant 0 : i32
    %c0_i32_0 = arith.constant 0 : i32
    %c0_i32_1 = arith.constant 0 : i32
    return %arg0, %c0_i32, %c0_i32_0 : i32, i32, i32
  }
  func.func @transform_1(%arg0: i32) -> (i32, i32) {
    %c0_i32 = arith.constant 0 : i32
    %c0_i32_0 = arith.constant 0 : i32
    %c0_i32_1 = arith.constant 0 : i32
    return %c0_i32, %c0_i32_0 : i32, i32
  }
  func.func @transform_2(%arg0: i32) -> (i32, i32) {
    %c0_i32 = arith.constant 0 : i32
    %c0_i32_0 = arith.constant 0 : i32
    %c0_i32_1 = arith.constant 0 : i32
    return %c0_i32, %c0_i32_0 : i32, i32
  }
  func.func @transform_3(%arg0: i32) -> (i32, i32) {
    %c0_i32 = arith.constant 0 : i32
    %c0_i32_0 = arith.constant 0 : i32
    %c0_i32_1 = arith.constant 0 : i32
    return %c0_i32, %c0_i32_0 : i32, i32
  }
  func.func @transform_4(%arg0: i32) -> (i32, i32) {
    %c0_i32 = arith.constant 0 : i32
    %c0_i32_0 = arith.constant 0 : i32
    %c0_i32_1 = arith.constant 0 : i32
    return %c0_i32, %c0_i32_0 : i32, i32
  }
  func.func @transform_5(%arg0: i32) -> (i32, i32) {
    %c0_i32 = arith.constant 0 : i32
    %c0_i32_0 = arith.constant 0 : i32
    %c0_i32_1 = arith.constant 0 : i32
    return %c0_i32, %c0_i32_0 : i32, i32
  }
  func.func @transform_6(%arg0: i32) -> (i32, i32) {
    %c0_i32 = arith.constant 0 : i32
    %c0_i32_0 = arith.constant 0 : i32
    %c0_i32_1 = arith.constant 0 : i32
    return %c0_i32, %c0_i32_0 : i32, i32
  }
  func.func @transform_7(%arg0: i32) -> (i32, i32, i32) {
    %c0_i32 = arith.constant 0 : i32
    %c0_i32_0 = arith.constant 0 : i32
    %c0_i32_1 = arith.constant 0 : i32
    return %arg0, %c0_i32, %c0_i32_0 : i32, i32, i32
  }
}

module attributes {stable_mosaic.version = 11 : i64} {
  func.func @_attention_block_kernel(%arg0: i32, %arg1: memref<1x8x32xf32, #tpu.memory_space<vmem>>, %arg2: memref<1x32xf32, #tpu.memory_space<vmem>>, %arg3: memref<1x32xf32, #tpu.memory_space<vmem>>, %arg4: memref<32x96xbf16, #tpu.memory_space<vmem>>, %arg5: memref<1x96xf32, #tpu.memory_space<vmem>>, %arg6: memref<32x32xbf16, #tpu.memory_space<vmem>>, %arg7: memref<1x32xf32, #tpu.memory_space<vmem>>, %arg8: memref<1x8x32xf32, #tpu.memory_space<vmem>>) attributes {dimension_semantics = [#tpu.dimension_semantics<parallel>], iteration_bounds = array<i64: 2>, scalar_prefetch = 0 : i64, scratch_operands = 0 : i64, tpu.core_type = #tpu.core_type<tc>, window_params = [{transform_indices = @transform_0, window_bounds = array<i64: 1, 8, 32>}, {pipeline_mode = #tpu.pipeline_mode<synchronous>, transform_indices = @transform_1, window_bounds = array<i64: 1, 32>}, {pipeline_mode = #tpu.pipeline_mode<synchronous>, transform_indices = @transform_2, window_bounds = array<i64: 1, 32>}, {pipeline_mode = #tpu.pipeline_mode<synchronous>, transform_indices = @transform_3, window_bounds = array<i64: 32, 96>}, {pipeline_mode = #tpu.pipeline_mode<synchronous>, transform_indices = @transform_4, window_bounds = array<i64: 1, 96>}, {pipeline_mode = #tpu.pipeline_mode<synchronous>, transform_indices = @transform_5, window_bounds = array<i64: 32, 32>}, {pipeline_mode = #tpu.pipeline_mode<synchronous>, transform_indices = @transform_6, window_bounds = array<i64: 1, 32>}, {transform_indices = @transform_7, window_bounds = array<i64: 1, 8, 32>}]} {
    %c0 = arith.constant 0 : index
    %c0_0 = arith.constant 0 : index
    %c0_1 = arith.constant 0 : index
    %0 = vector.load %arg1[%c0, %c0_0, %c0_1] : memref<1x8x32xf32, #tpu.memory_space<vmem>>, vector<1x8x32xf32>
    %1 = vector.shape_cast %0 : vector<1x8x32xf32> to vector<8x32xf32>
    %cst = arith.constant dense<0.000000e+00> : vector<8xf32>
    %2 = vector.multi_reduction <add>, %1, %cst [1] : vector<8x32xf32> to vector<8xf32>
    %3 = vector.shape_cast %2 : vector<8xf32> to vector<8x1xf32>
    %cst_2 = arith.constant 3.200000e+01 : f32
    %4 = vector.broadcast %cst_2 : f32 to vector<8x1xf32>
    %5 = arith.divf %3, %4 : vector<8x1xf32>
    %6 = vector.broadcast %5 : vector<8x1xf32> to vector<8x32xf32>
    %7 = arith.subf %1, %6 : vector<8x32xf32>
    %8 = arith.mulf %7, %7 : vector<8x32xf32>
    %cst_3 = arith.constant dense<0.000000e+00> : vector<8xf32>
    %9 = vector.multi_reduction <add>, %8, %cst_3 [1] : vector<8x32xf32> to vector<8xf32>
    %10 = vector.shape_cast %9 : vector<8xf32> to vector<8x1xf32>
    %cst_4 = arith.constant 3.200000e+01 : f32
    %11 = vector.broadcast %cst_4 : f32 to vector<8x1xf32>
    %12 = arith.divf %10, %11 : vector<8x1xf32>
    %13 = vector.broadcast %5 : vector<8x1xf32> to vector<8x32xf32>
    %14 = arith.subf %1, %13 : vector<8x32xf32>
    %cst_5 = arith.constant 9.99999974E-6 : f32
    %15 = vector.broadcast %cst_5 : f32 to vector<8x1xf32>
    %16 = arith.addf %12, %15 : vector<8x1xf32>
    %17 = math.rsqrt %16 : vector<8x1xf32>
    %18 = vector.broadcast %17 : vector<8x1xf32> to vector<8x32xf32>
    %19 = arith.mulf %14, %18 : vector<8x32xf32>
    %c0_6 = arith.constant 0 : index
    %c0_7 = arith.constant 0 : index
    %20 = vector.load %arg2[%c0_6, %c0_7] : memref<1x32xf32, #tpu.memory_space<vmem>>, vector<1x32xf32>
    %21 = vector.broadcast %20 : vector<1x32xf32> to vector<8x32xf32>
    %22 = arith.mulf %19, %21 : vector<8x32xf32>
    %c0_8 = arith.constant 0 : index
    %c0_9 = arith.constant 0 : index
    %23 = vector.load %arg3[%c0_8, %c0_9] : memref<1x32xf32, #tpu.memory_space<vmem>>, vector<1x32xf32>
    %24 = vector.broadcast %23 : vector<1x32xf32> to vector<8x32xf32>
    %25 = arith.addf %22, %24 : vector<8x32xf32>
    %26 = arith.truncf %25 : vector<8x32xf32> to vector<8x32xbf16>
    %c0_10 = arith.constant 0 : index
    %c0_11 = arith.constant 0 : index
    %27 = vector.load %arg4[%c0_10, %c0_11] : memref<32x96xbf16, #tpu.memory_space<vmem>>, vector<32x96xbf16>
    %cst_12 = arith.constant dense<0.000000e+00> : vector<8x96xf32>
    %28 = tpu.matmul %26, %27, %cst_12 {dimension_numbers = #tpu.dot_dimension_numbers<[1], [0], [0], [1], [0, 0, 1, 1], [], []>} : vector<8x32xbf16>, vector<32x96xbf16>, vector<8x96xf32> -> vector<8x96xf32>
    %c0_13 = arith.constant 0 : index
    %c0_14 = arith.constant 0 : index
    %29 = vector.load %arg5[%c0_13, %c0_14] : memref<1x96xf32, #tpu.memory_space<vmem>>, vector<1x96xf32>
    %30 = vector.broadcast %29 : vector<1x96xf32> to vector<8x96xf32>
    %31 = arith.addf %28, %30 : vector<8x96xf32>
    %32 = arith.truncf %31 : vector<8x96xf32> to vector<8x96xbf16>
    %33 = vector.extract_strided_slice %32 {offsets = [0, 0], sizes = [8, 4], strides = [1, 1]} : vector<8x96xbf16> to vector<8x4xbf16>
    %34 = vector.shape_cast %33 : vector<8x4xbf16> to vector<1x8x4xbf16>
    %35 = vector.extract_strided_slice %32 {offsets = [0, 32], sizes = [8, 4], strides = [1, 1]} : vector<8x96xbf16> to vector<8x4xbf16>
    %36 = vector.shape_cast %35 : vector<8x4xbf16> to vector<1x8x4xbf16>
    %37 = vector.extract_strided_slice %32 {offsets = [0, 64], sizes = [8, 4], strides = [1, 1]} : vector<8x96xbf16> to vector<8x4xbf16>
    %38 = vector.shape_cast %37 : vector<8x4xbf16> to vector<1x8x4xbf16>
    %cst_15 = arith.constant dense<0.000000e+00> : vector<1x8x8xf32>
    %39 = tpu.matmul %34, %36, %cst_15 {dimension_numbers = #tpu.dot_dimension_numbers<[2], [2], [1], [1], [0, 0, 0, 1, 1, 1], [0], [0]>} : vector<1x8x4xbf16>, vector<1x8x4xbf16>, vector<1x8x8xf32> -> vector<1x8x8xf32>
    %cst_16 = arith.constant dense<0xFF800000> : vector<1x8xf32>
    %40 = vector.multi_reduction <maximumf>, %39, %cst_16 [2] : vector<1x8x8xf32> to vector<1x8xf32>
    %41 = vector.shape_cast %40 : vector<1x8xf32> to vector<1x8x1xf32>
    %42 = vector.broadcast %41 : vector<1x8x1xf32> to vector<1x8x8xf32>
    %43 = arith.subf %39, %42 : vector<1x8x8xf32>
    %44 = math.exp %43 : vector<1x8x8xf32>
    %cst_17 = arith.constant dense<0.000000e+00> : vector<1x8xf32>
    %45 = vector.multi_reduction <add>, %44, %cst_17 [2] : vector<1x8x8xf32> to vector<1x8xf32>
    %46 = vector.shape_cast %45 : vector<1x8xf32> to vector<1x8x1xf32>
    %47 = arith.truncf %44 : vector<1x8x8xf32> to vector<1x8x8xbf16>
    %cst_18 = arith.constant dense<0.000000e+00> : vector<1x8x4xf32>
    %48 = tpu.matmul %47, %38, %cst_18 {dimension_numbers = #tpu.dot_dimension_numbers<[2], [1], [1], [2], [0, 0, 0, 1, 1, 2], [0], [0]>} : vector<1x8x8xbf16>, vector<1x8x4xbf16>, vector<1x8x4xf32> -> vector<1x8x4xf32>
    %49 = tpu.reciprocal %46 {approx = true} : vector<1x8x1xf32> -> vector<1x8x1xf32>
    %50 = vector.broadcast %49 : vector<1x8x1xf32> to vector<1x8x4xf32>
    %51 = arith.mulf %48, %50 : vector<1x8x4xf32>
    %52 = vector.extract_strided_slice %32 {offsets = [0, 4], sizes = [8, 4], strides = [1, 1]} : vector<8x96xbf16> to vector<8x4xbf16>
    %53 = vector.shape_cast %52 : vector<8x4xbf16> to vector<1x8x4xbf16>
    %54 = vector.extract_strided_slice %32 {offsets = [0, 36], sizes = [8, 4], strides = [1, 1]} : vector<8x96xbf16> to vector<8x4xbf16>
    %55 = vector.shape_cast %54 : vector<8x4xbf16> to vector<1x8x4xbf16>
    %56 = vector.extract_strided_slice %32 {offsets = [0, 68], sizes = [8, 4], strides = [1, 1]} : vector<8x96xbf16> to vector<8x4xbf16>
    %57 = vector.shape_cast %56 : vector<8x4xbf16> to vector<1x8x4xbf16>
    %cst_19 = arith.constant dense<0.000000e+00> : vector<1x8x8xf32>
    %58 = tpu.matmul %53, %55, %cst_19 {dimension_numbers = #tpu.dot_dimension_numbers<[2], [2], [1], [1], [0, 0, 0, 1, 1, 1], [0], [0]>} : vector<1x8x4xbf16>, vector<1x8x4xbf16>, vector<1x8x8xf32> -> vector<1x8x8xf32>
    %cst_20 = arith.constant dense<0xFF800000> : vector<1x8xf32>
    %59 = vector.multi_reduction <maximumf>, %58, %cst_20 [2] : vector<1x8x8xf32> to vector<1x8xf32>
    %60 = vector.shape_cast %59 : vector<1x8xf32> to vector<1x8x1xf32>
    %61 = vector.broadcast %60 : vector<1x8x1xf32> to vector<1x8x8xf32>
    %62 = arith.subf %58, %61 : vector<1x8x8xf32>
    %63 = math.exp %62 : vector<1x8x8xf32>
    %cst_21 = arith.constant dense<0.000000e+00> : vector<1x8xf32>
    %64 = vector.multi_reduction <add>, %63, %cst_21 [2] : vector<1x8x8xf32> to vector<1x8xf32>
    %65 = vector.shape_cast %64 : vector<1x8xf32> to vector<1x8x1xf32>
    %66 = arith.truncf %63 : vector<1x8x8xf32> to vector<1x8x8xbf16>
    %cst_22 = arith.constant dense<0.000000e+00> : vector<1x8x4xf32>
    %67 = tpu.matmul %66, %57, %cst_22 {dimension_numbers = #tpu.dot_dimension_numbers<[2], [1], [1], [2], [0, 0, 0, 1, 1, 2], [0], [0]>} : vector<1x8x8xbf16>, vector<1x8x4xbf16>, vector<1x8x4xf32> -> vector<1x8x4xf32>
    %68 = tpu.reciprocal %65 {approx = true} : vector<1x8x1xf32> -> vector<1x8x1xf32>
    %69 = vector.broadcast %68 : vector<1x8x1xf32> to vector<1x8x4xf32>
    %70 = arith.mulf %67, %69 : vector<1x8x4xf32>
    %71 = vector.extract_strided_slice %32 {offsets = [0, 8], sizes = [8, 4], strides = [1, 1]} : vector<8x96xbf16> to vector<8x4xbf16>
    %72 = vector.shape_cast %71 : vector<8x4xbf16> to vector<1x8x4xbf16>
    %73 = vector.extract_strided_slice %32 {offsets = [0, 40], sizes = [8, 4], strides = [1, 1]} : vector<8x96xbf16> to vector<8x4xbf16>
    %74 = vector.shape_cast %73 : vector<8x4xbf16> to vector<1x8x4xbf16>
    %75 = vector.extract_strided_slice %32 {offsets = [0, 72], sizes = [8, 4], strides = [1, 1]} : vector<8x96xbf16> to vector<8x4xbf16>
    %76 = vector.shape_cast %75 : vector<8x4xbf16> to vector<1x8x4xbf16>
    %cst_23 = arith.constant dense<0.000000e+00> : vector<1x8x8xf32>
    %77 = tpu.matmul %72, %74, %cst_23 {dimension_numbers = #tpu.dot_dimension_numbers<[2], [2], [1], [1], [0, 0, 0, 1, 1, 1], [0], [0]>} : vector<1x8x4xbf16>, vector<1x8x4xbf16>, vector<1x8x8xf32> -> vector<1x8x8xf32>
    %cst_24 = arith.constant dense<0xFF800000> : vector<1x8xf32>
    %78 = vector.multi_reduction <maximumf>, %77, %cst_24 [2] : vector<1x8x8xf32> to vector<1x8xf32>
    %79 = vector.shape_cast %78 : vector<1x8xf32> to vector<1x8x1xf32>
    %80 = vector.broadcast %79 : vector<1x8x1xf32> to vector<1x8x8xf32>
    %81 = arith.subf %77, %80 : vector<1x8x8xf32>
    %82 = math.exp %81 : vector<1x8x8xf32>
    %cst_25 = arith.constant dense<0.000000e+00> : vector<1x8xf32>
    %83 = vector.multi_reduction <add>, %82, %cst_25 [2] : vector<1x8x8xf32> to vector<1x8xf32>
    %84 = vector.shape_cast %83 : vector<1x8xf32> to vector<1x8x1xf32>
    %85 = arith.truncf %82 : vector<1x8x8xf32> to vector<1x8x8xbf16>
    %cst_26 = arith.constant dense<0.000000e+00> : vector<1x8x4xf32>
    %86 = tpu.matmul %85, %76, %cst_26 {dimension_numbers = #tpu.dot_dimension_numbers<[2], [1], [1], [2], [0, 0, 0, 1, 1, 2], [0], [0]>} : vector<1x8x8xbf16>, vector<1x8x4xbf16>, vector<1x8x4xf32> -> vector<1x8x4xf32>
    %87 = tpu.reciprocal %84 {approx = true} : vector<1x8x1xf32> -> vector<1x8x1xf32>
    %88 = vector.broadcast %87 : vector<1x8x1xf32> to vector<1x8x4xf32>
    %89 = arith.mulf %86, %88 : vector<1x8x4xf32>
    %90 = vector.extract_strided_slice %32 {offsets = [0, 12], sizes = [8, 4], strides = [1, 1]} : vector<8x96xbf16> to vector<8x4xbf16>
    %91 = vector.shape_cast %90 : vector<8x4xbf16> to vector<1x8x4xbf16>
    %92 = vector.extract_strided_slice %32 {offsets = [0, 44], sizes = [8, 4], strides = [1, 1]} : vector<8x96xbf16> to vector<8x4xbf16>
    %93 = vector.shape_cast %92 : vector<8x4xbf16> to vector<1x8x4xbf16>
    %94 = vector.extract_strided_slice %32 {offsets = [0, 76], sizes = [8, 4], strides = [1, 1]} : vector<8x96xbf16> to vector<8x4xbf16>
    %95 = vector.shape_cast %94 : vector<8x4xbf16> to vector<1x8x4xbf16>
    %cst_27 = arith.constant dense<0.000000e+00> : vector<1x8x8xf32>
    %96 = tpu.matmul %91, %93, %cst_27 {dimension_numbers = #tpu.dot_dimension_numbers<[2], [2], [1], [1], [0, 0, 0, 1, 1, 1], [0], [0]>} : vector<1x8x4xbf16>, vector<1x8x4xbf16>, vector<1x8x8xf32> -> vector<1x8x8xf32>
    %cst_28 = arith.constant dense<0xFF800000> : vector<1x8xf32>
    %97 = vector.multi_reduction <maximumf>, %96, %cst_28 [2] : vector<1x8x8xf32> to vector<1x8xf32>
    %98 = vector.shape_cast %97 : vector<1x8xf32> to vector<1x8x1xf32>
    %99 = vector.broadcast %98 : vector<1x8x1xf32> to vector<1x8x8xf32>
    %100 = arith.subf %96, %99 : vector<1x8x8xf32>
    %101 = math.exp %100 : vector<1x8x8xf32>
    %cst_29 = arith.constant dense<0.000000e+00> : vector<1x8xf32>
    %102 = vector.multi_reduction <add>, %101, %cst_29 [2] : vector<1x8x8xf32> to vector<1x8xf32>
    %103 = vector.shape_cast %102 : vector<1x8xf32> to vector<1x8x1xf32>
    %104 = arith.truncf %101 : vector<1x8x8xf32> to vector<1x8x8xbf16>
    %cst_30 = arith.constant dense<0.000000e+00> : vector<1x8x4xf32>
    %105 = tpu.matmul %104, %95, %cst_30 {dimension_numbers = #tpu.dot_dimension_numbers<[2], [1], [1], [2], [0, 0, 0, 1, 1, 2], [0], [0]>} : vector<1x8x8xbf16>, vector<1x8x4xbf16>, vector<1x8x4xf32> -> vector<1x8x4xf32>
    %106 = tpu.reciprocal %103 {approx = true} : vector<1x8x1xf32> -> vector<1x8x1xf32>
    %107 = vector.broadcast %106 : vector<1x8x1xf32> to vector<1x8x4xf32>
    %108 = arith.mulf %105, %107 : vector<1x8x4xf32>
    %109 = vector.extract_strided_slice %32 {offsets = [0, 16], sizes = [8, 4], strides = [1, 1]} : vector<8x96xbf16> to vector<8x4xbf16>
    %110 = vector.shape_cast %109 : vector<8x4xbf16> to vector<1x8x4xbf16>
    %111 = vector.extract_strided_slice %32 {offsets = [0, 48], sizes = [8, 4], strides = [1, 1]} : vector<8x96xbf16> to vector<8x4xbf16>
    %112 = vector.shape_cast %111 : vector<8x4xbf16> to vector<1x8x4xbf16>
    %113 = vector.extract_strided_slice %32 {offsets = [0, 80], sizes = [8, 4], strides = [1, 1]} : vector<8x96xbf16> to vector<8x4xbf16>
    %114 = vector.shape_cast %113 : vector<8x4xbf16> to vector<1x8x4xbf16>
    %cst_31 = arith.constant dense<0.000000e+00> : vector<1x8x8xf32>
    %115 = tpu.matmul %110, %112, %cst_31 {dimension_numbers = #tpu.dot_dimension_numbers<[2], [2], [1], [1], [0, 0, 0, 1, 1, 1], [0], [0]>} : vector<1x8x4xbf16>, vector<1x8x4xbf16>, vector<1x8x8xf32> -> vector<1x8x8xf32>
    %cst_32 = arith.constant dense<0xFF800000> : vector<1x8xf32>
    %116 = vector.multi_reduction <maximumf>, %115, %cst_32 [2] : vector<1x8x8xf32> to vector<1x8xf32>
    %117 = vector.shape_cast %116 : vector<1x8xf32> to vector<1x8x1xf32>
    %118 = vector.broadcast %117 : vector<1x8x1xf32> to vector<1x8x8xf32>
    %119 = arith.subf %115, %118 : vector<1x8x8xf32>
    %120 = math.exp %119 : vector<1x8x8xf32>
    %cst_33 = arith.constant dense<0.000000e+00> : vector<1x8xf32>
    %121 = vector.multi_reduction <add>, %120, %cst_33 [2] : vector<1x8x8xf32> to vector<1x8xf32>
    %122 = vector.shape_cast %121 : vector<1x8xf32> to vector<1x8x1xf32>
    %123 = arith.truncf %120 : vector<1x8x8xf32> to vector<1x8x8xbf16>
    %cst_34 = arith.constant dense<0.000000e+00> : vector<1x8x4xf32>
    %124 = tpu.matmul %123, %114, %cst_34 {dimension_numbers = #tpu.dot_dimension_numbers<[2], [1], [1], [2], [0, 0, 0, 1, 1, 2], [0], [0]>} : vector<1x8x8xbf16>, vector<1x8x4xbf16>, vector<1x8x4xf32> -> vector<1x8x4xf32>
    %125 = tpu.reciprocal %122 {approx = true} : vector<1x8x1xf32> -> vector<1x8x1xf32>
    %126 = vector.broadcast %125 : vector<1x8x1xf32> to vector<1x8x4xf32>
    %127 = arith.mulf %124, %126 : vector<1x8x4xf32>
    %128 = vector.extract_strided_slice %32 {offsets = [0, 20], sizes = [8, 4], strides = [1, 1]} : vector<8x96xbf16> to vector<8x4xbf16>
    %129 = vector.shape_cast %128 : vector<8x4xbf16> to vector<1x8x4xbf16>
    %130 = vector.extract_strided_slice %32 {offsets = [0, 52], sizes = [8, 4], strides = [1, 1]} : vector<8x96xbf16> to vector<8x4xbf16>
    %131 = vector.shape_cast %130 : vector<8x4xbf16> to vector<1x8x4xbf16>
    %132 = vector.extract_strided_slice %32 {offsets = [0, 84], sizes = [8, 4], strides = [1, 1]} : vector<8x96xbf16> to vector<8x4xbf16>
    %133 = vector.shape_cast %132 : vector<8x4xbf16> to vector<1x8x4xbf16>
    %cst_35 = arith.constant dense<0.000000e+00> : vector<1x8x8xf32>
    %134 = tpu.matmul %129, %131, %cst_35 {dimension_numbers = #tpu.dot_dimension_numbers<[2], [2], [1], [1], [0, 0, 0, 1, 1, 1], [0], [0]>} : vector<1x8x4xbf16>, vector<1x8x4xbf16>, vector<1x8x8xf32> -> vector<1x8x8xf32>
    %cst_36 = arith.constant dense<0xFF800000> : vector<1x8xf32>
    %135 = vector.multi_reduction <maximumf>, %134, %cst_36 [2] : vector<1x8x8xf32> to vector<1x8xf32>
    %136 = vector.shape_cast %135 : vector<1x8xf32> to vector<1x8x1xf32>
    %137 = vector.broadcast %136 : vector<1x8x1xf32> to vector<1x8x8xf32>
    %138 = arith.subf %134, %137 : vector<1x8x8xf32>
    %139 = math.exp %138 : vector<1x8x8xf32>
    %cst_37 = arith.constant dense<0.000000e+00> : vector<1x8xf32>
    %140 = vector.multi_reduction <add>, %139, %cst_37 [2] : vector<1x8x8xf32> to vector<1x8xf32>
    %141 = vector.shape_cast %140 : vector<1x8xf32> to vector<1x8x1xf32>
    %142 = arith.truncf %139 : vector<1x8x8xf32> to vector<1x8x8xbf16>
    %cst_38 = arith.constant dense<0.000000e+00> : vector<1x8x4xf32>
    %143 = tpu.matmul %142, %133, %cst_38 {dimension_numbers = #tpu.dot_dimension_numbers<[2], [1], [1], [2], [0, 0, 0, 1, 1, 2], [0], [0]>} : vector<1x8x8xbf16>, vector<1x8x4xbf16>, vector<1x8x4xf32> -> vector<1x8x4xf32>
    %144 = tpu.reciprocal %141 {approx = true} : vector<1x8x1xf32> -> vector<1x8x1xf32>
    %145 = vector.broadcast %144 : vector<1x8x1xf32> to vector<1x8x4xf32>
    %146 = arith.mulf %143, %145 : vector<1x8x4xf32>
    %147 = vector.extract_strided_slice %32 {offsets = [0, 24], sizes = [8, 4], strides = [1, 1]} : vector<8x96xbf16> to vector<8x4xbf16>
    %148 = vector.shape_cast %147 : vector<8x4xbf16> to vector<1x8x4xbf16>
    %149 = vector.extract_strided_slice %32 {offsets = [0, 56], sizes = [8, 4], strides = [1, 1]} : vector<8x96xbf16> to vector<8x4xbf16>
    %150 = vector.shape_cast %149 : vector<8x4xbf16> to vector<1x8x4xbf16>
    %151 = vector.extract_strided_slice %32 {offsets = [0, 88], sizes = [8, 4], strides = [1, 1]} : vector<8x96xbf16> to vector<8x4xbf16>
    %152 = vector.shape_cast %151 : vector<8x4xbf16> to vector<1x8x4xbf16>
    %cst_39 = arith.constant dense<0.000000e+00> : vector<1x8x8xf32>
    %153 = tpu.matmul %148, %150, %cst_39 {dimension_numbers = #tpu.dot_dimension_numbers<[2], [2], [1], [1], [0, 0, 0, 1, 1, 1], [0], [0]>} : vector<1x8x4xbf16>, vector<1x8x4xbf16>, vector<1x8x8xf32> -> vector<1x8x8xf32>
    %cst_40 = arith.constant dense<0xFF800000> : vector<1x8xf32>
    %154 = vector.multi_reduction <maximumf>, %153, %cst_40 [2] : vector<1x8x8xf32> to vector<1x8xf32>
    %155 = vector.shape_cast %154 : vector<1x8xf32> to vector<1x8x1xf32>
    %156 = vector.broadcast %155 : vector<1x8x1xf32> to vector<1x8x8xf32>
    %157 = arith.subf %153, %156 : vector<1x8x8xf32>
    %158 = math.exp %157 : vector<1x8x8xf32>
    %cst_41 = arith.constant dense<0.000000e+00> : vector<1x8xf32>
    %159 = vector.multi_reduction <add>, %158, %cst_41 [2] : vector<1x8x8xf32> to vector<1x8xf32>
    %160 = vector.shape_cast %159 : vector<1x8xf32> to vector<1x8x1xf32>
    %161 = arith.truncf %158 : vector<1x8x8xf32> to vector<1x8x8xbf16>
    %cst_42 = arith.constant dense<0.000000e+00> : vector<1x8x4xf32>
    %162 = tpu.matmul %161, %152, %cst_42 {dimension_numbers = #tpu.dot_dimension_numbers<[2], [1], [1], [2], [0, 0, 0, 1, 1, 2], [0], [0]>} : vector<1x8x8xbf16>, vector<1x8x4xbf16>, vector<1x8x4xf32> -> vector<1x8x4xf32>
    %163 = tpu.reciprocal %160 {approx = true} : vector<1x8x1xf32> -> vector<1x8x1xf32>
    %164 = vector.broadcast %163 : vector<1x8x1xf32> to vector<1x8x4xf32>
    %165 = arith.mulf %162, %164 : vector<1x8x4xf32>
    %166 = vector.extract_strided_slice %32 {offsets = [0, 28], sizes = [8, 4], strides = [1, 1]} : vector<8x96xbf16> to vector<8x4xbf16>
    %167 = vector.shape_cast %166 : vector<8x4xbf16> to vector<1x8x4xbf16>
    %168 = vector.extract_strided_slice %32 {offsets = [0, 60], sizes = [8, 4], strides = [1, 1]} : vector<8x96xbf16> to vector<8x4xbf16>
    %169 = vector.shape_cast %168 : vector<8x4xbf16> to vector<1x8x4xbf16>
    %170 = vector.extract_strided_slice %32 {offsets = [0, 92], sizes = [8, 4], strides = [1, 1]} : vector<8x96xbf16> to vector<8x4xbf16>
    %171 = vector.shape_cast %170 : vector<8x4xbf16> to vector<1x8x4xbf16>
    %cst_43 = arith.constant dense<0.000000e+00> : vector<1x8x8xf32>
    %172 = tpu.matmul %167, %169, %cst_43 {dimension_numbers = #tpu.dot_dimension_numbers<[2], [2], [1], [1], [0, 0, 0, 1, 1, 1], [0], [0]>} : vector<1x8x4xbf16>, vector<1x8x4xbf16>, vector<1x8x8xf32> -> vector<1x8x8xf32>
    %cst_44 = arith.constant dense<0xFF800000> : vector<1x8xf32>
    %173 = vector.multi_reduction <maximumf>, %172, %cst_44 [2] : vector<1x8x8xf32> to vector<1x8xf32>
    %174 = vector.shape_cast %173 : vector<1x8xf32> to vector<1x8x1xf32>
    %175 = vector.broadcast %174 : vector<1x8x1xf32> to vector<1x8x8xf32>
    %176 = arith.subf %172, %175 : vector<1x8x8xf32>
    %177 = math.exp %176 : vector<1x8x8xf32>
    %cst_45 = arith.constant dense<0.000000e+00> : vector<1x8xf32>
    %178 = vector.multi_reduction <add>, %177, %cst_45 [2] : vector<1x8x8xf32> to vector<1x8xf32>
    %179 = vector.shape_cast %178 : vector<1x8xf32> to vector<1x8x1xf32>
    %180 = arith.truncf %177 : vector<1x8x8xf32> to vector<1x8x8xbf16>
    %cst_46 = arith.constant dense<0.000000e+00> : vector<1x8x4xf32>
    %181 = tpu.matmul %180, %171, %cst_46 {dimension_numbers = #tpu.dot_dimension_numbers<[2], [1], [1], [2], [0, 0, 0, 1, 1, 2], [0], [0]>} : vector<1x8x8xbf16>, vector<1x8x4xbf16>, vector<1x8x4xf32> -> vector<1x8x4xf32>
    %182 = tpu.reciprocal %179 {approx = true} : vector<1x8x1xf32> -> vector<1x8x1xf32>
    %183 = vector.broadcast %182 : vector<1x8x1xf32> to vector<1x8x4xf32>
    %184 = arith.mulf %181, %183 : vector<1x8x4xf32>
    %185 = tpu.concatenate %51, %70, %89, %108, %127, %146, %165, %184 in 2 : vector<1x8x4xf32>, vector<1x8x4xf32>, vector<1x8x4xf32>, vector<1x8x4xf32>, vector<1x8x4xf32>, vector<1x8x4xf32>, vector<1x8x4xf32>, vector<1x8x4xf32> -> vector<1x8x32xf32>
    %186 = vector.shape_cast %185 : vector<1x8x32xf32> to vector<8x32xf32>
    %187 = arith.truncf %186 : vector<8x32xf32> to vector<8x32xbf16>
    %c0_47 = arith.constant 0 : index
    %c0_48 = arith.constant 0 : index
    %188 = vector.load %arg6[%c0_47, %c0_48] : memref<32x32xbf16, #tpu.memory_space<vmem>>, vector<32x32xbf16>
    %cst_49 = arith.constant dense<0.000000e+00> : vector<8x32xf32>
    %189 = tpu.matmul %187, %188, %cst_49 {dimension_numbers = #tpu.dot_dimension_numbers<[1], [0], [0], [1], [0, 0, 1, 1], [], []>} : vector<8x32xbf16>, vector<32x32xbf16>, vector<8x32xf32> -> vector<8x32xf32>
    %190 = arith.addf %25, %189 : vector<8x32xf32>
    %c0_50 = arith.constant 0 : index
    %c0_51 = arith.constant 0 : index
    %191 = vector.load %arg7[%c0_50, %c0_51] : memref<1x32xf32, #tpu.memory_space<vmem>>, vector<1x32xf32>
    %192 = vector.broadcast %191 : vector<1x32xf32> to vector<8x32xf32>
    %193 = arith.addf %190, %192 : vector<8x32xf32>
    %194 = vector.shape_cast %193 : vector<8x32xf32> to vector<1x8x32xf32>
    %c0_52 = arith.constant 0 : index
    %c0_53 = arith.constant 0 : index
    %c0_54 = arith.constant 0 : index
    %195 = vector.load %arg8[%c0_52, %c0_53, %c0_54] : memref<1x8x32xf32, #tpu.memory_space<vmem>>, vector<1x8x32xf32>
    tpu.vector_store %arg8[%c0_52, %c0_53, %c0_54], %194 {strides = array<i32>} : memref<1x8x32xf32, #tpu.memory_space<vmem>>, vector<1x8x32xf32>,
    return
  }
  func.func @transform_0(%arg0: i32) -> (i32, i32, i32) {
    %c0_i32 = arith.constant 0 : i32
    %c0_i32_0 = arith.constant 0 : i32
    %c0_i32_1 = arith.constant 0 : i32
    return %arg0, %c0_i32, %c0_i32_0 : i32, i32, i32
  }
  func.func @transform_1(%arg0: i32) -> (i32, i32) {
    %c0_i32 = arith.constant 0 : i32
    %c0_i32_0 = arith.constant 0 : i32
    %c0_i32_1 = arith.constant 0 : i32
    return %c0_i32, %c0_i32_0 : i32, i32
  }
  func.func @transform_2(%arg0: i32) -> (i32, i32) {
    %c0_i32 = arith.constant 0 : i32
    %c0_i32_0 = arith.constant 0 : i32
    %c0_i32_1 = arith.constant 0 : i32
    return %c0_i32, %c0_i32_0 : i32, i32
  }
  func.func @transform_3(%arg0: i32) -> (i32, i32) {
    %c0_i32 = arith.constant 0 : i32
    %c0_i32_0 = arith.constant 0 : i32
    %c0_i32_1 = arith.constant 0 : i32
    return %c0_i32, %c0_i32_0 : i32, i32
  }
  func.func @transform_4(%arg0: i32) -> (i32, i32) {
    %c0_i32 = arith.constant 0 : i32
    %c0_i32_0 = arith.constant 0 : i32
    %c0_i32_1 = arith.constant 0 : i32
    return %c0_i32, %c0_i32_0 : i32, i32
  }
  func.func @transform_5(%arg0: i32) -> (i32, i32) {
    %c0_i32 = arith.constant 0 : i32
    %c0_i32_0 = arith.constant 0 : i32
    %c0_i32_1 = arith.constant 0 : i32
    return %c0_i32, %c0_i32_0 : i32, i32
  }
  func.func @transform_6(%arg0: i32) -> (i32, i32) {
    %c0_i32 = arith.constant 0 : i32
    %c0_i32_0 = arith.constant 0 : i32
    %c0_i32_1 = arith.constant 0 : i32
    return %c0_i32, %c0_i32_0 : i32, i32
  }
  func.func @transform_7(%arg0: i32) -> (i32, i32, i32) {
    %c0_i32 = arith.constant 0 : i32
    %c0_i32_0 = arith.constant 0 : i32
    %c0_i32_1 = arith.constant 0 : i32
    return %arg0, %c0_i32, %c0_i32_0 : i32, i32, i32
  }
}

</mosaic_0001>

<llo_original>
// kernel: tpu_custom_call.1
$region0: #{tpu_custom_call.1}
  #allocation0 [shape = 'u32[]', space=smem, size = 0x4, offset = 0x4, fixed_abs, tag = 'smem constant byte address 0x4 - core index']
  #allocation1 [shape = 'u32[144,128]{1,0:T(1,128)}', space=vmem, size = 0x12000, scoped, tag = 'internal scratch']
  %s0 = inlined_call_operand.hbm [shape: f32[2,8,32], index: 0, kind: input, shape index: {}]
  %s1 = inlined_call_operand.vmem [shape: f32[1,32], index: 1, kind: input, shape index: {}]
  %s2 = inlined_call_operand.vmem [shape: f32[1,32], index: 2, kind: input, shape index: {}]
  %s3 = inlined_call_operand.hbm [shape: bf16[32,96], index: 3, kind: input, shape index: {}]
  %s4 = inlined_call_operand.hbm [shape: f32[1,96], index: 4, kind: input, shape index: {}]
  %s5 = inlined_call_operand.vmem [shape: bf16[32,32], index: 5, kind: input, shape index: {}]
  %s6 = inlined_call_operand.vmem [shape: f32[1,32], index: 6, kind: input, shape index: {}]
  %s7 = inlined_call_operand.hbm [shape: f32[2,8,32], index: 7, kind: output, shape index: {}]
  %s8 = sld [smem:[#allocation0]]
  $region73: #{tpu_custom_call.1} parent=0
    _
  %s10 = ssub.s32 1, %s8
  %s11 = scalar_select 0, %s10, %s8
  $region1: #{tpu_custom_call.1} parent=0
    #allocation2 [shape = 'u8[8192]{0}', space=vmem, size = 0x2000, scoped, tag = 'input window, operand 0']
    #allocation3 [shape = 's32[2]{0}', space=sflag, size = 0x8, scoped, tag = 'scoped memory for tpu_custom_call.1']
    #allocation4 [shape = 's32[2]{0}', space=sflag, size = 0x8, scoped, tag = 'scoped memory for tpu_custom_call.1']
    #allocation5 [shape = 'u8[8192]{0}', space=vmem, size = 0x2000, scoped, tag = 'input window, operand 3, single buffered']
    #allocation6 [shape = 's32[1]{0}', space=sflag, size = 0x4, scoped, tag = 'scoped memory for tpu_custom_call.1']
    #allocation7 [shape = 'u8[512]{0}', space=vmem, size = 0x400, scoped, tag = 'input window, operand 4, single buffered']
    #allocation8 [shape = 'u8[8192]{0}', space=vmem, size = 0x2000, scoped, tag = 'output window, operand 0']
    %12 = vsyncpa [#allocation3], 0
    %s13 = scalar_lea.sflag [#allocation3], 1
    %14 = vsyncpa %s13, 0
    %15 = vsyncpa [#allocation6], 0
    %16 = vsyncpa [#allocation4], 0
    %s17 = scalar_lea.sflag [#allocation4], 1
    %18 = vsyncpa %s17, 0
    loop: start=0, step=1, limit=4
    $region2: #{tpu_custom_call.1} parent=1 // loop_pre_header
      _
    $region3: #{tpu_custom_call.1} parent=1 // loop_header
      %s20 = sphi 0, %s24
      %p21 = scmp.ge.s32.totalorder %s20, 4
      %s30 = sphi 0, %s32
      %s33 = sphi 0, %s30
      %s34 = sphi 0, %s33
      %s50 = sphi 0, %s34
      %s54 = sphi 0, %s54
      %s56 = sphi 0, %s54
      %s57 = sphi 0, %s56
      %s71 = sphi 0, %s57
      %s75 = sphi 0, %s75
      %s77 = sphi 0, %s75
      %s78 = sphi 0, %s77
      %s92 = sphi 0, %s78
      %s96 = sphi 0, %s96
      %s98 = sphi 0, %s96
      %s99 = sphi 0, %s98
      %s113 = sphi 0, %s99
      %s117 = sphi 0, %s117
      %s119 = sphi 0, %s117
      %s120 = sphi 0, %s119
      %s134 = sphi 0, %s120
      %s138 = sphi 0, %s138
      %s140 = sphi 0, %s138
      %s141 = sphi 0, %s140
      %s155 = sphi 0, %s141
      %s159 = sphi 0, %s159
      %s161 = sphi 0, %s159
      %s162 = sphi 0, %s161
      %s176 = sphi 0, %s162
      %s182 = sphi 0, %s184
      %s185 = sphi 0, %s182
      %s186 = sphi 0, %s185
      %s202 = sphi 0, %s186
    $region4: #{tpu_custom_call.1} parent=1 // loop_header_branch
      %23 = sbr.rel (%p21) target = $region8
    $region5: #{tpu_custom_call.1} parent=1 // loop_body
      %s25 = ssub.s32 %s20, 1
      %s26 = ssub.s32 %s20, 2
      %s27 = sadd.s32 %s20, 1
      %s28 = ssub.s32 %s20, %s27
      %p29 = scmp.eq.s32.totalorder %s28, 0
      %s31 = sadd.s32 %s30, 1
      %s32 = scalar_select %p29, %s30, %s31
      %p35 = pneg %p29
      %p36 = scmp.eq.s32.totalorder %s20, 1
      %p37 = por %p35, %p36
      %p38 = scmp.ne.s32.totalorder %s30, %s33
      %p39 = scmp.eq.s32.totalorder %s20, 0
      %p40 = por %p38, %p39
      %p41 = scmp.ne.s32.totalorder %s30, %s33
      %p42 = scmp.eq.s32.totalorder %s25, 1
      %p43 = por %p41, %p42
      %p44 = scmp.ne.s32.totalorder %s33, %s34
      %p45 = scmp.eq.s32.totalorder %s25, 0
      %p46 = por %p44, %p45
      %p47 = scmp.ne.s32.totalorder %s33, %s34
      %p48 = scmp.eq.s32.totalorder %s26, 1
      %p49 = por %p47, %p48
      %p51 = scmp.ne.s32.totalorder %s34, %s50
      %p52 = scmp.eq.s32.totalorder %s26, 0
      %p53 = por %p51, %p52
      %s55 = sadd.s32 %s54, 1
      %p58 = scmp.eq.s32.totalorder %s20, 1
      %p59 = scmp.ne.s32.totalorder %s54, %s56
      %p60 = scmp.eq.s32.totalorder %s20, 0
      %p61 = por %p59, %p60
      %p62 = scmp.ne.s32.totalorder %s54, %s56
      %p63 = scmp.eq.s32.totalorder %s25, 1
      %p64 = por %p62, %p63
      %p65 = scmp.ne.s32.totalorder %s56, %s57
      %p66 = scmp.eq.s32.totalorder %s25, 0
      %p67 = por %p65, %p66
      %p68 = scmp.ne.s32.totalorder %s56, %s57
      %p69 = scmp.eq.s32.totalorder %s26, 1
      %p70 = por %p68, %p69
      %p72 = scmp.ne.s32.totalorder %s57, %s71
      %p73 = scmp.eq.s32.totalorder %s26, 0
      %p74 = por %p72, %p73
      %s76 = sadd.s32 %s75, 1
      %p79 = scmp.eq.s32.totalorder %s20, 1
      %p80 = scmp.ne.s32.totalorder %s75, %s77
      %p81 = scmp.eq.s32.totalorder %s20, 0
      %p82 = por %p80, %p81
      %p83 = scmp.ne.s32.totalorder %s75, %s77
      %p84 = scmp.eq.s32.totalorder %s25, 1
      %p85 = por %p83, %p84
      %p86 = scmp.ne.s32.totalorder %s77, %s78
      %p87 = scmp.eq.s32.totalorder %s25, 0
      %p88 = por %p86, %p87
      %p89 = scmp.ne.s32.totalorder %s77, %s78
      %p90 = scmp.eq.s32.totalorder %s26, 1
      %p91 = por %p89, %p90
      %p93 = scmp.ne.s32.totalorder %s78, %s92
      %p94 = scmp.eq.s32.totalorder %s26, 0
      %p95 = por %p93, %p94
      %s97 = sadd.s32 %s96, 1
      %p100 = scmp.eq.s32.totalorder %s20, 1
      %p101 = scmp.ne.s32.totalorder %s96, %s98
      %p102 = scmp.eq.s32.totalorder %s20, 0
      %p103 = por %p101, %p102
      %p104 = scmp.ne.s32.totalorder %s96, %s98
      %p105 = scmp.eq.s32.totalorder %s25, 1
      %p106 = por %p104, %p105
      %p107 = scmp.ne.s32.totalorder %s98, %s99
      %p108 = scmp.eq.s32.totalorder %s25, 0
      %p109 = por %p107, %p108
      %p110 = scmp.ne.s32.totalorder %s98, %s99
      %p111 = scmp.eq.s32.totalorder %s26, 1
      %p112 = por %p110, %p111
      %p114 = scmp.ne.s32.totalorder %s99, %s113
      %p115 = scmp.eq.s32.totalorder %s26, 0
      %p116 = por %p114, %p115
      %s118 = sadd.s32 %s117, 1
      %p121 = scmp.eq.s32.totalorder %s20, 1
      %p122 = scmp.ne.s32.totalorder %s117, %s119
      %p123 = scmp.eq.s32.totalorder %s20, 0
      %p124 = por %p122, %p123
      %p125 = scmp.ne.s32.totalorder %s117, %s119
      %p126 = scmp.eq.s32.totalorder %s25, 1
      %p127 = por %p125, %p126
      %p128 = scmp.ne.s32.totalorder %s119, %s120
      %p129 = scmp.eq.s32.totalorder %s25, 0
      %p130 = por %p128, %p129
      %p131 = scmp.ne.s32.totalorder %s119, %s120
      %p132 = scmp.eq.s32.totalorder %s26, 1
      %p133 = por %p131, %p132
      %p135 = scmp.ne.s32.totalorder %s120, %s134
      %p136 = scmp.eq.s32.totalorder %s26, 0
      %p137 = por %p135, %p136
      %s139 = sadd.s32 %s138, 1
      %p142 = scmp.eq.s32.totalorder %s20, 1
      %p143 = scmp.ne.s32.totalorder %s138, %s140
      %p144 = scmp.eq.s32.totalorder %s20, 0
      %p145 = por %p143, %p144
      %p146 = scmp.ne.s32.totalorder %s138, %s140
      %p147 = scmp.eq.s32.totalorder %s25, 1
      %p148 = por %p146, %p147
      %p149 = scmp.ne.s32.totalorder %s140, %s141
      %p150 = scmp.eq.s32.totalorder %s25, 0
      %p151 = por %p149, %p150
      %p152 = scmp.ne.s32.totalorder %s140, %s141
      %p153 = scmp.eq.s32.totalorder %s26, 1
      %p154 = por %p152, %p153
      %p156 = scmp.ne.s32.totalorder %s141, %s155
      %p157 = scmp.eq.s32.totalorder %s26, 0
      %p158 = por %p156, %p157
      %s160 = sadd.s32 %s159, 1
      %p163 = scmp.eq.s32.totalorder %s20, 1
      %p164 = scmp.ne.s32.totalorder %s159, %s161
      %p165 = scmp.eq.s32.totalorder %s20, 0
      %p166 = por %p164, %p165
      %p167 = scmp.ne.s32.totalorder %s159, %s161
      %p168 = scmp.eq.s32.totalorder %s25, 1
      %p169 = por %p167, %p168
      %p170 = scmp.ne.s32.totalorder %s161, %s162
      %p171 = scmp.eq.s32.totalorder %s25, 0
      %p172 = por %p170, %p171
      %p173 = scmp.ne.s32.totalorder %s161, %s162
      %p174 = scmp.eq.s32.totalorder %s26, 1
      %p175 = por %p173, %p174
      %p177 = scmp.ne.s32.totalorder %s162, %s176
      %p178 = scmp.eq.s32.totalorder %s26, 0
      %p179 = por %p177, %p178
      %s180 = ssub.s32 %s20, %s27
      %p181 = scmp.eq.s32.totalorder %s180, 0
      %s183 = sadd.s32 %s182, 1
      %s184 = scalar_select %p181, %s182, %s183
      %p187 = pneg %p181
      %p188 = scmp.eq.s32.totalorder %s20, 1
      %p189 = por %p187, %p188
      %p190 = scmp.ne.s32.totalorder %s182, %s185
      %p191 = scmp.eq.s32.totalorder %s20, 0
      %p192 = por %p190, %p191
      %p193 = scmp.ne.s32.totalorder %s182, %s185
      %p194 = scmp.eq.s32.totalorder %s25, 1
      %p195 = por %p193, %p194
      %p196 = scmp.ne.s32.totalorder %s185, %s186
      %p197 = scmp.eq.s32.totalorder %s25, 0
      %p198 = por %p196, %p197
      %p199 = scmp.ne.s32.totalorder %s185, %s186
      %p200 = scmp.eq.s32.totalorder %s26, 1
      %p201 = por %p199, %p200
      %p203 = scmp.ne.s32.totalorder %s186, %s202
      %p204 = scmp.eq.s32.totalorder %s26, 0
      %p205 = por %p203, %p204
      %p206 = scmp.le.s32.totalorder 1, %s20
      %p207 = scmp.lt.s32.totalorder %s20, 3
      %p208 = pnand %p206, %p207
      %p209 = pneg %p208
      // Predicated region
      $region9: #{tpu_custom_call.1} parent=5 // pred_check
        _
      $region10: #{tpu_custom_call.1} parent=5 // pred_check_branch
        %211 = sbr.rel (%p208) target = $region12
      $region11: #{tpu_custom_call.1} parent=5 // pred_region
        %s212 = ssub.s32 %s20, 1
        // Predicated region
        $region13: #{tpu_custom_call.1} parent=11 // pred_check
          %p213 = pneg %p67
        $region14: #{tpu_custom_call.1} parent=11 // pred_check_branch
          %215 = sbr.rel (%p213) target = $region16
        $region15: #{tpu_custom_call.1} parent=11 // pred_region
          _
        $region16: #{tpu_custom_call.1} parent=11 // pred_fallthru
          _
        // Predicated region
        $region17: #{tpu_custom_call.1} parent=11 // pred_check
          %p216 = pneg %p88
        $region18: #{tpu_custom_call.1} parent=11 // pred_check_branch
          %218 = sbr.rel (%p216) target = $region20
        $region19: #{tpu_custom_call.1} parent=11 // pred_region
          _
        $region20: #{tpu_custom_call.1} parent=11 // pred_fallthru
          _
        // Predicated region
        $region21: #{tpu_custom_call.1} parent=11 // pred_check
          %p219 = pneg %p109
        $region22: #{tpu_custom_call.1} parent=11 // pred_check_branch
          %221 = sbr.rel (%p219) target = $region24
        $region23: #{tpu_custom_call.1} parent=11 // pred_region
          %s223 = ssub.s32 256, 256
          %224 = vsyncadd [#allocation6], %s223
          %s225 = sshll.u32 [#allocation5], 4
          %s226 = int_to_ptr.vmem [resolvable:$true] %s225
          %231 = dma.hbm_to_vmem [thread:$0]  %s3, 256, %s226, [#allocation6], 64, 64, 4
        $region24: #{tpu_custom_call.1} parent=11 // pred_fallthru
          _
        // Predicated region
        $region25: #{tpu_custom_call.1} parent=11 // pred_check
          %p232 = pneg %p130
        $region26: #{tpu_custom_call.1} parent=11 // pred_check_branch
          %234 = sbr.rel (%p232) target = $region28
        $region27: #{tpu_custom_call.1} parent=11 // pred_region
          %s236 = ssub.s32 16, 16
          %237 = vsyncadd [#allocation6], %s236
          %s239 = sshll.u32 [#allocation7], 4
          %s240 = int_to_ptr.vmem [resolvable:$true] %s239
          %242 = dma.hbm_to_vmem [thread:$0]  %s4, 16, %s240, [#allocation6]
        $region28: #{tpu_custom_call.1} parent=11 // pred_fallthru
          _
        // Predicated region
        $region29: #{tpu_custom_call.1} parent=11 // pred_check
          %p243 = pneg %p151
        $region30: #{tpu_custom_call.1} parent=11 // pred_check_branch
          %245 = sbr.rel (%p243) target = $region32
        $region31: #{tpu_custom_call.1} parent=11 // pred_region
          _
        $region32: #{tpu_custom_call.1} parent=11 // pred_fallthru
          _
        // Predicated region
        $region33: #{tpu_custom_call.1} parent=11 // pred_check
          %p246 = pneg %p172
        $region34: #{tpu_custom_call.1} parent=11 // pred_check_branch
          %248 = sbr.rel (%p246) target = $region36
        $region35: #{tpu_custom_call.1} parent=11 // pred_region
          _
        $region36: #{tpu_custom_call.1} parent=11 // pred_fallthru
          _
      $region12: #{tpu_custom_call.1} parent=5 // pred_fallthru
        _
      %p249 = scmp.lt.s32.totalorder %s20, 2
      // Predicated region
      $region37: #{tpu_custom_call.1} parent=5 // pred_check
        %p250 = pneg %p249
      $region38: #{tpu_custom_call.1} parent=5 // pred_check_branch
        %252 = sbr.rel (%p250) target = $region40
      $region39: #{tpu_custom_call.1} parent=5 // pred_region
        // Predicated region
        $region41: #{tpu_custom_call.1} parent=39 // pred_check
          %p253 = pneg %p40
        $region42: #{tpu_custom_call.1} parent=39 // pred_check_branch
          %255 = sbr.rel (%p253) target = $region44
        $region43: #{tpu_custom_call.1} parent=39 // pred_region
          %s256 = sand.u32 %s30, 1
          %s257 = scalar_lea.sflag [#allocation3], %s256
          %s258 = sand.u32 %s30, 1
          %s259 = smul.addr %s258, 8
          %s260 = scalar_lea.vmem [#allocation2], %s259
          %s262 = ssub.s32 128, 128
          %263 = vsyncadd %s257, %s262
          %s264 = smul.addr %s20, 128
          %s265 = scalar_lea.hbm %s0, %s264
          %s267 = sshll.u32 %s260, 4
          %s268 = int_to_ptr.vmem [resolvable:$true] %s267
          %270 = dma.hbm_to_vmem [thread:$0]  %s265, 128, %s268, %s257
        $region44: #{tpu_custom_call.1} parent=39 // pred_fallthru
          _
      $region40: #{tpu_custom_call.1} parent=5 // pred_fallthru
        _
      %p271 = scmp.le.s32.totalorder 1, %s20
      %p272 = scmp.lt.s32.totalorder %s20, 3
      %p273 = pnand %p271, %p272
      %p274 = pneg %p273
      // Predicated region
      $region45: #{tpu_custom_call.1} parent=5 // pred_check
        _
      $region46: #{tpu_custom_call.1} parent=5 // pred_check_branch
        %276 = sbr.rel (%p273) target = $region48
      $region47: #{tpu_custom_call.1} parent=5 // pred_region
        %s277 = ssub.s32 %s20, 1
        %s278 = sand.u32 %s33, 1
        %s279 = scalar_lea.sflag [#allocation3], %s278
        %s280 = sand.u32 %s33, 1
        %s281 = smul.addr %s280, 8
        %s282 = scalar_lea.vmem [#allocation2], %s281
        // Predicated region
        $region49: #{tpu_custom_call.1} parent=47 // pred_check
          %p283 = pneg %p46
        $region50: #{tpu_custom_call.1} parent=47 // pred_check_branch
          %285 = sbr.rel (%p283) target = $region52
        $region51: #{tpu_custom_call.1} parent=47 // pred_region
          %286 = dma.done %s279, 128
        $region52: #{tpu_custom_call.1} parent=47 // pred_fallthru
          _
        // Predicated region
        $region53: #{tpu_custom_call.1} parent=47 // pred_check
          %p287 = pneg %p109
        $region54: #{tpu_custom_call.1} parent=47 // pred_check_branch
          %289 = sbr.rel (%p287) target = $region56
        $region55: #{tpu_custom_call.1} parent=47 // pred_region
          %290 = dma.done [#allocation6], 256
        $region56: #{tpu_custom_call.1} parent=47 // pred_fallthru
          _
        // Predicated region
        $region57: #{tpu_custom_call.1} parent=47 // pred_check
          %p291 = pneg %p130
        $region58: #{tpu_custom_call.1} parent=47 // pred_check_branch
          %293 = sbr.rel (%p291) target = $region60
        $region59: #{tpu_custom_call.1} parent=47 // pred_region
          %294 = dma.done [#allocation6], 16
        $region60: #{tpu_custom_call.1} parent=47 // pred_fallthru
          _
        %s295 = sand.u32 %s33, 1
        %s296 = scalar_lea.sflag [#allocation3], %s295
        %s297 = sand.u32 %s33, 1
        %s298 = smul.addr %s297, 8
        %s299 = scalar_lea.vmem [#allocation2], %s298
        %p300 = pneg %p46
        %p301 = pneg %p43
        %p302 = pneg %p67
        %p303 = pneg %p64
        %p304 = pneg %p88
        %p305 = pneg %p85
        %p306 = pneg %p109
        %p307 = pneg %p106
        %p308 = pneg %p130
        %p309 = pneg %p127
        %p310 = pneg %p151
        %p311 = pneg %p148
        %p312 = pneg %p172
        %p313 = pneg %p169
        %p314 = pneg %p198
        %p315 = pneg %p195
        %s316 = sand.u32 %s185, 1
        %s317 = scalar_lea.sflag [#allocation4], %s316
        %s318 = sand.u32 %s185, 1
        %s319 = smul.addr %s318, 8
        %s320 = scalar_lea.vmem [#allocation8], %s319
        %v322 = vld [vmem:[%s282] sm:$0xff]
        %vm323 = vcmask 261120
        %v324 = vsel %vm323, %v322, 0.0
        %325 = vadd.xlane.f32.xlu0 %v324
        %v326 = vpop.xlane.xlu0 %325
        %v327 = vrcp.pop 32.0
        %v328 = vmul.f32 %v326, %v327
        %v329 = vsub.f32 %v322, %v328
        %v330 = vmul.f32 %v329, %v329
        %v331 = vsel %vm323, %v330, 0.0
        %332 = vadd.xlane.f32.xlu0 %v331
        %v333 = vpop.xlane.xlu0 %332
        %v334 = vmul.f32 %v333, %v327
        %v335 = vadd.f32 %v334, 1e-05
        %v336 = vrsqrt.pop %v335
        %v337 = vmul.f32 %v329, %v336
        %v338 = vld [vmem:[%s1] sm:$0x1]
        %v340 = vlaneseq
        %v341 = vshrl.u32 %v340, 7
        %v342 = vsub.s32 0, %v341
        %v343 = vrot.slane %v338, %v342
        %v345 = vmul.f32 %v337, %v343
        %v346 = vld [vmem:[%s2] sm:$0x1]
        %v348 = vlaneseq
        %v349 = vshrl.u32 %v348, 7
        %v350 = vsub.s32 0, %v349
        %v351 = vrot.slane %v346, %v350
        %v353 = vadd.f32 %v345, %v351
        %v354 = vpack.c.bf16 %v353, %v353
        %v355 = vld [vmem:[#allocation5] sm:$0xf]
        %v356 = vld [vmem:[#allocation5 + $0x4] sm:$0xf]
        %v357 = vld [vmem:[#allocation5 + $0x8] sm:$0xf]
        %v358 = vld [vmem:[#allocation5 + $0xc] sm:$0xf]
        %v359 = vld [vmem:[#allocation7] sm:$0x1]
        %v361 = vlaneseq
        %v362 = vshrl.u32 %v361, 7
        %v363 = vsub.s32 0, %v362
        %v364 = vrot.slane %v359, %v363
        %v370 = vunpack.c.l.b16 %v355
        %v371 = vunpack.c.l.b16 %v356
        %v372 = vunpack.c.l.b16 %v357
        %v373 = vunpack.c.l.b16 %v358
        %v374 = vpack.c.b16 %v371, %v370
        %v375 = vpack.c.b16 %v373, %v372
        %v379 = vsel %vm323, %v354, 0
        %381 = vmatprep.subr.bf16.mxu0 0
        %382 = vmatpush1.bf16.msra.mxu0 %v374
        %383 = vmatprep.subr.bf16.mxu0 0
        %384 = vmatpush1.bf16.msra.mxu0 %v375
        %385 = vmatprep.subr.bf16.mxu0 0
        %386 = vmatpush1.bf16.msra.mxu0 0
        %387 = vmatprep.subr.bf16.mxu0 0
        %388 = vmatpush1.bf16.msra.mxu0 0
        %389 = vmatprep.subr.bf16.mxu0 0
        %390 = vmatpush1.bf16.msra.mxu0 0
        %391 = vmatprep.subr.bf16.mxu0 0
        %392 = vmatpush1.bf16.msra.mxu0 0
        %393 = vmatprep.subr.bf16.mxu0 0
        %394 = vmatpush1.bf16.msra.mxu0 0
        %395 = vmatprep.subr.bf16.mxu0 0
        %396 = vmatpush1.bf16.msra.mxu0 0
        %397 = vmatprep.subr.bf16.mxu0 0
        %398 = vmatpush1.bf16.msra.mxu0 0
        %399 = vmatprep.subr.bf16.mxu0 0
        %400 = vmatpush1.bf16.msra.mxu0 0
        %401 = vmatprep.subr.bf16.mxu0 0
        %402 = vmatpush1.bf16.msra.mxu0 0
        %403 = vmatprep.subr.bf16.mxu0 0
        %404 = vmatpush1.bf16.msra.mxu0 0
        %405 = vmatprep.subr.bf16.mxu0 0
        %406 = vmatpush1.bf16.msra.mxu0 0
        %407 = vmatprep.subr.bf16.mxu0 0
        %408 = vmatpush1.bf16.msra.mxu0 0
        %409 = vmatprep.subr.bf16.mxu0 0
        %410 = vmatpush1.bf16.msra.mxu0 0
        %411 = vmatprep.subr.bf16.mxu0 0
        %412 = vmatpush1.bf16.msra.mxu0 0
        %413 = vmatprep.mubr.bf16.mxu0 0
        %414 = vmatmul.mubr.bf16.gmra.mrb[0].mxu0 %v379
        %v415 = vpop.f32.mrb[0].mxu0
        %v416 = vadd.f32 %v364, %v415
        %v417 = vpop.f32.mrb[0].mxu0
        %v418 = vpop.f32.mrb[0].mxu0
        %v419 = vpop.f32.mrb[0].mxu0
        %420 = vdwg.mxu0
        %v421 = vpack.c.bf16 %v416, %v416
        %423 = vrot.lane.b32.xlu0 %v421, 96
        %v424 = vpop.permute.xlu0 %423
        %vm425 = vcmask 31744
        %v427 = vsel %vm425, %v421, 0
        %v430 = vsel %vm425, %v424, 0
        %432 = vmatprep.subr.bf16.mxu0 0
        %433 = vmatpush1.bf16.xpose.msra.mxu0 %v430
        %434 = vmatprep.subr.bf16.mxu0 0
        %435 = vmatpush1.bf16.xpose.msra.mxu0 0
        %436 = vmatprep.subr.bf16.mxu0 0
        %437 = vmatpush1.bf16.xpose.msra.mxu0 0
        %438 = vmatprep.subr.bf16.mxu0 0
        %439 = vmatpush1.bf16.xpose.msra.mxu0 0
        %440 = vmatprep.subr.bf16.mxu0 0
        %441 = vmatpush1.bf16.xpose.msra.mxu0 0
        %442 = vmatprep.subr.bf16.mxu0 0
        %443 = vmatpush1.bf16.xpose.msra.mxu0 0
        %444 = vmatprep.subr.bf16.mxu0 0
        %445 = vmatpush1.bf16.xpose.msra.mxu0 0
        %446 = vmatprep.subr.bf16.mxu0 0
        %447 = vmatpush1.bf16.xpose.msra.mxu0 0
        %448 = vmatprep.subr.bf16.mxu0 0
        %449 = vmatpush1.bf16.xpose.msra.mxu0 0
        %450 = vmatprep.subr.bf16.mxu0 0
        %451 = vmatpush1.bf16.xpose.msra.mxu0 0
        %452 = vmatprep.subr.bf16.mxu0 0
        %453 = vmatpush1.bf16.xpose.msra.mxu0 0
        %454 = vmatprep.subr.bf16.mxu0 0
        %455 = vmatpush1.bf16.xpose.msra.mxu0 0
        %456 = vmatprep.subr.bf16.mxu0 0
        %457 = vmatpush1.bf16.xpose.msra.mxu0 0
        %458 = vmatprep.subr.bf16.mxu0 0
        %459 = vmatpush1.bf16.xpose.msra.mxu0 0
        %460 = vmatprep.subr.bf16.mxu0 0
        %461 = vmatpush1.bf16.xpose.msra.mxu0 0
        %462 = vmatprep.subr.bf16.mxu0 0
        %463 = vmatpush1.bf16.xpose.msra.mxu0 0
        %464 = vmatprep.mubr.bf16.mxu0 0
        %465 = vmatmul.mubr.bf16.gmra.mrb[0].mxu0 %v427
        %v466 = vpop.f32.mrb[0].mxu0
        %v467 = vadd.f32 0.0, %v466
        %v468 = vpop.f32.mrb[0].mxu0
        %v469 = vpop.f32.mrb[0].mxu0
        %v470 = vpop.f32.mrb[0].mxu0
        %471 = vdwg.mxu0
        %vm472 = vcmask 64512
        %v473 = vsel %vm472, %v467, -inf
        %474 = vmax.xlane.f32.xlu0 %v473
        %v475 = vpop.xlane.xlu0 %474
        %v476 = vsub.f32 %v467, %v475
        %v477 = vmul.f32 %v476, 1.442695
        %v478 = vpow.pop %v477
        %v479 = vsel %vm472, %v478, 0.0
        %480 = vadd.xlane.f32.xlu0 %v479
        %v481 = vpop.xlane.xlu0 %480
        %v482 = vpack.c.bf16 %v478, %v478
        %483 = vrot.lane.b32.xlu0 %v421, 64
        %v484 = vpop.permute.xlu0 %483
        %v486 = vsel %vm472, %v482, 0
        %vm488 = vcmask 1043456
        %v490 = vsel %vm488, %v484, 0
        %492 = vmatprep.subr.bf16.mxu0 0
        %493 = vmatpush1.bf16.msra.mxu0 %v490
        %494 = vmatprep.subr.bf16.mxu0 0
        %495 = vmatpush1.bf16.msra.mxu0 0
        %496 = vmatprep.subr.bf16.mxu0 0
        %497 = vmatpush1.bf16.msra.mxu0 0
        %498 = vmatprep.subr.bf16.mxu0 0
        %499 = vmatpush1.bf16.msra.mxu0 0
        %500 = vmatprep.subr.bf16.mxu0 0
        %501 = vmatpush1.bf16.msra.mxu0 0
        %502 = vmatprep.subr.bf16.mxu0 0
        %503 = vmatpush1.bf16.msra.mxu0 0
        %504 = vmatprep.subr.bf16.mxu0 0
        %505 = vmatpush1.bf16.msra.mxu0 0
        %506 = vmatprep.subr.bf16.mxu0 0
        %507 = vmatpush1.bf16.msra.mxu0 0
        %508 = vmatprep.subr.bf16.mxu0 0
        %509 = vmatpush1.bf16.msra.mxu0 0
        %510 = vmatprep.subr.bf16.mxu0 0
        %511 = vmatpush1.bf16.msra.mxu0 0
        %512 = vmatprep.subr.bf16.mxu0 0
        %513 = vmatpush1.bf16.msra.mxu0 0
        %514 = vmatprep.subr.bf16.mxu0 0
        %515 = vmatpush1.bf16.msra.mxu0 0
        %516 = vmatprep.subr.bf16.mxu0 0
        %517 = vmatpush1.bf16.msra.mxu0 0
        %518 = vmatprep.subr.bf16.mxu0 0
        %519 = vmatpush1.bf16.msra.mxu0 0
        %520 = vmatprep.subr.bf16.mxu0 0
        %521 = vmatpush1.bf16.msra.mxu0 0
        %522 = vmatprep.subr.bf16.mxu0 0
        %523 = vmatpush1.bf16.msra.mxu0 0
        %524 = vmatprep.mubr.bf16.mxu0 0
        %525 = vmatmul.mubr.bf16.gmra.mrb[0].mxu0 %v486
        %v526 = vpop.f32.mrb[0].mxu0
        %v527 = vadd.f32 0.0, %v526
        %v528 = vpop.f32.mrb[0].mxu0
        %v529 = vpop.f32.mrb[0].mxu0
        %v530 = vpop.f32.mrb[0].mxu0
        %531 = vdwg.mxu0
        %v532 = vrcp.pop %v481
        %v533 = vmul.f32 %v527, %v532
        %534 = vrot.lane.b32.xlu0 %v421, 124
        %v535 = vpop.permute.xlu0 %534
        %536 = vrot.lane.b32.xlu0 %v421, 92
        %v537 = vpop.permute.xlu0 %536
        %v539 = vsel %vm425, %v535, 0
        %v542 = vsel %vm425, %v537, 0
        %544 = vmatprep.subr.bf16.mxu0 0
        %545 = vmatpush1.bf16.xpose.msra.mxu0 %v542
        %546 = vmatprep.subr.bf16.mxu0 0
        %547 = vmatpush1.bf16.xpose.msra.mxu0 0
        %548 = vmatprep.subr.bf16.mxu0 0
        %549 = vmatpush1.bf16.xpose.msra.mxu0 0
        %550 = vmatprep.subr.bf16.mxu0 0
        %551 = vmatpush1.bf16.xpose.msra.mxu0 0
        %552 = vmatprep.subr.bf16.mxu0 0
        %553 = vmatpush1.bf16.xpose.msra.mxu0 0
        %554 = vmatprep.subr.bf16.mxu0 0
        %555 = vmatpush1.bf16.xpose.msra.mxu0 0
        %556 = vmatprep.subr.bf16.mxu0 0
        %557 = vmatpush1.bf16.xpose.msra.mxu0 0
        %558 = vmatprep.subr.bf16.mxu0 0
        %559 = vmatpush1.bf16.xpose.msra.mxu0 0
        %560 = vmatprep.subr.bf16.mxu0 0
        %561 = vmatpush1.bf16.xpose.msra.mxu0 0
        %562 = vmatprep.subr.bf16.mxu0 0
        %563 = vmatpush1.bf16.xpose.msra.mxu0 0
        %564 = vmatprep.subr.bf16.mxu0 0
        %565 = vmatpush1.bf16.xpose.msra.mxu0 0
        %566 = vmatprep.subr.bf16.mxu0 0
        %567 = vmatpush1.bf16.xpose.msra.mxu0 0
        %568 = vmatprep.subr.bf16.mxu0 0
        %569 = vmatpush1.bf16.xpose.msra.mxu0 0
        %570 = vmatprep.subr.bf16.mxu0 0
        %571 = vmatpush1.bf16.xpose.msra.mxu0 0
        %572 = vmatprep.subr.bf16.mxu0 0
        %573 = vmatpush1.bf16.xpose.msra.mxu0 0
        %574 = vmatprep.subr.bf16.mxu0 0
        %575 = vmatpush1.bf16.xpose.msra.mxu0 0
        %576 = vmatprep.mubr.bf16.mxu0 0
        %577 = vmatmul.mubr.bf16.gmra.mrb[0].mxu0 %v539
        %v578 = vpop.f32.mrb[0].mxu0
        %v579 = vadd.f32 0.0, %v578
        %v580 = vpop.f32.mrb[0].mxu0
        %v581 = vpop.f32.mrb[0].mxu0
        %v582 = vpop.f32.mrb[0].mxu0
        %583 = vdwg.mxu0
        %v584 = vsel %vm472, %v579, -inf
        %585 = vmax.xlane.f32.xlu0 %v584
        %v586 = vpop.xlane.xlu0 %585
        %v587 = vsub.f32 %v579, %v586
        %v588 = vmul.f32 %v587, 1.442695
        %v589 = vpow.pop %v588
        %v590 = vsel %vm472, %v589, 0.0
        %591 = vadd.xlane.f32.xlu0 %v590
        %v592 = vpop.xlane.xlu0 %591
        %v593 = vpack.c.bf16 %v589, %v589
        %594 = vrot.lane.b32.xlu0 %v421, 60
        %v595 = vpop.permute.xlu0 %594
        %v597 = vsel %vm472, %v593, 0
        %v600 = vsel %vm488, %v595, 0
        %602 = vmatprep.subr.bf16.mxu0 0
        %603 = vmatpush1.bf16.msra.mxu0 %v600
        %604 = vmatprep.subr.bf16.mxu0 0
        %605 = vmatpush1.bf16.msra.mxu0 0
        %606 = vmatprep.subr.bf16.mxu0 0
        %607 = vmatpush1.bf16.msra.mxu0 0
        %608 = vmatprep.subr.bf16.mxu0 0
        %609 = vmatpush1.bf16.msra.mxu0 0
        %610 = vmatprep.subr.bf16.mxu0 0
        %611 = vmatpush1.bf16.msra.mxu0 0
        %612 = vmatprep.subr.bf16.mxu0 0
        %613 = vmatpush1.bf16.msra.mxu0 0
        %614 = vmatprep.subr.bf16.mxu0 0
        %615 = vmatpush1.bf16.msra.mxu0 0
        %616 = vmatprep.subr.bf16.mxu0 0
        %617 = vmatpush1.bf16.msra.mxu0 0
        %618 = vmatprep.subr.bf16.mxu0 0
        %619 = vmatpush1.bf16.msra.mxu0 0
        %620 = vmatprep.subr.bf16.mxu0 0
        %621 = vmatpush1.bf16.msra.mxu0 0
        %622 = vmatprep.subr.bf16.mxu0 0
        %623 = vmatpush1.bf16.msra.mxu0 0
        %624 = vmatprep.subr.bf16.mxu0 0
        %625 = vmatpush1.bf16.msra.mxu0 0
        %626 = vmatprep.subr.bf16.mxu0 0
        %627 = vmatpush1.bf16.msra.mxu0 0
        %628 = vmatprep.subr.bf16.mxu0 0
        %629 = vmatpush1.bf16.msra.mxu0 0
        %630 = vmatprep.subr.bf16.mxu0 0
        %631 = vmatpush1.bf16.msra.mxu0 0
        %632 = vmatprep.subr.bf16.mxu0 0
        %633 = vmatpush1.bf16.msra.mxu0 0
        %634 = vmatprep.mubr.bf16.mxu0 0
        %635 = vmatmul.mubr.bf16.gmra.mrb[0].mxu0 %v597
        %v636 = vpop.f32.mrb[0].mxu0
        %v637 = vadd.f32 0.0, %v636
        %v638 = vpop.f32.mrb[0].mxu0
        %v639 = vpop.f32.mrb[0].mxu0
        %v640 = vpop.f32.mrb[0].mxu0
        %641 = vdwg.mxu0
        %v642 = vrcp.pop %v592
        %v643 = vmul.f32 %v637, %v642
        %644 = vrot.lane.b32.xlu0 %v421, 120
        %v645 = vpop.permute.xlu0 %644
        %646 = vrot.lane.b32.xlu0 %v421, 88
        %v647 = vpop.permute.xlu0 %646
        %v649 = vsel %vm425, %v645, 0
        %v652 = vsel %vm425, %v647, 0
        %654 = vmatprep.subr.bf16.mxu0 0
        %655 = vmatpush1.bf16.xpose.msra.mxu0 %v652
        %656 = vmatprep.subr.bf16.mxu0 0
        %657 = vmatpush1.bf16.xpose.msra.mxu0 0
        %658 = vmatprep.subr.bf16.mxu0 0
        %659 = vmatpush1.bf16.xpose.msra.mxu0 0
        %660 = vmatprep.subr.bf16.mxu0 0
        %661 = vmatpush1.bf16.xpose.msra.mxu0 0
        %662 = vmatprep.subr.bf16.mxu0 0
        %663 = vmatpush1.bf16.xpose.msra.mxu0 0
        %664 = vmatprep.subr.bf16.mxu0 0
        %665 = vmatpush1.bf16.xpose.msra.mxu0 0
        %666 = vmatprep.subr.bf16.mxu0 0
        %667 = vmatpush1.bf16.xpose.msra.mxu0 0
        %668 = vmatprep.subr.bf16.mxu0 0
        %669 = vmatpush1.bf16.xpose.msra.mxu0 0
        %670 = vmatprep.subr.bf16.mxu0 0
        %671 = vmatpush1.bf16.xpose.msra.mxu0 0
        %672 = vmatprep.subr.bf16.mxu0 0
        %673 = vmatpush1.bf16.xpose.msra.mxu0 0
        %674 = vmatprep.subr.bf16.mxu0 0
        %675 = vmatpush1.bf16.xpose.msra.mxu0 0
        %676 = vmatprep.subr.bf16.mxu0 0
        %677 = vmatpush1.bf16.xpose.msra.mxu0 0
        %678 = vmatprep.subr.bf16.mxu0 0
        %679 = vmatpush1.bf16.xpose.msra.mxu0 0
        %680 = vmatprep.subr.bf16.mxu0 0
        %681 = vmatpush1.bf16.xpose.msra.mxu0 0
        %682 = vmatprep.subr.bf16.mxu0 0
        %683 = vmatpush1.bf16.xpose.msra.mxu0 0
        %684 = vmatprep.subr.bf16.mxu0 0
        %685 = vmatpush1.bf16.xpose.msra.mxu0 0
        %686 = vmatprep.mubr.bf16.mxu0 0
        %687 = vmatmul.mubr.bf16.gmra.mrb[0].mxu0 %v649
        %v688 = vpop.f32.mrb[0].mxu0
        %v689 = vadd.f32 0.0, %v688
        %v690 = vpop.f32.mrb[0].mxu0
        %v691 = vpop.f32.mrb[0].mxu0
        %v692 = vpop.f32.mrb[0].mxu0
        %693 = vdwg.mxu0
        %v694 = vsel %vm472, %v689, -inf
        %695 = vmax.xlane.f32.xlu0 %v694
        %v696 = vpop.xlane.xlu0 %695
        %v697 = vsub.f32 %v689, %v696
        %v698 = vmul.f32 %v697, 1.442695
        %v699 = vpow.pop %v698
        %v700 = vsel %vm472, %v699, 0.0
        %701 = vadd.xlane.f32.xlu0 %v700
        %v702 = vpop.xlane.xlu0 %701
        %v703 = vpack.c.bf16 %v699, %v699
        %704 = vrot.lane.b32.xlu0 %v421, 56
        %v705 = vpop.permute.xlu0 %704
        %v707 = vsel %vm472, %v703, 0
        %v710 = vsel %vm488, %v705, 0
        %712 = vmatprep.subr.bf16.mxu0 0
        %713 = vmatpush1.bf16.msra.mxu0 %v710
        %714 = vmatprep.subr.bf16.mxu0 0
        %715 = vmatpush1.bf16.msra.mxu0 0
        %716 = vmatprep.subr.bf16.mxu0 0
        %717 = vmatpush1.bf16.msra.mxu0 0
        %718 = vmatprep.subr.bf16.mxu0 0
        %719 = vmatpush1.bf16.msra.mxu0 0
        %720 = vmatprep.subr.bf16.mxu0 0
        %721 = vmatpush1.bf16.msra.mxu0 0
        %722 = vmatprep.subr.bf16.mxu0 0
        %723 = vmatpush1.bf16.msra.mxu0 0
        %724 = vmatprep.subr.bf16.mxu0 0
        %725 = vmatpush1.bf16.msra.mxu0 0
        %726 = vmatprep.subr.bf16.mxu0 0
        %727 = vmatpush1.bf16.msra.mxu0 0
        %728 = vmatprep.subr.bf16.mxu0 0
        %729 = vmatpush1.bf16.msra.mxu0 0
        %730 = vmatprep.subr.bf16.mxu0 0
        %731 = vmatpush1.bf16.msra.mxu0 0
        %732 = vmatprep.subr.bf16.mxu0 0
        %733 = vmatpush1.bf16.msra.mxu0 0
        %734 = vmatprep.subr.bf16.mxu0 0
        %735 = vmatpush1.bf16.msra.mxu0 0
        %736 = vmatprep.subr.bf16.mxu0 0
        %737 = vmatpush1.bf16.msra.mxu0 0
        %738 = vmatprep.subr.bf16.mxu0 0
        %739 = vmatpush1.bf16.msra.mxu0 0
        %740 = vmatprep.subr.bf16.mxu0 0
        %741 = vmatpush1.bf16.msra.mxu0 0
        %742 = vmatprep.subr.bf16.mxu0 0
        %743 = vmatpush1.bf16.msra.mxu0 0
        %744 = vmatprep.mubr.bf16.mxu0 0
        %745 = vmatmul.mubr.bf16.gmra.mrb[0].mxu0 %v707
        %v746 = vpop.f32.mrb[0].mxu0
        %v747 = vadd.f32 0.0, %v746
        %v748 = vpop.f32.mrb[0].mxu0
        %v749 = vpop.f32.mrb[0].mxu0
        %v750 = vpop.f32.mrb[0].mxu0
        %751 = vdwg.mxu0
        %v752 = vrcp.pop %v702
        %v753 = vmul.f32 %v747, %v752
        %754 = vrot.lane.b32.xlu0 %v421, 116
        %v755 = vpop.permute.xlu0 %754
        %756 = vrot.lane.b32.xlu0 %v421, 84
        %v757 = vpop.permute.xlu0 %756
        %v759 = vsel %vm425, %v755, 0
        %v762 = vsel %vm425, %v757, 0
        %764 = vmatprep.subr.bf16.mxu0 0
        %765 = vmatpush1.bf16.xpose.msra.mxu0 %v762
        %766 = vmatprep.subr.bf16.mxu0 0
        %767 = vmatpush1.bf16.xpose.msra.mxu0 0
        %768 = vmatprep.subr.bf16.mxu0 0
        %769 = vmatpush1.bf16.xpose.msra.mxu0 0
        %770 = vmatprep.subr.bf16.mxu0 0
        %771 = vmatpush1.bf16.xpose.msra.mxu0 0
        %772 = vmatprep.subr.bf16.mxu0 0
        %773 = vmatpush1.bf16.xpose.msra.mxu0 0
        %774 = vmatprep.subr.bf16.mxu0 0
        %775 = vmatpush1.bf16.xpose.msra.mxu0 0
        %776 = vmatprep.subr.bf16.mxu0 0
        %777 = vmatpush1.bf16.xpose.msra.mxu0 0
        %778 = vmatprep.subr.bf16.mxu0 0
        %779 = vmatpush1.bf16.xpose.msra.mxu0 0
        %780 = vmatprep.subr.bf16.mxu0 0
        %781 = vmatpush1.bf16.xpose.msra.mxu0 0
        %782 = vmatprep.subr.bf16.mxu0 0
        %783 = vmatpush1.bf16.xpose.msra.mxu0 0
        %784 = vmatprep.subr.bf16.mxu0 0
        %785 = vmatpush1.bf16.xpose.msra.mxu0 0
        %786 = vmatprep.subr.bf16.mxu0 0
        %787 = vmatpush1.bf16.xpose.msra.mxu0 0
        %788 = vmatprep.subr.bf16.mxu0 0
        %789 = vmatpush1.bf16.xpose.msra.mxu0 0
        %790 = vmatprep.subr.bf16.mxu0 0
        %791 = vmatpush1.bf16.xpose.msra.mxu0 0
        %792 = vmatprep.subr.bf16.mxu0 0
        %793 = vmatpush1.bf16.xpose.msra.mxu0 0
        %794 = vmatprep.subr.bf16.mxu0 0
        %795 = vmatpush1.bf16.xpose.msra.mxu0 0
        %796 = vmatprep.mubr.bf16.mxu0 0
        %797 = vmatmul.mubr.bf16.gmra.mrb[0].mxu0 %v759
        %v798 = vpop.f32.mrb[0].mxu0
        %v799 = vadd.f32 0.0, %v798
        %v800 = vpop.f32.mrb[0].mxu0
        %v801 = vpop.f32.mrb[0].mxu0
        %v802 = vpop.f32.mrb[0].mxu0
        %803 = vdwg.mxu0
        %v804 = vsel %vm472, %v799, -inf
        %805 = vmax.xlane.f32.xlu0 %v804
        %v806 = vpop.xlane.xlu0 %805
        %v807 = vsub.f32 %v799, %v806
        %v808 = vmul.f32 %v807, 1.442695
        %v809 = vpow.pop %v808
        %v810 = vsel %vm472, %v809, 0.0
        %811 = vadd.xlane.f32.xlu0 %v810
        %v812 = vpop.xlane.xlu0 %811
        %v813 = vpack.c.bf16 %v809, %v809
        %814 = vrot.lane.b32.xlu0 %v421, 52
        %v815 = vpop.permute.xlu0 %814
        %v817 = vsel %vm472, %v813, 0
        %v820 = vsel %vm488, %v815, 0
        %822 = vmatprep.subr.bf16.mxu0 0
        %823 = vmatpush1.bf16.msra.mxu0 %v820
        %824 = vmatprep.subr.bf16.mxu0 0
        %825 = vmatpush1.bf16.msra.mxu0 0
        %826 = vmatprep.subr.bf16.mxu0 0
        %827 = vmatpush1.bf16.msra.mxu0 0
        %828 = vmatprep.subr.bf16.mxu0 0
        %829 = vmatpush1.bf16.msra.mxu0 0
        %830 = vmatprep.subr.bf16.mxu0 0
        %831 = vmatpush1.bf16.msra.mxu0 0
        %832 = vmatprep.subr.bf16.mxu0 0
        %833 = vmatpush1.bf16.msra.mxu0 0
        %834 = vmatprep.subr.bf16.mxu0 0
        %835 = vmatpush1.bf16.msra.mxu0 0
        %836 = vmatprep.subr.bf16.mxu0 0
        %837 = vmatpush1.bf16.msra.mxu0 0
        %838 = vmatprep.subr.bf16.mxu0 0
        %839 = vmatpush1.bf16.msra.mxu0 0
        %840 = vmatprep.subr.bf16.mxu0 0
        %841 = vmatpush1.bf16.msra.mxu0 0
        %842 = vmatprep.subr.bf16.mxu0 0
        %843 = vmatpush1.bf16.msra.mxu0 0
        %844 = vmatprep.subr.bf16.mxu0 0
        %845 = vmatpush1.bf16.msra.mxu0 0
        %846 = vmatprep.subr.bf16.mxu0 0
        %847 = vmatpush1.bf16.msra.mxu0 0
        %848 = vmatprep.subr.bf16.mxu0 0
        %849 = vmatpush1.bf16.msra.mxu0 0
        %850 = vmatprep.subr.bf16.mxu0 0
        %851 = vmatpush1.bf16.msra.mxu0 0
        %852 = vmatprep.subr.bf16.mxu0 0
        %853 = vmatpush1.bf16.msra.mxu0 0
        %854 = vmatprep.mubr.bf16.mxu0 0
        %855 = vmatmul.mubr.bf16.gmra.mrb[0].mxu0 %v817
        %v856 = vpop.f32.mrb[0].mxu0
        %v857 = vadd.f32 0.0, %v856
        %v858 = vpop.f32.mrb[0].mxu0
        %v859 = vpop.f32.mrb[0].mxu0
        %v860 = vpop.f32.mrb[0].mxu0
        %861 = vdwg.mxu0
        %v862 = vrcp.pop %v812
        %v863 = vmul.f32 %v857, %v862
        %864 = vrot.lane.b32.xlu0 %v421, 112
        %v865 = vpop.permute.xlu0 %864
        %866 = vrot.lane.b32.xlu0 %v421, 80
        %v867 = vpop.permute.xlu0 %866
        %v869 = vsel %vm425, %v865, 0
        %v872 = vsel %vm425, %v867, 0
        %874 = vmatprep.subr.bf16.mxu0 0
        %875 = vmatpush1.bf16.xpose.msra.mxu0 %v872
        %876 = vmatprep.subr.bf16.mxu0 0
        %877 = vmatpush1.bf16.xpose.msra.mxu0 0
        %878 = vmatprep.subr.bf16.mxu0 0
        %879 = vmatpush1.bf16.xpose.msra.mxu0 0
        %880 = vmatprep.subr.bf16.mxu0 0
        %881 = vmatpush1.bf16.xpose.msra.mxu0 0
        %882 = vmatprep.subr.bf16.mxu0 0
        %883 = vmatpush1.bf16.xpose.msra.mxu0 0
        %884 = vmatprep.subr.bf16.mxu0 0
        %885 = vmatpush1.bf16.xpose.msra.mxu0 0
        %886 = vmatprep.subr.bf16.mxu0 0
        %887 = vmatpush1.bf16.xpose.msra.mxu0 0
        %888 = vmatprep.subr.bf16.mxu0 0
        %889 = vmatpush1.bf16.xpose.msra.mxu0 0
        %890 = vmatprep.subr.bf16.mxu0 0
        %891 = vmatpush1.bf16.xpose.msra.mxu0 0
        %892 = vmatprep.subr.bf16.mxu0 0
        %893 = vmatpush1.bf16.xpose.msra.mxu0 0
        %894 = vmatprep.subr.bf16.mxu0 0
        %895 = vmatpush1.bf16.xpose.msra.mxu0 0
        %896 = vmatprep.subr.bf16.mxu0 0
        %897 = vmatpush1.bf16.xpose.msra.mxu0 0
        %898 = vmatprep.subr.bf16.mxu0 0
        %899 = vmatpush1.bf16.xpose.msra.mxu0 0
        %900 = vmatprep.subr.bf16.mxu0 0
        %901 = vmatpush1.bf16.xpose.msra.mxu0 0
        %902 = vmatprep.subr.bf16.mxu0 0
        %903 = vmatpush1.bf16.xpose.msra.mxu0 0
        %904 = vmatprep.subr.bf16.mxu0 0
        %905 = vmatpush1.bf16.xpose.msra.mxu0 0
        %906 = vmatprep.mubr.bf16.mxu0 0
        %907 = vmatmul.mubr.bf16.gmra.mrb[0].mxu0 %v869
        %v908 = vpop.f32.mrb[0].mxu0
        %v909 = vadd.f32 0.0, %v908
        %v910 = vpop.f32.mrb[0].mxu0
        %v911 = vpop.f32.mrb[0].mxu0
        %v912 = vpop.f32.mrb[0].mxu0
        %913 = vdwg.mxu0
        %v914 = vsel %vm472, %v909, -inf
        %915 = vmax.xlane.f32.xlu0 %v914
        %v916 = vpop.xlane.xlu0 %915
        %v917 = vsub.f32 %v909, %v916
        %v918 = vmul.f32 %v917, 1.442695
        %v919 = vpow.pop %v918
        %v920 = vsel %vm472, %v919, 0.0
        %921 = vadd.xlane.f32.xlu0 %v920
        %v922 = vpop.xlane.xlu0 %921
        %v923 = vpack.c.bf16 %v919, %v919
        %924 = vrot.lane.b32.xlu0 %v421, 48
        %v925 = vpop.permute.xlu0 %924
        %v927 = vsel %vm472, %v923, 0
        %v930 = vsel %vm488, %v925, 0
        %932 = vmatprep.subr.bf16.mxu0 0
        %933 = vmatpush1.bf16.msra.mxu0 %v930
        %934 = vmatprep.subr.bf16.mxu0 0
        %935 = vmatpush1.bf16.msra.mxu0 0
        %936 = vmatprep.subr.bf16.mxu0 0
        %937 = vmatpush1.bf16.msra.mxu0 0
        %938 = vmatprep.subr.bf16.mxu0 0
        %939 = vmatpush1.bf16.msra.mxu0 0
        %940 = vmatprep.subr.bf16.mxu0 0
        %941 = vmatpush1.bf16.msra.mxu0 0
        %942 = vmatprep.subr.bf16.mxu0 0
        %943 = vmatpush1.bf16.msra.mxu0 0
        %944 = vmatprep.subr.bf16.mxu0 0
        %945 = vmatpush1.bf16.msra.mxu0 0
        %946 = vmatprep.subr.bf16.mxu0 0
        %947 = vmatpush1.bf16.msra.mxu0 0
        %948 = vmatprep.subr.bf16.mxu0 0
        %949 = vmatpush1.bf16.msra.mxu0 0
        %950 = vmatprep.subr.bf16.mxu0 0
        %951 = vmatpush1.bf16.msra.mxu0 0
        %952 = vmatprep.subr.bf16.mxu0 0
        %953 = vmatpush1.bf16.msra.mxu0 0
        %954 = vmatprep.subr.bf16.mxu0 0
        %955 = vmatpush1.bf16.msra.mxu0 0
        %956 = vmatprep.subr.bf16.mxu0 0
        %957 = vmatpush1.bf16.msra.mxu0 0
        %958 = vmatprep.subr.bf16.mxu0 0
        %959 = vmatpush1.bf16.msra.mxu0 0
        %960 = vmatprep.subr.bf16.mxu0 0
        %961 = vmatpush1.bf16.msra.mxu0 0
        %962 = vmatprep.subr.bf16.mxu0 0
        %963 = vmatpush1.bf16.msra.mxu0 0
        %964 = vmatprep.mubr.bf16.mxu0 0
        %965 = vmatmul.mubr.bf16.gmra.mrb[0].mxu0 %v927
        %v966 = vpop.f32.mrb[0].mxu0
        %v967 = vadd.f32 0.0, %v966
        %v968 = vpop.f32.mrb[0].mxu0
        %v969 = vpop.f32.mrb[0].mxu0
        %v970 = vpop.f32.mrb[0].mxu0
        %971 = vdwg.mxu0
        %v972 = vrcp.pop %v922
        %v973 = vmul.f32 %v967, %v972
        %974 = vrot.lane.b32.xlu0 %v421, 108
        %v975 = vpop.permute.xlu0 %974
        %976 = vrot.lane.b32.xlu0 %v421, 76
        %v977 = vpop.permute.xlu0 %976
        %v979 = vsel %vm425, %v975, 0
        %v982 = vsel %vm425, %v977, 0
        %984 = vmatprep.subr.bf16.mxu0 0
        %985 = vmatpush1.bf16.xpose.msra.mxu0 %v982
        %986 = vmatprep.subr.bf16.mxu0 0
        %987 = vmatpush1.bf16.xpose.msra.mxu0 0
        %988 = vmatprep.subr.bf16.mxu0 0
        %989 = vmatpush1.bf16.xpose.msra.mxu0 0
        %990 = vmatprep.subr.bf16.mxu0 0
        %991 = vmatpush1.bf16.xpose.msra.mxu0 0
        %992 = vmatprep.subr.bf16.mxu0 0
        %993 = vmatpush1.bf16.xpose.msra.mxu0 0
        %994 = vmatprep.subr.bf16.mxu0 0
        %995 = vmatpush1.bf16.xpose.msra.mxu0 0
        %996 = vmatprep.subr.bf16.mxu0 0
        %997 = vmatpush1.bf16.xpose.msra.mxu0 0
        %998 = vmatprep.subr.bf16.mxu0 0
        %999 = vmatpush1.bf16.xpose.msra.mxu0 0
        %1000 = vmatprep.subr.bf16.mxu0 0
        %1001 = vmatpush1.bf16.xpose.msra.mxu0 0
        %1002 = vmatprep.subr.bf16.mxu0 0
        %1003 = vmatpush1.bf16.xpose.msra.mxu0 0
        %1004 = vmatprep.subr.bf16.mxu0 0
        %1005 = vmatpush1.bf16.xpose.msra.mxu0 0
        %1006 = vmatprep.subr.bf16.mxu0 0
        %1007 = vmatpush1.bf16.xpose.msra.mxu0 0
        %1008 = vmatprep.subr.bf16.mxu0 0
        %1009 = vmatpush1.bf16.xpose.msra.mxu0 0
        %1010 = vmatprep.subr.bf16.mxu0 0
        %1011 = vmatpush1.bf16.xpose.msra.mxu0 0
        %1012 = vmatprep.subr.bf16.mxu0 0
        %1013 = vmatpush1.bf16.xpose.msra.mxu0 0
        %1014 = vmatprep.subr.bf16.mxu0 0
        %1015 = vmatpush1.bf16.xpose.msra.mxu0 0
        %1016 = vmatprep.mubr.bf16.mxu0 0
        %1017 = vmatmul.mubr.bf16.gmra.mrb[0].mxu0 %v979
        %v1018 = vpop.f32.mrb[0].mxu0
        %v1019 = vadd.f32 0.0, %v1018
        %v1020 = vpop.f32.mrb[0].mxu0
        %v1021 = vpop.f32.mrb[0].mxu0
        %v1022 = vpop.f32.mrb[0].mxu0
        %1023 = vdwg.mxu0
        %v1024 = vsel %vm472, %v1019, -inf
        %1025 = vmax.xlane.f32.xlu0 %v1024
        %v1026 = vpop.xlane.xlu0 %1025
        %v1027 = vsub.f32 %v1019, %v1026
        %v1028 = vmul.f32 %v1027, 1.442695
        %v1029 = vpow.pop %v1028
        %v1030 = vsel %vm472, %v1029, 0.0
        %1031 = vadd.xlane.f32.xlu0 %v1030
        %v1032 = vpop.xlane.xlu0 %1031
        %v1033 = vpack.c.bf16 %v1029, %v1029
        %1034 = vrot.lane.b32.xlu0 %v421, 44
        %v1035 = vpop.permute.xlu0 %1034
        %v1037 = vsel %vm472, %v1033, 0
        %v1040 = vsel %vm488, %v1035, 0
        %1042 = vmatprep.subr.bf16.mxu0 0
        %1043 = vmatpush1.bf16.msra.mxu0 %v1040
        %1044 = vmatprep.subr.bf16.mxu0 0
        %1045 = vmatpush1.bf16.msra.mxu0 0
        %1046 = vmatprep.subr.bf16.mxu0 0
        %1047 = vmatpush1.bf16.msra.mxu0 0
        %1048 = vmatprep.subr.bf16.mxu0 0
        %1049 = vmatpush1.bf16.msra.mxu0 0
        %1050 = vmatprep.subr.bf16.mxu0 0
        %1051 = vmatpush1.bf16.msra.mxu0 0
        %1052 = vmatprep.subr.bf16.mxu0 0
        %1053 = vmatpush1.bf16.msra.mxu0 0
        %1054 = vmatprep.subr.bf16.mxu0 0
        %1055 = vmatpush1.bf16.msra.mxu0 0
        %1056 = vmatprep.subr.bf16.mxu0 0
        %1057 = vmatpush1.bf16.msra.mxu0 0
        %1058 = vmatprep.subr.bf16.mxu0 0
        %1059 = vmatpush1.bf16.msra.mxu0 0
        %1060 = vmatprep.subr.bf16.mxu0 0
        %1061 = vmatpush1.bf16.msra.mxu0 0
        %1062 = vmatprep.subr.bf16.mxu0 0
        %1063 = vmatpush1.bf16.msra.mxu0 0
        %1064 = vmatprep.subr.bf16.mxu0 0
        %1065 = vmatpush1.bf16.msra.mxu0 0
        %1066 = vmatprep.subr.bf16.mxu0 0
        %1067 = vmatpush1.bf16.msra.mxu0 0
        %1068 = vmatprep.subr.bf16.mxu0 0
        %1069 = vmatpush1.bf16.msra.mxu0 0
        %1070 = vmatprep.subr.bf16.mxu0 0
        %1071 = vmatpush1.bf16.msra.mxu0 0
        %1072 = vmatprep.subr.bf16.mxu0 0
        %1073 = vmatpush1.bf16.msra.mxu0 0
        %1074 = vmatprep.mubr.bf16.mxu0 0
        %1075 = vmatmul.mubr.bf16.gmra.mrb[0].mxu0 %v1037
        %v1076 = vpop.f32.mrb[0].mxu0
        %v1077 = vadd.f32 0.0, %v1076
        %v1078 = vpop.f32.mrb[0].mxu0
        %v1079 = vpop.f32.mrb[0].mxu0
        %v1080 = vpop.f32.mrb[0].mxu0
        %1081 = vdwg.mxu0
        %v1082 = vrcp.pop %v1032
        %v1083 = vmul.f32 %v1077, %v1082
        %1084 = vrot.lane.b32.xlu0 %v421, 104
        %v1085 = vpop.permute.xlu0 %1084
        %1086 = vrot.lane.b32.xlu0 %v421, 72
        %v1087 = vpop.permute.xlu0 %1086
        %v1089 = vsel %vm425, %v1085, 0
        %v1092 = vsel %vm425, %v1087, 0
        %1094 = vmatprep.subr.bf16.mxu0 0
        %1095 = vmatpush1.bf16.xpose.msra.mxu0 %v1092
        %1096 = vmatprep.subr.bf16.mxu0 0
        %1097 = vmatpush1.bf16.xpose.msra.mxu0 0
        %1098 = vmatprep.subr.bf16.mxu0 0
        %1099 = vmatpush1.bf16.xpose.msra.mxu0 0
        %1100 = vmatprep.subr.bf16.mxu0 0
        %1101 = vmatpush1.bf16.xpose.msra.mxu0 0
        %1102 = vmatprep.subr.bf16.mxu0 0
        %1103 = vmatpush1.bf16.xpose.msra.mxu0 0
        %1104 = vmatprep.subr.bf16.mxu0 0
        %1105 = vmatpush1.bf16.xpose.msra.mxu0 0
        %1106 = vmatprep.subr.bf16.mxu0 0
        %1107 = vmatpush1.bf16.xpose.msra.mxu0 0
        %1108 = vmatprep.subr.bf16.mxu0 0
        %1109 = vmatpush1.bf16.xpose.msra.mxu0 0
        %1110 = vmatprep.subr.bf16.mxu0 0
        %1111 = vmatpush1.bf16.xpose.msra.mxu0 0
        %1112 = vmatprep.subr.bf16.mxu0 0
        %1113 = vmatpush1.bf16.xpose.msra.mxu0 0
        %1114 = vmatprep.subr.bf16.mxu0 0
        %1115 = vmatpush1.bf16.xpose.msra.mxu0 0
        %1116 = vmatprep.subr.bf16.mxu0 0
        %1117 = vmatpush1.bf16.xpose.msra.mxu0 0
        %1118 = vmatprep.subr.bf16.mxu0 0
        %1119 = vmatpush1.bf16.xpose.msra.mxu0 0
        %1120 = vmatprep.subr.bf16.mxu0 0
        %1121 = vmatpush1.bf16.xpose.msra.mxu0 0
        %1122 = vmatprep.subr.bf16.mxu0 0
        %1123 = vmatpush1.bf16.xpose.msra.mxu0 0
        %1124 = vmatprep.subr.bf16.mxu0 0
        %1125 = vmatpush1.bf16.xpose.msra.mxu0 0
        %1126 = vmatprep.mubr.bf16.mxu0 0
        %1127 = vmatmul.mubr.bf16.gmra.mrb[0].mxu0 %v1089
        %v1128 = vpop.f32.mrb[0].mxu0
        %v1129 = vadd.f32 0.0, %v1128
        %v1130 = vpop.f32.mrb[0].mxu0
        %v1131 = vpop.f32.mrb[0].mxu0
        %v1132 = vpop.f32.mrb[0].mxu0
        %1133 = vdwg.mxu0
        %v1134 = vsel %vm472, %v1129, -inf
        %1135 = vmax.xlane.f32.xlu0 %v1134
        %v1136 = vpop.xlane.xlu0 %1135
        %v1137 = vsub.f32 %v1129, %v1136
        %v1138 = vmul.f32 %v1137, 1.442695
        %v1139 = vpow.pop %v1138
        %v1140 = vsel %vm472, %v1139, 0.0
        %1141 = vadd.xlane.f32.xlu0 %v1140
        %v1142 = vpop.xlane.xlu0 %1141
        %v1143 = vpack.c.bf16 %v1139, %v1139
        %1144 = vrot.lane.b32.xlu0 %v421, 40
        %v1145 = vpop.permute.xlu0 %1144
        %v1147 = vsel %vm472, %v1143, 0
        %v1150 = vsel %vm488, %v1145, 0
        %1152 = vmatprep.subr.bf16.mxu0 0
        %1153 = vmatpush1.bf16.msra.mxu0 %v1150
        %1154 = vmatprep.subr.bf16.mxu0 0
        %1155 = vmatpush1.bf16.msra.mxu0 0
        %1156 = vmatprep.subr.bf16.mxu0 0
        %1157 = vmatpush1.bf16.msra.mxu0 0
        %1158 = vmatprep.subr.bf16.mxu0 0
        %1159 = vmatpush1.bf16.msra.mxu0 0
        %1160 = vmatprep.subr.bf16.mxu0 0
        %1161 = vmatpush1.bf16.msra.mxu0 0
        %1162 = vmatprep.subr.bf16.mxu0 0
        %1163 = vmatpush1.bf16.msra.mxu0 0
        %1164 = vmatprep.subr.bf16.mxu0 0
        %1165 = vmatpush1.bf16.msra.mxu0 0
        %1166 = vmatprep.subr.bf16.mxu0 0
        %1167 = vmatpush1.bf16.msra.mxu0 0
        %1168 = vmatprep.subr.bf16.mxu0 0
        %1169 = vmatpush1.bf16.msra.mxu0 0
        %1170 = vmatprep.subr.bf16.mxu0 0
        %1171 = vmatpush1.bf16.msra.mxu0 0
        %1172 = vmatprep.subr.bf16.mxu0 0
        %1173 = vmatpush1.bf16.msra.mxu0 0
        %1174 = vmatprep.subr.bf16.mxu0 0
        %1175 = vmatpush1.bf16.msra.mxu0 0
        %1176 = vmatprep.subr.bf16.mxu0 0
        %1177 = vmatpush1.bf16.msra.mxu0 0
        %1178 = vmatprep.subr.bf16.mxu0 0
        %1179 = vmatpush1.bf16.msra.mxu0 0
        %1180 = vmatprep.subr.bf16.mxu0 0
        %1181 = vmatpush1.bf16.msra.mxu0 0
        %1182 = vmatprep.subr.bf16.mxu0 0
        %1183 = vmatpush1.bf16.msra.mxu0 0
        %1184 = vmatprep.mubr.bf16.mxu0 0
        %1185 = vmatmul.mubr.bf16.gmra.mrb[0].mxu0 %v1147
        %v1186 = vpop.f32.mrb[0].mxu0
        %v1187 = vadd.f32 0.0, %v1186
        %v1188 = vpop.f32.mrb[0].mxu0
        %v1189 = vpop.f32.mrb[0].mxu0
        %v1190 = vpop.f32.mrb[0].mxu0
        %1191 = vdwg.mxu0
        %v1192 = vrcp.pop %v1142
        %v1193 = vmul.f32 %v1187, %v1192
        %1194 = vrot.lane.b32.xlu0 %v421, 100
        %v1195 = vpop.permute.xlu0 %1194
        %1196 = vrot.lane.b32.xlu0 %v421, 68
        %v1197 = vpop.permute.xlu0 %1196
        %v1199 = vsel %vm425, %v1195, 0
        %v1202 = vsel %vm425, %v1197, 0
        %1204 = vmatprep.subr.bf16.mxu0 0
        %1205 = vmatpush1.bf16.xpose.msra.mxu0 %v1202
        %1206 = vmatprep.subr.bf16.mxu0 0
        %1207 = vmatpush1.bf16.xpose.msra.mxu0 0
        %1208 = vmatprep.subr.bf16.mxu0 0
        %1209 = vmatpush1.bf16.xpose.msra.mxu0 0
        %1210 = vmatprep.subr.bf16.mxu0 0
        %1211 = vmatpush1.bf16.xpose.msra.mxu0 0
        %1212 = vmatprep.subr.bf16.mxu0 0
        %1213 = vmatpush1.bf16.xpose.msra.mxu0 0
        %1214 = vmatprep.subr.bf16.mxu0 0
        %1215 = vmatpush1.bf16.xpose.msra.mxu0 0
        %1216 = vmatprep.subr.bf16.mxu0 0
        %1217 = vmatpush1.bf16.xpose.msra.mxu0 0
        %1218 = vmatprep.subr.bf16.mxu0 0
        %1219 = vmatpush1.bf16.xpose.msra.mxu0 0
        %1220 = vmatprep.subr.bf16.mxu0 0
        %1221 = vmatpush1.bf16.xpose.msra.mxu0 0
        %1222 = vmatprep.subr.bf16.mxu0 0
        %1223 = vmatpush1.bf16.xpose.msra.mxu0 0
        %1224 = vmatprep.subr.bf16.mxu0 0
        %1225 = vmatpush1.bf16.xpose.msra.mxu0 0
        %1226 = vmatprep.subr.bf16.mxu0 0
        %1227 = vmatpush1.bf16.xpose.msra.mxu0 0
        %1228 = vmatprep.subr.bf16.mxu0 0
        %1229 = vmatpush1.bf16.xpose.msra.mxu0 0
        %1230 = vmatprep.subr.bf16.mxu0 0
        %1231 = vmatpush1.bf16.xpose.msra.mxu0 0
        %1232 = vmatprep.subr.bf16.mxu0 0
        %1233 = vmatpush1.bf16.xpose.msra.mxu0 0
        %1234 = vmatprep.subr.bf16.mxu0 0
        %1235 = vmatpush1.bf16.xpose.msra.mxu0 0
        %1236 = vmatprep.mubr.bf16.mxu0 0
        %1237 = vmatmul.mubr.bf16.gmra.mrb[0].mxu0 %v1199
        %v1238 = vpop.f32.mrb[0].mxu0
        %v1239 = vadd.f32 0.0, %v1238
        %v1240 = vpop.f32.mrb[0].mxu0
        %v1241 = vpop.f32.mrb[0].mxu0
        %v1242 = vpop.f32.mrb[0].mxu0
        %1243 = vdwg.mxu0
        %v1244 = vsel %vm472, %v1239, -inf
        %1245 = vmax.xlane.f32.xlu0 %v1244
        %v1246 = vpop.xlane.xlu0 %1245
        %v1247 = vsub.f32 %v1239, %v1246
        %v1248 = vmul.f32 %v1247, 1.442695
        %v1249 = vpow.pop %v1248
        %v1250 = vsel %vm472, %v1249, 0.0
        %1251 = vadd.xlane.f32.xlu0 %v1250
        %v1252 = vpop.xlane.xlu0 %1251
        %v1253 = vpack.c.bf16 %v1249, %v1249
        %1254 = vrot.lane.b32.xlu0 %v421, 36
        %v1255 = vpop.permute.xlu0 %1254
        %v1257 = vsel %vm472, %v1253, 0
        %v1260 = vsel %vm488, %v1255, 0
        %1262 = vmatprep.subr.bf16.mxu0 0
        %1263 = vmatpush1.bf16.msra.mxu0 %v1260
        %1264 = vmatprep.subr.bf16.mxu0 0
        %1265 = vmatpush1.bf16.msra.mxu0 0
        %1266 = vmatprep.subr.bf16.mxu0 0
        %1267 = vmatpush1.bf16.msra.mxu0 0
        %1268 = vmatprep.subr.bf16.mxu0 0
        %1269 = vmatpush1.bf16.msra.mxu0 0
        %1270 = vmatprep.subr.bf16.mxu0 0
        %1271 = vmatpush1.bf16.msra.mxu0 0
        %1272 = vmatprep.subr.bf16.mxu0 0
        %1273 = vmatpush1.bf16.msra.mxu0 0
        %1274 = vmatprep.subr.bf16.mxu0 0
        %1275 = vmatpush1.bf16.msra.mxu0 0
        %1276 = vmatprep.subr.bf16.mxu0 0
        %1277 = vmatpush1.bf16.msra.mxu0 0
        %1278 = vmatprep.subr.bf16.mxu0 0
        %1279 = vmatpush1.bf16.msra.mxu0 0
        %1280 = vmatprep.subr.bf16.mxu0 0
        %1281 = vmatpush1.bf16.msra.mxu0 0
        %1282 = vmatprep.subr.bf16.mxu0 0
        %1283 = vmatpush1.bf16.msra.mxu0 0
        %1284 = vmatprep.subr.bf16.mxu0 0
        %1285 = vmatpush1.bf16.msra.mxu0 0
        %1286 = vmatprep.subr.bf16.mxu0 0
        %1287 = vmatpush1.bf16.msra.mxu0 0
        %1288 = vmatprep.subr.bf16.mxu0 0
        %1289 = vmatpush1.bf16.msra.mxu0 0
        %1290 = vmatprep.subr.bf16.mxu0 0
        %1291 = vmatpush1.bf16.msra.mxu0 0
        %1292 = vmatprep.subr.bf16.mxu0 0
        %1293 = vmatpush1.bf16.msra.mxu0 0
        %1294 = vmatprep.mubr.bf16.mxu0 0
        %1295 = vmatmul.mubr.bf16.gmra.mrb[0].mxu0 %v1257
        %v1296 = vpop.f32.mrb[0].mxu0
        %v1297 = vadd.f32 0.0, %v1296
        %v1298 = vpop.f32.mrb[0].mxu0
        %v1299 = vpop.f32.mrb[0].mxu0
        %v1300 = vpop.f32.mrb[0].mxu0
        %1301 = vdwg.mxu0
        %v1302 = vrcp.pop %v1252
        %v1303 = vmul.f32 %v1297, %v1302
        %1305 = vrot.lane.b32.xlu0 %v643, 4
        %v1306 = vpop.permute.xlu0 %1305
        %1309 = vrot.lane.b32.xlu0 %v753, 8
        %v1310 = vpop.permute.xlu0 %1309
        %1313 = vrot.lane.b32.xlu0 %v863, 12
        %v1314 = vpop.permute.xlu0 %1313
        %1317 = vrot.lane.b32.xlu0 %v973, 16
        %v1318 = vpop.permute.xlu0 %1317
        %1321 = vrot.lane.b32.xlu0 %v1083, 20
        %v1322 = vpop.permute.xlu0 %1321
        %1325 = vrot.lane.b32.xlu0 %v1193, 24
        %v1326 = vpop.permute.xlu0 %1325
        %1329 = vrot.lane.b32.xlu0 %v1303, 28
        %v1330 = vpop.permute.xlu0 %1329
        %v1332 = vsel %vm425, %v533, %v1306
        %v1333 = vsel %vm472, %v1332, %v1310
        %vm1334 = vcmask 97280
        %v1335 = vsel %vm1334, %v1333, %v1314
        %vm1336 = vcmask 130048
        %v1337 = vsel %vm1336, %v1335, %v1318
        %vm1338 = vcmask 162816
        %v1339 = vsel %vm1338, %v1337, %v1322
        %vm1340 = vcmask 195584
        %v1341 = vsel %vm1340, %v1339, %v1326
        %vm1342 = vcmask 228352
        %v1343 = vsel %vm1342, %v1341, %v1330
        %v1344 = vpack.c.bf16 %v1343, %v1343
        %v1345 = vld [vmem:[%s5] sm:$0xf]
        %v1346 = vld [vmem:[%s5 + $0x4] sm:$0xf]
        %v1347 = vld [vmem:[%s5 + $0x8] sm:$0xf]
        %v1348 = vld [vmem:[%s5 + $0xc] sm:$0xf]
        %v1353 = vunpack.c.l.b16 %v1345
        %v1354 = vunpack.c.l.b16 %v1346
        %v1355 = vunpack.c.l.b16 %v1347
        %v1356 = vunpack.c.l.b16 %v1348
        %v1357 = vpack.c.b16 %v1354, %v1353
        %v1358 = vpack.c.b16 %v1356, %v1355
        %v1362 = vsel %vm323, %v1344, 0
        %1364 = vmatprep.subr.bf16.mxu0 0
        %1365 = vmatpush1.bf16.msra.mxu0 %v1357
        %1366 = vmatprep.subr.bf16.mxu0 0
        %1367 = vmatpush1.bf16.msra.mxu0 %v1358
        %1368 = vmatprep.subr.bf16.mxu0 0
        %1369 = vmatpush1.bf16.msra.mxu0 0
        %1370 = vmatprep.subr.bf16.mxu0 0
        %1371 = vmatpush1.bf16.msra.mxu0 0
        %1372 = vmatprep.subr.bf16.mxu0 0
        %1373 = vmatpush1.bf16.msra.mxu0 0
        %1374 = vmatprep.subr.bf16.mxu0 0
        %1375 = vmatpush1.bf16.msra.mxu0 0
        %1376 = vmatprep.subr.bf16.mxu0 0
        %1377 = vmatpush1.bf16.msra.mxu0 0
        %1378 = vmatprep.subr.bf16.mxu0 0
        %1379 = vmatpush1.bf16.msra.mxu0 0
        %1380 = vmatprep.subr.bf16.mxu0 0
        %1381 = vmatpush1.bf16.msra.mxu0 0
        %1382 = vmatprep.subr.bf16.mxu0 0
        %1383 = vmatpush1.bf16.msra.mxu0 0
        %1384 = vmatprep.subr.bf16.mxu0 0
        %1385 = vmatpush1.bf16.msra.mxu0 0
        %1386 = vmatprep.subr.bf16.mxu0 0
        %1387 = vmatpush1.bf16.msra.mxu0 0
        %1388 = vmatprep.subr.bf16.mxu0 0
        %1389 = vmatpush1.bf16.msra.mxu0 0
        %1390 = vmatprep.subr.bf16.mxu0 0
        %1391 = vmatpush1.bf16.msra.mxu0 0
        %1392 = vmatprep.subr.bf16.mxu0 0
        %1393 = vmatpush1.bf16.msra.mxu0 0
        %1394 = vmatprep.subr.bf16.mxu0 0
        %1395 = vmatpush1.bf16.msra.mxu0 0
        %1396 = vmatprep.mubr.bf16.mxu0 0
        %1397 = vmatmul.mubr.bf16.gmra.mrb[0].mxu0 %v1362
        %v1398 = vpop.f32.mrb[0].mxu0
        %v1399 = vadd.f32 0.0, %v1398
        %v1400 = vpop.f32.mrb[0].mxu0
        %v1401 = vpop.f32.mrb[0].mxu0
        %v1402 = vpop.f32.mrb[0].mxu0
        %1403 = vdwg.mxu0
        %v1404 = vadd.f32 %v353, %v1399
        %v1405 = vld [vmem:[%s6] sm:$0x1]
        %v1407 = vlaneseq
        %v1408 = vshrl.u32 %v1407, 7
        %v1409 = vsub.s32 0, %v1408
        %v1410 = vrot.slane %v1405, %v1409
        %v1412 = vadd.f32 %v1404, %v1410
        %1413 = vst.msk [vmem:[%s320] sm:$0xff] %vm323, %v1412
        %s1414 = sand.u32 %s185, 1
        %s1415 = scalar_lea.sflag [#allocation4], %s1414
        %s1416 = sand.u32 %s185, 1
        %s1417 = smul.addr %s1416, 8
        %s1418 = scalar_lea.vmem [#allocation8], %s1417
        // Predicated region
        $region61: #{tpu_custom_call.1} parent=47 // pred_check
          %p1419 = pneg %p195
        $region62: #{tpu_custom_call.1} parent=47 // pred_check_branch
          %1421 = sbr.rel (%p1419) target = $region64
        $region63: #{tpu_custom_call.1} parent=47 // pred_region
          %s1423 = ssub.s32 128, 128
          %1424 = vsyncadd %s1415, %s1423
          %s1425 = smul.addr %s25, 128
          %s1426 = scalar_lea.hbm %s7, %s1425
          %s1428 = sshll.u32 %s1418, 4
          %s1429 = int_to_ptr.vmem [resolvable:$true] %s1428
          %1431 = dma.vmem_to_hbm [thread:$0]  %s1429, 128, %s1426, %s1415
        $region64: #{tpu_custom_call.1} parent=47 // pred_fallthru
          _
      $region48: #{tpu_custom_call.1} parent=5 // pred_fallthru
        _
      %p1432 = scmp.le.s32.totalorder 2, %s20
      // Predicated region
      $region65: #{tpu_custom_call.1} parent=5 // pred_check
        %p1433 = pneg %p1432
      $region66: #{tpu_custom_call.1} parent=5 // pred_check_branch
        %1435 = sbr.rel (%p1433) target = $region68
      $region67: #{tpu_custom_call.1} parent=5 // pred_region
        %s1436 = ssub.s32 %s20, 2
        // Predicated region
        $region69: #{tpu_custom_call.1} parent=67 // pred_check
          %p1437 = pneg %p201
        $region70: #{tpu_custom_call.1} parent=67 // pred_check_branch
          %1439 = sbr.rel (%p1437) target = $region72
        $region71: #{tpu_custom_call.1} parent=67 // pred_region
          %s1440 = sand.u32 %s186, 1
          %s1441 = scalar_lea.sflag [#allocation4], %s1440
          %s1442 = sand.u32 %s186, 1
          %s1443 = smul.addr %s1442, 8
          %s1444 = scalar_lea.vmem [#allocation8], %s1443
          %1445 = dma.done %s1441, 128
        $region72: #{tpu_custom_call.1} parent=67 // pred_fallthru
          _
      $region68: #{tpu_custom_call.1} parent=5 // pred_fallthru
        _
    $region6: #{tpu_custom_call.1} parent=1 // loop_footer
      %s24 = sadd.s32 1, %s20
    $region7: #{tpu_custom_call.1} parent=1 // loop_footer_branch
      %19 = sbr.rel target = $region3
    $region8: #{tpu_custom_call.1} parent=1 // loop_exit
      _
    %1446 = vsyncpa [#allocation3], 1
    %s1447 = scalar_lea.sflag [#allocation3], 1
    %1448 = vsyncpa %s1447, 1
    %1449 = vsyncpa [#allocation6], 1
    %1450 = vsyncpa [#allocation4], 1
    %s1451 = scalar_lea.sflag [#allocation4], 1
    %1452 = vsyncpa %s1451, 1

// kernel: tpu_custom_call.1
$region0: #{tpu_custom_call.1}
  #allocation0 [shape = 'u32[]', space=smem, size = 0x4, offset = 0x4, fixed_abs, tag = 'smem constant byte address 0x4 - core index']
  #allocation1 [shape = 'u32[144,128]{1,0:T(1,128)}', space=vmem, size = 0x12000, scoped, tag = 'internal scratch']
  %s0 = inlined_call_operand.hbm [shape: f32[2,8,32], index: 0, kind: input, shape index: {}]
  %s1 = inlined_call_operand.vmem [shape: f32[1,32], index: 1, kind: input, shape index: {}]
  %s2 = inlined_call_operand.vmem [shape: f32[1,32], index: 2, kind: input, shape index: {}]
  %s3 = inlined_call_operand.hbm [shape: bf16[32,96], index: 3, kind: input, shape index: {}]
  %s4 = inlined_call_operand.hbm [shape: f32[1,96], index: 4, kind: input, shape index: {}]
  %s5 = inlined_call_operand.vmem [shape: bf16[32,32], index: 5, kind: input, shape index: {}]
  %s6 = inlined_call_operand.vmem [shape: f32[1,32], index: 6, kind: input, shape index: {}]
  %s7 = inlined_call_operand.hbm [shape: f32[2,8,32], index: 7, kind: output, shape index: {}]
  %s8 = sld [smem:[#allocation0]]
  $region73: #{tpu_custom_call.1} parent=0
    _
  %s10 = ssub.s32 1, %s8
  %s11 = scalar_select 0, %s10, %s8
  $region1: #{tpu_custom_call.1} parent=0
    #allocation2 [shape = 'u8[8192]{0}', space=vmem, size = 0x2000, scoped, tag = 'input window, operand 0']
    #allocation3 [shape = 's32[2]{0}', space=sflag, size = 0x8, scoped, tag = 'scoped memory for tpu_custom_call.1']
    #allocation4 [shape = 's32[2]{0}', space=sflag, size = 0x8, scoped, tag = 'scoped memory for tpu_custom_call.1']
    #allocation5 [shape = 'u8[8192]{0}', space=vmem, size = 0x2000, scoped, tag = 'input window, operand 3, single buffered']
    #allocation6 [shape = 's32[1]{0}', space=sflag, size = 0x4, scoped, tag = 'scoped memory for tpu_custom_call.1']
    #allocation7 [shape = 'u8[512]{0}', space=vmem, size = 0x400, scoped, tag = 'input window, operand 4, single buffered']
    #allocation8 [shape = 'u8[8192]{0}', space=vmem, size = 0x2000, scoped, tag = 'output window, operand 0']
    %12 = vsyncpa [#allocation3], 0
    %s13 = scalar_lea.sflag [#allocation3], 1
    %14 = vsyncpa %s13, 0
    %15 = vsyncpa [#allocation6], 0
    %16 = vsyncpa [#allocation4], 0
    %s17 = scalar_lea.sflag [#allocation4], 1
    %18 = vsyncpa %s17, 0
    loop: start=0, step=1, limit=4
    $region2: #{tpu_custom_call.1} parent=1 // loop_pre_header
      _
    $region3: #{tpu_custom_call.1} parent=1 // loop_header
      %s20 = sphi 0, %s24
      %p21 = scmp.ge.s32.totalorder %s20, 4
      %s30 = sphi 0, %s32
      %s33 = sphi 0, %s30
      %s34 = sphi 0, %s33
      %s50 = sphi 0, %s34
      %s54 = sphi 0, %s54
      %s56 = sphi 0, %s54
      %s57 = sphi 0, %s56
      %s71 = sphi 0, %s57
      %s75 = sphi 0, %s75
      %s77 = sphi 0, %s75
      %s78 = sphi 0, %s77
      %s92 = sphi 0, %s78
      %s96 = sphi 0, %s96
      %s98 = sphi 0, %s96
      %s99 = sphi 0, %s98
      %s113 = sphi 0, %s99
      %s117 = sphi 0, %s117
      %s119 = sphi 0, %s117
      %s120 = sphi 0, %s119
      %s134 = sphi 0, %s120
      %s138 = sphi 0, %s138
      %s140 = sphi 0, %s138
      %s141 = sphi 0, %s140
      %s155 = sphi 0, %s141
      %s159 = sphi 0, %s159
      %s161 = sphi 0, %s159
      %s162 = sphi 0, %s161
      %s176 = sphi 0, %s162
      %s182 = sphi 0, %s184
      %s185 = sphi 0, %s182
      %s186 = sphi 0, %s185
      %s202 = sphi 0, %s186
    $region4: #{tpu_custom_call.1} parent=1 // loop_header_branch
      %23 = sbr.rel (%p21) target = $region8
    $region5: #{tpu_custom_call.1} parent=1 // loop_body
      %s25 = ssub.s32 %s20, 1
      %s26 = ssub.s32 %s20, 2
      %s27 = sadd.s32 %s20, 1
      %s28 = ssub.s32 %s20, %s27
      %p29 = scmp.eq.s32.totalorder %s28, 0
      %s31 = sadd.s32 %s30, 1
      %s32 = scalar_select %p29, %s30, %s31
      %p35 = pneg %p29
      %p36 = scmp.eq.s32.totalorder %s20, 1
      %p37 = por %p35, %p36
      %p38 = scmp.ne.s32.totalorder %s30, %s33
      %p39 = scmp.eq.s32.totalorder %s20, 0
      %p40 = por %p38, %p39
      %p41 = scmp.ne.s32.totalorder %s30, %s33
      %p42 = scmp.eq.s32.totalorder %s25, 1
      %p43 = por %p41, %p42
      %p44 = scmp.ne.s32.totalorder %s33, %s34
      %p45 = scmp.eq.s32.totalorder %s25, 0
      %p46 = por %p44, %p45
      %p47 = scmp.ne.s32.totalorder %s33, %s34
      %p48 = scmp.eq.s32.totalorder %s26, 1
      %p49 = por %p47, %p48
      %p51 = scmp.ne.s32.totalorder %s34, %s50
      %p52 = scmp.eq.s32.totalorder %s26, 0
      %p53 = por %p51, %p52
      %s55 = sadd.s32 %s54, 1
      %p58 = scmp.eq.s32.totalorder %s20, 1
      %p59 = scmp.ne.s32.totalorder %s54, %s56
      %p60 = scmp.eq.s32.totalorder %s20, 0
      %p61 = por %p59, %p60
      %p62 = scmp.ne.s32.totalorder %s54, %s56
      %p63 = scmp.eq.s32.totalorder %s25, 1
      %p64 = por %p62, %p63
      %p65 = scmp.ne.s32.totalorder %s56, %s57
      %p66 = scmp.eq.s32.totalorder %s25, 0
      %p67 = por %p65, %p66
      %p68 = scmp.ne.s32.totalorder %s56, %s57
      %p69 = scmp.eq.s32.totalorder %s26, 1
      %p70 = por %p68, %p69
      %p72 = scmp.ne.s32.totalorder %s57, %s71
      %p73 = scmp.eq.s32.totalorder %s26, 0
      %p74 = por %p72, %p73
      %s76 = sadd.s32 %s75, 1
      %p79 = scmp.eq.s32.totalorder %s20, 1
      %p80 = scmp.ne.s32.totalorder %s75, %s77
      %p81 = scmp.eq.s32.totalorder %s20, 0
      %p82 = por %p80, %p81
      %p83 = scmp.ne.s32.totalorder %s75, %s77
      %p84 = scmp.eq.s32.totalorder %s25, 1
      %p85 = por %p83, %p84
      %p86 = scmp.ne.s32.totalorder %s77, %s78
      %p87 = scmp.eq.s32.totalorder %s25, 0
      %p88 = por %p86, %p87
      %p89 = scmp.ne.s32.totalorder %s77, %s78
      %p90 = scmp.eq.s32.totalorder %s26, 1
      %p91 = por %p89, %p90
      %p93 = scmp.ne.s32.totalorder %s78, %s92
      %p94 = scmp.eq.s32.totalorder %s26, 0
      %p95 = por %p93, %p94
      %s97 = sadd.s32 %s96, 1
      %p100 = scmp.eq.s32.totalorder %s20, 1
      %p101 = scmp.ne.s32.totalorder %s96, %s98
      %p102 = scmp.eq.s32.totalorder %s20, 0
      %p103 = por %p101, %p102
      %p104 = scmp.ne.s32.totalorder %s96, %s98
      %p105 = scmp.eq.s32.totalorder %s25, 1
      %p106 = por %p104, %p105
      %p107 = scmp.ne.s32.totalorder %s98, %s99
      %p108 = scmp.eq.s32.totalorder %s25, 0
      %p109 = por %p107, %p108
      %p110 = scmp.ne.s32.totalorder %s98, %s99
      %p111 = scmp.eq.s32.totalorder %s26, 1
      %p112 = por %p110, %p111
      %p114 = scmp.ne.s32.totalorder %s99, %s113
      %p115 = scmp.eq.s32.totalorder %s26, 0
      %p116 = por %p114, %p115
      %s118 = sadd.s32 %s117, 1
      %p121 = scmp.eq.s32.totalorder %s20, 1
      %p122 = scmp.ne.s32.totalorder %s117, %s119
      %p123 = scmp.eq.s32.totalorder %s20, 0
      %p124 = por %p122, %p123
      %p125 = scmp.ne.s32.totalorder %s117, %s119
      %p126 = scmp.eq.s32.totalorder %s25, 1
      %p127 = por %p125, %p126
      %p128 = scmp.ne.s32.totalorder %s119, %s120
      %p129 = scmp.eq.s32.totalorder %s25, 0
      %p130 = por %p128, %p129
      %p131 = scmp.ne.s32.totalorder %s119, %s120
      %p132 = scmp.eq.s32.totalorder %s26, 1
      %p133 = por %p131, %p132
      %p135 = scmp.ne.s32.totalorder %s120, %s134
      %p136 = scmp.eq.s32.totalorder %s26, 0
      %p137 = por %p135, %p136
      %s139 = sadd.s32 %s138, 1
      %p142 = scmp.eq.s32.totalorder %s20, 1
      %p143 = scmp.ne.s32.totalorder %s138, %s140
      %p144 = scmp.eq.s32.totalorder %s20, 0
      %p145 = por %p143, %p144
      %p146 = scmp.ne.s32.totalorder %s138, %s140
      %p147 = scmp.eq.s32.totalorder %s25, 1
      %p148 = por %p146, %p147
      %p149 = scmp.ne.s32.totalorder %s140, %s141
      %p150 = scmp.eq.s32.totalorder %s25, 0
      %p151 = por %p149, %p150
      %p152 = scmp.ne.s32.totalorder %s140, %s141
      %p153 = scmp.eq.s32.totalorder %s26, 1
      %p154 = por %p152, %p153
      %p156 = scmp.ne.s32.totalorder %s141, %s155
      %p157 = scmp.eq.s32.totalorder %s26, 0
      %p158 = por %p156, %p157
      %s160 = sadd.s32 %s159, 1
      %p163 = scmp.eq.s32.totalorder %s20, 1
      %p164 = scmp.ne.s32.totalorder %s159, %s161
      %p165 = scmp.eq.s32.totalorder %s20, 0
      %p166 = por %p164, %p165
      %p167 = scmp.ne.s32.totalorder %s159, %s161
      %p168 = scmp.eq.s32.totalorder %s25, 1
      %p169 = por %p167, %p168
      %p170 = scmp.ne.s32.totalorder %s161, %s162
      %p171 = scmp.eq.s32.totalorder %s25, 0
      %p172 = por %p170, %p171
      %p173 = scmp.ne.s32.totalorder %s161, %s162
      %p174 = scmp.eq.s32.totalorder %s26, 1
      %p175 = por %p173, %p174
      %p177 = scmp.ne.s32.totalorder %s162, %s176
      %p178 = scmp.eq.s32.totalorder %s26, 0
      %p179 = por %p177, %p178
      %s180 = ssub.s32 %s20, %s27
      %p181 = scmp.eq.s32.totalorder %s180, 0
      %s183 = sadd.s32 %s182, 1
      %s184 = scalar_select %p181, %s182, %s183
      %p187 = pneg %p181
      %p188 = scmp.eq.s32.totalorder %s20, 1
      %p189 = por %p187, %p188
      %p190 = scmp.ne.s32.totalorder %s182, %s185
      %p191 = scmp.eq.s32.totalorder %s20, 0
      %p192 = por %p190, %p191
      %p193 = scmp.ne.s32.totalorder %s182, %s185
      %p194 = scmp.eq.s32.totalorder %s25, 1
      %p195 = por %p193, %p194
      %p196 = scmp.ne.s32.totalorder %s185, %s186
      %p197 = scmp.eq.s32.totalorder %s25, 0
      %p198 = por %p196, %p197
      %p199 = scmp.ne.s32.totalorder %s185, %s186
      %p200 = scmp.eq.s32.totalorder %s26, 1
      %p201 = por %p199, %p200
      %p203 = scmp.ne.s32.totalorder %s186, %s202
      %p204 = scmp.eq.s32.totalorder %s26, 0
      %p205 = por %p203, %p204
      %p206 = scmp.le.s32.totalorder 1, %s20
      %p207 = scmp.lt.s32.totalorder %s20, 3
      %p208 = pnand %p206, %p207
      %p209 = pneg %p208
      // Predicated region
      $region9: #{tpu_custom_call.1} parent=5 // pred_check
        _
      $region10: #{tpu_custom_call.1} parent=5 // pred_check_branch
        %211 = sbr.rel (%p208) target = $region12
      $region11: #{tpu_custom_call.1} parent=5 // pred_region
        %s212 = ssub.s32 %s20, 1
        // Predicated region
        $region13: #{tpu_custom_call.1} parent=11 // pred_check
          %p213 = pneg %p67
        $region14: #{tpu_custom_call.1} parent=11 // pred_check_branch
          %215 = sbr.rel (%p213) target = $region16
        $region15: #{tpu_custom_call.1} parent=11 // pred_region
          _
        $region16: #{tpu_custom_call.1} parent=11 // pred_fallthru
          _
        // Predicated region
        $region17: #{tpu_custom_call.1} parent=11 // pred_check
          %p216 = pneg %p88
        $region18: #{tpu_custom_call.1} parent=11 // pred_check_branch
          %218 = sbr.rel (%p216) target = $region20
        $region19: #{tpu_custom_call.1} parent=11 // pred_region
          _
        $region20: #{tpu_custom_call.1} parent=11 // pred_fallthru
          _
        // Predicated region
        $region21: #{tpu_custom_call.1} parent=11 // pred_check
          %p219 = pneg %p109
        $region22: #{tpu_custom_call.1} parent=11 // pred_check_branch
          %221 = sbr.rel (%p219) target = $region24
        $region23: #{tpu_custom_call.1} parent=11 // pred_region
          %s223 = ssub.s32 256, 256
          %224 = vsyncadd [#allocation6], %s223
          %s225 = sshll.u32 [#allocation5], 4
          %s226 = int_to_ptr.vmem [resolvable:$true] %s225
          %231 = dma.hbm_to_vmem [thread:$0]  %s3, 256, %s226, [#allocation6], 64, 64, 4
        $region24: #{tpu_custom_call.1} parent=11 // pred_fallthru
          _
        // Predicated region
        $region25: #{tpu_custom_call.1} parent=11 // pred_check
          %p232 = pneg %p130
        $region26: #{tpu_custom_call.1} parent=11 // pred_check_branch
          %234 = sbr.rel (%p232) target = $region28
        $region27: #{tpu_custom_call.1} parent=11 // pred_region
          %s236 = ssub.s32 16, 16
          %237 = vsyncadd [#allocation6], %s236
          %s239 = sshll.u32 [#allocation7], 4
          %s240 = int_to_ptr.vmem [resolvable:$true] %s239
          %242 = dma.hbm_to_vmem [thread:$0]  %s4, 16, %s240, [#allocation6]
        $region28: #{tpu_custom_call.1} parent=11 // pred_fallthru
          _
        // Predicated region
        $region29: #{tpu_custom_call.1} parent=11 // pred_check
          %p243 = pneg %p151
        $region30: #{tpu_custom_call.1} parent=11 // pred_check_branch
          %245 = sbr.rel (%p243) target = $region32
        $region31: #{tpu_custom_call.1} parent=11 // pred_region
          _
        $region32: #{tpu_custom_call.1} parent=11 // pred_fallthru
          _
        // Predicated region
        $region33: #{tpu_custom_call.1} parent=11 // pred_check
          %p246 = pneg %p172
        $region34: #{tpu_custom_call.1} parent=11 // pred_check_branch
          %248 = sbr.rel (%p246) target = $region36
        $region35: #{tpu_custom_call.1} parent=11 // pred_region
          _
        $region36: #{tpu_custom_call.1} parent=11 // pred_fallthru
          _
      $region12: #{tpu_custom_call.1} parent=5 // pred_fallthru
        _
      %p249 = scmp.lt.s32.totalorder %s20, 2
      // Predicated region
      $region37: #{tpu_custom_call.1} parent=5 // pred_check
        %p250 = pneg %p249
      $region38: #{tpu_custom_call.1} parent=5 // pred_check_branch
        %252 = sbr.rel (%p250) target = $region40
      $region39: #{tpu_custom_call.1} parent=5 // pred_region
        // Predicated region
        $region41: #{tpu_custom_call.1} parent=39 // pred_check
          %p253 = pneg %p40
        $region42: #{tpu_custom_call.1} parent=39 // pred_check_branch
          %255 = sbr.rel (%p253) target = $region44
        $region43: #{tpu_custom_call.1} parent=39 // pred_region
          %s256 = sand.u32 %s30, 1
          %s257 = scalar_lea.sflag [#allocation3], %s256
          %s258 = sand.u32 %s30, 1
          %s259 = smul.addr %s258, 8
          %s260 = scalar_lea.vmem [#allocation2], %s259
          %s262 = ssub.s32 128, 128
          %263 = vsyncadd %s257, %s262
          %s264 = smul.addr %s20, 128
          %s265 = scalar_lea.hbm %s0, %s264
          %s267 = sshll.u32 %s260, 4
          %s268 = int_to_ptr.vmem [resolvable:$true] %s267
          %270 = dma.hbm_to_vmem [thread:$0]  %s265, 128, %s268, %s257
        $region44: #{tpu_custom_call.1} parent=39 // pred_fallthru
          _
      $region40: #{tpu_custom_call.1} parent=5 // pred_fallthru
        _
      %p271 = scmp.le.s32.totalorder 1, %s20
      %p272 = scmp.lt.s32.totalorder %s20, 3
      %p273 = pnand %p271, %p272
      %p274 = pneg %p273
      // Predicated region
      $region45: #{tpu_custom_call.1} parent=5 // pred_check
        _
      $region46: #{tpu_custom_call.1} parent=5 // pred_check_branch
        %276 = sbr.rel (%p273) target = $region48
      $region47: #{tpu_custom_call.1} parent=5 // pred_region
        %s277 = ssub.s32 %s20, 1
        %s278 = sand.u32 %s33, 1
        %s279 = scalar_lea.sflag [#allocation3], %s278
        %s280 = sand.u32 %s33, 1
        %s281 = smul.addr %s280, 8
        %s282 = scalar_lea.vmem [#allocation2], %s281
        // Predicated region
        $region49: #{tpu_custom_call.1} parent=47 // pred_check
          %p283 = pneg %p46
        $region50: #{tpu_custom_call.1} parent=47 // pred_check_branch
          %285 = sbr.rel (%p283) target = $region52
        $region51: #{tpu_custom_call.1} parent=47 // pred_region
          %286 = dma.done %s279, 128
        $region52: #{tpu_custom_call.1} parent=47 // pred_fallthru
          _
        // Predicated region
        $region53: #{tpu_custom_call.1} parent=47 // pred_check
          %p287 = pneg %p109
        $region54: #{tpu_custom_call.1} parent=47 // pred_check_branch
          %289 = sbr.rel (%p287) target = $region56
        $region55: #{tpu_custom_call.1} parent=47 // pred_region
          %290 = dma.done [#allocation6], 256
        $region56: #{tpu_custom_call.1} parent=47 // pred_fallthru
          _
        // Predicated region
        $region57: #{tpu_custom_call.1} parent=47 // pred_check
          %p291 = pneg %p130
        $region58: #{tpu_custom_call.1} parent=47 // pred_check_branch
          %293 = sbr.rel (%p291) target = $region60
        $region59: #{tpu_custom_call.1} parent=47 // pred_region
          %294 = dma.done [#allocation6], 16
        $region60: #{tpu_custom_call.1} parent=47 // pred_fallthru
          _
        %s295 = sand.u32 %s33, 1
        %s296 = scalar_lea.sflag [#allocation3], %s295
        %s297 = sand.u32 %s33, 1
        %s298 = smul.addr %s297, 8
        %s299 = scalar_lea.vmem [#allocation2], %s298
        %p300 = pneg %p46
        %p301 = pneg %p43
        %p302 = pneg %p67
        %p303 = pneg %p64
        %p304 = pneg %p88
        %p305 = pneg %p85
        %p306 = pneg %p109
        %p307 = pneg %p106
        %p308 = pneg %p130
        %p309 = pneg %p127
        %p310 = pneg %p151
        %p311 = pneg %p148
        %p312 = pneg %p172
        %p313 = pneg %p169
        %p314 = pneg %p198
        %p315 = pneg %p195
        %s316 = sand.u32 %s185, 1
        %s317 = scalar_lea.sflag [#allocation4], %s316
        %s318 = sand.u32 %s185, 1
        %s319 = smul.addr %s318, 8
        %s320 = scalar_lea.vmem [#allocation8], %s319
        %v322 = vld [vmem:[%s282] sm:$0xff]
        %vm323 = vcmask 261120
        %v324 = vsel %vm323, %v322, 0.0
        %325 = vadd.xlane.f32.xlu0 %v324
        %v326 = vpop.xlane.xlu0 %325
        %v327 = vrcp.pop 32.0
        %v328 = vmul.f32 %v326, %v327
        %v329 = vsub.f32 %v322, %v328
        %v330 = vmul.f32 %v329, %v329
        %v331 = vsel %vm323, %v330, 0.0
        %332 = vadd.xlane.f32.xlu0 %v331
        %v333 = vpop.xlane.xlu0 %332
        %v334 = vmul.f32 %v333, %v327
        %v335 = vadd.f32 %v334, 1e-05
        %v336 = vrsqrt.pop %v335
        %v337 = vmul.f32 %v329, %v336
        %v338 = vld [vmem:[%s1] sm:$0x1]
        %v340 = vlaneseq
        %v341 = vshrl.u32 %v340, 7
        %v342 = vsub.s32 0, %v341
        %v343 = vrot.slane %v338, %v342
        %v345 = vmul.f32 %v337, %v343
        %v346 = vld [vmem:[%s2] sm:$0x1]
        %v348 = vlaneseq
        %v349 = vshrl.u32 %v348, 7
        %v350 = vsub.s32 0, %v349
        %v351 = vrot.slane %v346, %v350
        %v353 = vadd.f32 %v345, %v351
        %v354 = vpack.c.bf16 %v353, %v353
        %v355 = vld [vmem:[#allocation5] sm:$0xf]
        %v356 = vld [vmem:[#allocation5 + $0x4] sm:$0xf]
        %v357 = vld [vmem:[#allocation5 + $0x8] sm:$0xf]
        %v358 = vld [vmem:[#allocation5 + $0xc] sm:$0xf]
        %v359 = vld [vmem:[#allocation7] sm:$0x1]
        %v361 = vlaneseq
        %v362 = vshrl.u32 %v361, 7
        %v363 = vsub.s32 0, %v362
        %v364 = vrot.slane %v359, %v363
        %v370 = vunpack.c.l.b16 %v355
        %v371 = vunpack.c.l.b16 %v356
        %v372 = vunpack.c.l.b16 %v357
        %v373 = vunpack.c.l.b16 %v358
        %v374 = vpack.c.b16 %v371, %v370
        %v375 = vpack.c.b16 %v373, %v372
        %v379 = vsel %vm323, %v354, 0
        %381 = vmatprep.subr.bf16.mxu0 0
        %382 = vmatpush1.bf16.msra.mxu0 %v374
        %383 = vmatprep.subr.bf16.mxu0 0
        %384 = vmatpush1.bf16.msra.mxu0 %v375
        %385 = vmatprep.subr.bf16.mxu0 0
        %386 = vmatpush1.bf16.msra.mxu0 0
        %387 = vmatprep.subr.bf16.mxu0 0
        %388 = vmatpush1.bf16.msra.mxu0 0
        %389 = vmatprep.subr.bf16.mxu0 0
        %390 = vmatpush1.bf16.msra.mxu0 0
        %391 = vmatprep.subr.bf16.mxu0 0
        %392 = vmatpush1.bf16.msra.mxu0 0
        %393 = vmatprep.subr.bf16.mxu0 0
        %394 = vmatpush1.bf16.msra.mxu0 0
        %395 = vmatprep.subr.bf16.mxu0 0
        %396 = vmatpush1.bf16.msra.mxu0 0
        %397 = vmatprep.subr.bf16.mxu0 0
        %398 = vmatpush1.bf16.msra.mxu0 0
        %399 = vmatprep.subr.bf16.mxu0 0
        %400 = vmatpush1.bf16.msra.mxu0 0
        %401 = vmatprep.subr.bf16.mxu0 0
        %402 = vmatpush1.bf16.msra.mxu0 0
        %403 = vmatprep.subr.bf16.mxu0 0
        %404 = vmatpush1.bf16.msra.mxu0 0
        %405 = vmatprep.subr.bf16.mxu0 0
        %406 = vmatpush1.bf16.msra.mxu0 0
        %407 = vmatprep.subr.bf16.mxu0 0
        %408 = vmatpush1.bf16.msra.mxu0 0
        %409 = vmatprep.subr.bf16.mxu0 0
        %410 = vmatpush1.bf16.msra.mxu0 0
        %411 = vmatprep.subr.bf16.mxu0 0
        %412 = vmatpush1.bf16.msra.mxu0 0
        %413 = vmatprep.mubr.bf16.mxu0 0
        %414 = vmatmul.mubr.bf16.gmra.mrb[0].mxu0 %v379
        %v415 = vpop.f32.mrb[0].mxu0
        %v416 = vadd.f32 %v364, %v415
        %v417 = vpop.f32.mrb[0].mxu0
        %v418 = vpop.f32.mrb[0].mxu0
        %v419 = vpop.f32.mrb[0].mxu0
        %420 = vdwg.mxu0
        %v421 = vpack.c.bf16 %v416, %v416
        %423 = vrot.lane.b32.xlu0 %v421, 96
        %v424 = vpop.permute.xlu0 %423
        %vm425 = vcmask 31744
        %v427 = vsel %vm425, %v421, 0
        %v430 = vsel %vm425, %v424, 0
        %432 = vmatprep.subr.bf16.mxu0 0
        %433 = vmatpush1.bf16.xpose.msra.mxu0 %v430
        %434 = vmatprep.subr.bf16.mxu0 0
        %435 = vmatpush1.bf16.xpose.msra.mxu0 0
        %436 = vmatprep.subr.bf16.mxu0 0
        %437 = vmatpush1.bf16.xpose.msra.mxu0 0
        %438 = vmatprep.subr.bf16.mxu0 0
        %439 = vmatpush1.bf16.xpose.msra.mxu0 0
        %440 = vmatprep.subr.bf16.mxu0 0
        %441 = vmatpush1.bf16.xpose.msra.mxu0 0
        %442 = vmatprep.subr.bf16.mxu0 0
        %443 = vmatpush1.bf16.xpose.msra.mxu0 0
        %444 = vmatprep.subr.bf16.mxu0 0
        %445 = vmatpush1.bf16.xpose.msra.mxu0 0
        %446 = vmatprep.subr.bf16.mxu0 0
        %447 = vmatpush1.bf16.xpose.msra.mxu0 0
        %448 = vmatprep.subr.bf16.mxu0 0
        %449 = vmatpush1.bf16.xpose.msra.mxu0 0
        %450 = vmatprep.subr.bf16.mxu0 0
        %451 = vmatpush1.bf16.xpose.msra.mxu0 0
        %452 = vmatprep.subr.bf16.mxu0 0
        %453 = vmatpush1.bf16.xpose.msra.mxu0 0
        %454 = vmatprep.subr.bf16.mxu0 0
        %455 = vmatpush1.bf16.xpose.msra.mxu0 0
        %456 = vmatprep.subr.bf16.mxu0 0
        %457 = vmatpush1.bf16.xpose.msra.mxu0 0
        %458 = vmatprep.subr.bf16.mxu0 0
        %459 = vmatpush1.bf16.xpose.msra.mxu0 0
        %460 = vmatprep.subr.bf16.mxu0 0
        %461 = vmatpush1.bf16.xpose.msra.mxu0 0
        %462 = vmatprep.subr.bf16.mxu0 0
        %463 = vmatpush1.bf16.xpose.msra.mxu0 0
        %464 = vmatprep.mubr.bf16.mxu0 0
        %465 = vmatmul.mubr.bf16.gmra.mrb[0].mxu0 %v427
        %v466 = vpop.f32.mrb[0].mxu0
        %v467 = vadd.f32 0.0, %v466
        %v468 = vpop.f32.mrb[0].mxu0
        %v469 = vpop.f32.mrb[0].mxu0
        %v470 = vpop.f32.mrb[0].mxu0
        %471 = vdwg.mxu0
        %vm472 = vcmask 64512
        %v473 = vsel %vm472, %v467, -inf
        %474 = vmax.xlane.f32.xlu0 %v473
        %v475 = vpop.xlane.xlu0 %474
        %v476 = vsub.f32 %v467, %v475
        %v477 = vmul.f32 %v476, 1.442695
        %v478 = vpow.pop %v477
        %v479 = vsel %vm472, %v478, 0.0
        %480 = vadd.xlane.f32.xlu0 %v479
        %v481 = vpop.xlane.xlu0 %480
        %v482 = vpack.c.bf16 %v478, %v478
        %483 = vrot.lane.b32.xlu0 %v421, 64
        %v484 = vpop.permute.xlu0 %483
        %v486 = vsel %vm472, %v482, 0
        %vm488 = vcmask 1043456
        %v490 = vsel %vm488, %v484, 0
        %492 = vmatprep.subr.bf16.mxu0 0
        %493 = vmatpush1.bf16.msra.mxu0 %v490
        %494 = vmatprep.subr.bf16.mxu0 0
        %495 = vmatpush1.bf16.msra.mxu0 0
        %496 = vmatprep.subr.bf16.mxu0 0
        %497 = vmatpush1.bf16.msra.mxu0 0
        %498 = vmatprep.subr.bf16.mxu0 0
        %499 = vmatpush1.bf16.msra.mxu0 0
        %500 = vmatprep.subr.bf16.mxu0 0
        %501 = vmatpush1.bf16.msra.mxu0 0
        %502 = vmatprep.subr.bf16.mxu0 0
        %503 = vmatpush1.bf16.msra.mxu0 0
        %504 = vmatprep.subr.bf16.mxu0 0
        %505 = vmatpush1.bf16.msra.mxu0 0
        %506 = vmatprep.subr.bf16.mxu0 0
        %507 = vmatpush1.bf16.msra.mxu0 0
        %508 = vmatprep.subr.bf16.mxu0 0
        %509 = vmatpush1.bf16.msra.mxu0 0
        %510 = vmatprep.subr.bf16.mxu0 0
        %511 = vmatpush1.bf16.msra.mxu0 0
        %512 = vmatprep.subr.bf16.mxu0 0
        %513 = vmatpush1.bf16.msra.mxu0 0
        %514 = vmatprep.subr.bf16.mxu0 0
        %515 = vmatpush1.bf16.msra.mxu0 0
        %516 = vmatprep.subr.bf16.mxu0 0
        %517 = vmatpush1.bf16.msra.mxu0 0
        %518 = vmatprep.subr.bf16.mxu0 0
        %519 = vmatpush1.bf16.msra.mxu0 0
        %520 = vmatprep.subr.bf16.mxu0 0
        %521 = vmatpush1.bf16.msra.mxu0 0
        %522 = vmatprep.subr.bf16.mxu0 0
        %523 = vmatpush1.bf16.msra.mxu0 0
        %524 = vmatprep.mubr.bf16.mxu0 0
        %525 = vmatmul.mubr.bf16.gmra.mrb[0].mxu0 %v486
        %v526 = vpop.f32.mrb[0].mxu0
        %v527 = vadd.f32 0.0, %v526
        %v528 = vpop.f32.mrb[0].mxu0
        %v529 = vpop.f32.mrb[0].mxu0
        %v530 = vpop.f32.mrb[0].mxu0
        %531 = vdwg.mxu0
        %v532 = vrcp.pop %v481
        %v533 = vmul.f32 %v527, %v532
        %534 = vrot.lane.b32.xlu0 %v421, 124
        %v535 = vpop.permute.xlu0 %534
        %536 = vrot.lane.b32.xlu0 %v421, 92
        %v537 = vpop.permute.xlu0 %536
        %v539 = vsel %vm425, %v535, 0
        %v542 = vsel %vm425, %v537, 0
        %544 = vmatprep.subr.bf16.mxu0 0
        %545 = vmatpush1.bf16.xpose.msra.mxu0 %v542
        %546 = vmatprep.subr.bf16.mxu0 0
        %547 = vmatpush1.bf16.xpose.msra.mxu0 0
        %548 = vmatprep.subr.bf16.mxu0 0
        %549 = vmatpush1.bf16.xpose.msra.mxu0 0
        %550 = vmatprep.subr.bf16.mxu0 0
        %551 = vmatpush1.bf16.xpose.msra.mxu0 0
        %552 = vmatprep.subr.bf16.mxu0 0
        %553 = vmatpush1.bf16.xpose.msra.mxu0 0
        %554 = vmatprep.subr.bf16.mxu0 0
        %555 = vmatpush1.bf16.xpose.msra.mxu0 0
        %556 = vmatprep.subr.bf16.mxu0 0
        %557 = vmatpush1.bf16.xpose.msra.mxu0 0
        %558 = vmatprep.subr.bf16.mxu0 0
        %559 = vmatpush1.bf16.xpose.msra.mxu0 0
        %560 = vmatprep.subr.bf16.mxu0 0
        %561 = vmatpush1.bf16.xpose.msra.mxu0 0
        %562 = vmatprep.subr.bf16.mxu0 0
        %563 = vmatpush1.bf16.xpose.msra.mxu0 0
        %564 = vmatprep.subr.bf16.mxu0 0
        %565 = vmatpush1.bf16.xpose.msra.mxu0 0
        %566 = vmatprep.subr.bf16.mxu0 0
        %567 = vmatpush1.bf16.xpose.msra.mxu0 0
        %568 = vmatprep.subr.bf16.mxu0 0
        %569 = vmatpush1.bf16.xpose.msra.mxu0 0
        %570 = vmatprep.subr.bf16.mxu0 0
        %571 = vmatpush1.bf16.xpose.msra.mxu0 0
        %572 = vmatprep.subr.bf16.mxu0 0
        %573 = vmatpush1.bf16.xpose.msra.mxu0 0
        %574 = vmatprep.subr.bf16.mxu0 0
        %575 = vmatpush1.bf16.xpose.msra.mxu0 0
        %576 = vmatprep.mubr.bf16.mxu0 0
        %577 = vmatmul.mubr.bf16.gmra.mrb[0].mxu0 %v539
        %v578 = vpop.f32.mrb[0].mxu0
        %v579 = vadd.f32 0.0, %v578
        %v580 = vpop.f32.mrb[0].mxu0
        %v581 = vpop.f32.mrb[0].mxu0
        %v582 = vpop.f32.mrb[0].mxu0
        %583 = vdwg.mxu0
        %v584 = vsel %vm472, %v579, -inf
        %585 = vmax.xlane.f32.xlu0 %v584
        %v586 = vpop.xlane.xlu0 %585
        %v587 = vsub.f32 %v579, %v586
        %v588 = vmul.f32 %v587, 1.442695
        %v589 = vpow.pop %v588
        %v590 = vsel %vm472, %v589, 0.0
        %591 = vadd.xlane.f32.xlu0 %v590
        %v592 = vpop.xlane.xlu0 %591
        %v593 = vpack.c.bf16 %v589, %v589
        %594 = vrot.lane.b32.xlu0 %v421, 60
        %v595 = vpop.permute.xlu0 %594
        %v597 = vsel %vm472, %v593, 0
        %v600 = vsel %vm488, %v595, 0
        %602 = vmatprep.subr.bf16.mxu0 0
        %603 = vmatpush1.bf16.msra.mxu0 %v600
        %604 = vmatprep.subr.bf16.mxu0 0
        %605 = vmatpush1.bf16.msra.mxu0 0
        %606 = vmatprep.subr.bf16.mxu0 0
        %607 = vmatpush1.bf16.msra.mxu0 0
        %608 = vmatprep.subr.bf16.mxu0 0
        %609 = vmatpush1.bf16.msra.mxu0 0
        %610 = vmatprep.subr.bf16.mxu0 0
        %611 = vmatpush1.bf16.msra.mxu0 0
        %612 = vmatprep.subr.bf16.mxu0 0
        %613 = vmatpush1.bf16.msra.mxu0 0
        %614 = vmatprep.subr.bf16.mxu0 0
        %615 = vmatpush1.bf16.msra.mxu0 0
        %616 = vmatprep.subr.bf16.mxu0 0
        %617 = vmatpush1.bf16.msra.mxu0 0
        %618 = vmatprep.subr.bf16.mxu0 0
        %619 = vmatpush1.bf16.msra.mxu0 0
        %620 = vmatprep.subr.bf16.mxu0 0
        %621 = vmatpush1.bf16.msra.mxu0 0
        %622 = vmatprep.subr.bf16.mxu0 0
        %623 = vmatpush1.bf16.msra.mxu0 0
        %624 = vmatprep.subr.bf16.mxu0 0
        %625 = vmatpush1.bf16.msra.mxu0 0
        %626 = vmatprep.subr.bf16.mxu0 0
        %627 = vmatpush1.bf16.msra.mxu0 0
        %628 = vmatprep.subr.bf16.mxu0 0
        %629 = vmatpush1.bf16.msra.mxu0 0
        %630 = vmatprep.subr.bf16.mxu0 0
        %631 = vmatpush1.bf16.msra.mxu0 0
        %632 = vmatprep.subr.bf16.mxu0 0
        %633 = vmatpush1.bf16.msra.mxu0 0
        %634 = vmatprep.mubr.bf16.mxu0 0
        %635 = vmatmul.mubr.bf16.gmra.mrb[0].mxu0 %v597
        %v636 = vpop.f32.mrb[0].mxu0
        %v637 = vadd.f32 0.0, %v636
        %v638 = vpop.f32.mrb[0].mxu0
        %v639 = vpop.f32.mrb[0].mxu0
        %v640 = vpop.f32.mrb[0].mxu0
        %641 = vdwg.mxu0
        %v642 = vrcp.pop %v592
        %v643 = vmul.f32 %v637, %v642
        %644 = vrot.lane.b32.xlu0 %v421, 120
        %v645 = vpop.permute.xlu0 %644
        %646 = vrot.lane.b32.xlu0 %v421, 88
        %v647 = vpop.permute.xlu0 %646
        %v649 = vsel %vm425, %v645, 0
        %v652 = vsel %vm425, %v647, 0
        %654 = vmatprep.subr.bf16.mxu0 0
        %655 = vmatpush1.bf16.xpose.msra.mxu0 %v652
        %656 = vmatprep.subr.bf16.mxu0 0
        %657 = vmatpush1.bf16.xpose.msra.mxu0 0
        %658 = vmatprep.subr.bf16.mxu0 0
        %659 = vmatpush1.bf16.xpose.msra.mxu0 0
        %660 = vmatprep.subr.bf16.mxu0 0
        %661 = vmatpush1.bf16.xpose.msra.mxu0 0
        %662 = vmatprep.subr.bf16.mxu0 0
        %663 = vmatpush1.bf16.xpose.msra.mxu0 0
        %664 = vmatprep.subr.bf16.mxu0 0
        %665 = vmatpush1.bf16.xpose.msra.mxu0 0
        %666 = vmatprep.subr.bf16.mxu0 0
        %667 = vmatpush1.bf16.xpose.msra.mxu0 0
        %668 = vmatprep.subr.bf16.mxu0 0
        %669 = vmatpush1.bf16.xpose.msra.mxu0 0
        %670 = vmatprep.subr.bf16.mxu0 0
        %671 = vmatpush1.bf16.xpose.msra.mxu0 0
        %672 = vmatprep.subr.bf16.mxu0 0
        %673 = vmatpush1.bf16.xpose.msra.mxu0 0
        %674 = vmatprep.subr.bf16.mxu0 0
        %675 = vmatpush1.bf16.xpose.msra.mxu0 0
        %676 = vmatprep.subr.bf16.mxu0 0
        %677 = vmatpush1.bf16.xpose.msra.mxu0 0
        %678 = vmatprep.subr.bf16.mxu0 0
        %679 = vmatpush1.bf16.xpose.msra.mxu0 0
        %680 = vmatprep.subr.bf16.mxu0 0
        %681 = vmatpush1.bf16.xpose.msra.mxu0 0
        %682 = vmatprep.subr.bf16.mxu0 0
        %683 = vmatpush1.bf16.xpose.msra.mxu0 0
        %684 = vmatprep.subr.bf16.mxu0 0
        %685 = vmatpush1.bf16.xpose.msra.mxu0 0
        %686 = vmatprep.mubr.bf16.mxu0 0
        %687 = vmatmul.mubr.bf16.gmra.mrb[0].mxu0 %v649
        %v688 = vpop.f32.mrb[0].mxu0
        %v689 = vadd.f32 0.0, %v688
        %v690 = vpop.f32.mrb[0].mxu0
        %v691 = vpop.f32.mrb[0].mxu0
        %v692 = vpop.f32.mrb[0].mxu0
        %693 = vdwg.mxu0
        %v694 = vsel %vm472, %v689, -inf
        %695 = vmax.xlane.f32.xlu0 %v694
        %v696 = vpop.xlane.xlu0 %695
        %v697 = vsub.f32 %v689, %v696
        %v698 = vmul.f32 %v697, 1.442695
        %v699 = vpow.pop %v698
        %v700 = vsel %vm472, %v699, 0.0
        %701 = vadd.xlane.f32.xlu0 %v700
        %v702 = vpop.xlane.xlu0 %701
        %v703 = vpack.c.bf16 %v699, %v699
        %704 = vrot.lane.b32.xlu0 %v421, 56
        %v705 = vpop.permute.xlu0 %704
        %v707 = vsel %vm472, %v703, 0
        %v710 = vsel %vm488, %v705, 0
        %712 = vmatprep.subr.bf16.mxu0 0
        %713 = vmatpush1.bf16.msra.mxu0 %v710
        %714 = vmatprep.subr.bf16.mxu0 0
        %715 = vmatpush1.bf16.msra.mxu0 0
        %716 = vmatprep.subr.bf16.mxu0 0
        %717 = vmatpush1.bf16.msra.mxu0 0
        %718 = vmatprep.subr.bf16.mxu0 0
        %719 = vmatpush1.bf16.msra.mxu0 0
        %720 = vmatprep.subr.bf16.mxu0 0
        %721 = vmatpush1.bf16.msra.mxu0 0
        %722 = vmatprep.subr.bf16.mxu0 0
        %723 = vmatpush1.bf16.msra.mxu0 0
        %724 = vmatprep.subr.bf16.mxu0 0
        %725 = vmatpush1.bf16.msra.mxu0 0
        %726 = vmatprep.subr.bf16.mxu0 0
        %727 = vmatpush1.bf16.msra.mxu0 0
        %728 = vmatprep.subr.bf16.mxu0 0
        %729 = vmatpush1.bf16.msra.mxu0 0
        %730 = vmatprep.subr.bf16.mxu0 0
        %731 = vmatpush1.bf16.msra.mxu0 0
        %732 = vmatprep.subr.bf16.mxu0 0
        %733 = vmatpush1.bf16.msra.mxu0 0
        %734 = vmatprep.subr.bf16.mxu0 0
        %735 = vmatpush1.bf16.msra.mxu0 0
        %736 = vmatprep.subr.bf16.mxu0 0
        %737 = vmatpush1.bf16.msra.mxu0 0
        %738 = vmatprep.subr.bf16.mxu0 0
        %739 = vmatpush1.bf16.msra.mxu0 0
        %740 = vmatprep.subr.bf16.mxu0 0
        %741 = vmatpush1.bf16.msra.mxu0 0
        %742 = vmatprep.subr.bf16.mxu0 0
        %743 = vmatpush1.bf16.msra.mxu0 0
        %744 = vmatprep.mubr.bf16.mxu0 0
        %745 = vmatmul.mubr.bf16.gmra.mrb[0].mxu0 %v707
        %v746 = vpop.f32.mrb[0].mxu0
        %v747 = vadd.f32 0.0, %v746
        %v748 = vpop.f32.mrb[0].mxu0
        %v749 = vpop.f32.mrb[0].mxu0
        %v750 = vpop.f32.mrb[0].mxu0
        %751 = vdwg.mxu0
        %v752 = vrcp.pop %v702
        %v753 = vmul.f32 %v747, %v752
        %754 = vrot.lane.b32.xlu0 %v421, 116
        %v755 = vpop.permute.xlu0 %754
        %756 = vrot.lane.b32.xlu0 %v421, 84
        %v757 = vpop.permute.xlu0 %756
        %v759 = vsel %vm425, %v755, 0
        %v762 = vsel %vm425, %v757, 0
        %764 = vmatprep.subr.bf16.mxu0 0
        %765 = vmatpush1.bf16.xpose.msra.mxu0 %v762
        %766 = vmatprep.subr.bf16.mxu0 0
        %767 = vmatpush1.bf16.xpose.msra.mxu0 0
        %768 = vmatprep.subr.bf16.mxu0 0
        %769 = vmatpush1.bf16.xpose.msra.mxu0 0
        %770 = vmatprep.subr.bf16.mxu0 0
        %771 = vmatpush1.bf16.xpose.msra.mxu0 0
        %772 = vmatprep.subr.bf16.mxu0 0
        %773 = vmatpush1.bf16.xpose.msra.mxu0 0
        %774 = vmatprep.subr.bf16.mxu0 0
        %775 = vmatpush1.bf16.xpose.msra.mxu0 0
        %776 = vmatprep.subr.bf16.mxu0 0
        %777 = vmatpush1.bf16.xpose.msra.mxu0 0
        %778 = vmatprep.subr.bf16.mxu0 0
        %779 = vmatpush1.bf16.xpose.msra.mxu0 0
        %780 = vmatprep.subr.bf16.mxu0 0
        %781 = vmatpush1.bf16.xpose.msra.mxu0 0
        %782 = vmatprep.subr.bf16.mxu0 0
        %783 = vmatpush1.bf16.xpose.msra.mxu0 0
        %784 = vmatprep.subr.bf16.mxu0 0
        %785 = vmatpush1.bf16.xpose.msra.mxu0 0
        %786 = vmatprep.subr.bf16.mxu0 0
        %787 = vmatpush1.bf16.xpose.msra.mxu0 0
        %788 = vmatprep.subr.bf16.mxu0 0
        %789 = vmatpush1.bf16.xpose.msra.mxu0 0
        %790 = vmatprep.subr.bf16.mxu0 0
        %791 = vmatpush1.bf16.xpose.msra.mxu0 0
        %792 = vmatprep.subr.bf16.mxu0 0
        %793 = vmatpush1.bf16.xpose.msra.mxu0 0
        %794 = vmatprep.subr.bf16.mxu0 0
        %795 = vmatpush1.bf16.xpose.msra.mxu0 0
        %796 = vmatprep.mubr.bf16.mxu0 0
        %797 = vmatmul.mubr.bf16.gmra.mrb[0].mxu0 %v759
        %v798 = vpop.f32.mrb[0].mxu0
        %v799 = vadd.f32 0.0, %v798
        %v800 = vpop.f32.mrb[0].mxu0
        %v801 = vpop.f32.mrb[0].mxu0
        %v802 = vpop.f32.mrb[0].mxu0
        %803 = vdwg.mxu0
        %v804 = vsel %vm472, %v799, -inf
        %805 = vmax.xlane.f32.xlu0 %v804
        %v806 = vpop.xlane.xlu0 %805
        %v807 = vsub.f32 %v799, %v806
        %v808 = vmul.f32 %v807, 1.442695
        %v809 = vpow.pop %v808
        %v810 = vsel %vm472, %v809, 0.0
        %811 = vadd.xlane.f32.xlu0 %v810
        %v812 = vpop.xlane.xlu0 %811
        %v813 = vpack.c.bf16 %v809, %v809
        %814 = vrot.lane.b32.xlu0 %v421, 52
        %v815 = vpop.permute.xlu0 %814
        %v817 = vsel %vm472, %v813, 0
        %v820 = vsel %vm488, %v815, 0
        %822 = vmatprep.subr.bf16.mxu0 0
        %823 = vmatpush1.bf16.msra.mxu0 %v820
        %824 = vmatprep.subr.bf16.mxu0 0
        %825 = vmatpush1.bf16.msra.mxu0 0
        %826 = vmatprep.subr.bf16.mxu0 0
        %827 = vmatpush1.bf16.msra.mxu0 0
        %828 = vmatprep.subr.bf16.mxu0 0
        %829 = vmatpush1.bf16.msra.mxu0 0
        %830 = vmatprep.subr.bf16.mxu0 0
        %831 = vmatpush1.bf16.msra.mxu0 0
        %832 = vmatprep.subr.bf16.mxu0 0
        %833 = vmatpush1.bf16.msra.mxu0 0
        %834 = vmatprep.subr.bf16.mxu0 0
        %835 = vmatpush1.bf16.msra.mxu0 0
        %836 = vmatprep.subr.bf16.mxu0 0
        %837 = vmatpush1.bf16.msra.mxu0 0
        %838 = vmatprep.subr.bf16.mxu0 0
        %839 = vmatpush1.bf16.msra.mxu0 0
        %840 = vmatprep.subr.bf16.mxu0 0
        %841 = vmatpush1.bf16.msra.mxu0 0
        %842 = vmatprep.subr.bf16.mxu0 0
        %843 = vmatpush1.bf16.msra.mxu0 0
        %844 = vmatprep.subr.bf16.mxu0 0
        %845 = vmatpush1.bf16.msra.mxu0 0
        %846 = vmatprep.subr.bf16.mxu0 0
        %847 = vmatpush1.bf16.msra.mxu0 0
        %848 = vmatprep.subr.bf16.mxu0 0
        %849 = vmatpush1.bf16.msra.mxu0 0
        %850 = vmatprep.subr.bf16.mxu0 0
        %851 = vmatpush1.bf16.msra.mxu0 0
        %852 = vmatprep.subr.bf16.mxu0 0
        %853 = vmatpush1.bf16.msra.mxu0 0
        %854 = vmatprep.mubr.bf16.mxu0 0
        %855 = vmatmul.mubr.bf16.gmra.mrb[0].mxu0 %v817
        %v856 = vpop.f32.mrb[0].mxu0
        %v857 = vadd.f32 0.0, %v856
        %v858 = vpop.f32.mrb[0].mxu0
        %v859 = vpop.f32.mrb[0].mxu0
        %v860 = vpop.f32.mrb[0].mxu0
        %861 = vdwg.mxu0
        %v862 = vrcp.pop %v812
        %v863 = vmul.f32 %v857, %v862
        %864 = vrot.lane.b32.xlu0 %v421, 112
        %v865 = vpop.permute.xlu0 %864
        %866 = vrot.lane.b32.xlu0 %v421, 80
        %v867 = vpop.permute.xlu0 %866
        %v869 = vsel %vm425, %v865, 0
        %v872 = vsel %vm425, %v867, 0
        %874 = vmatprep.subr.bf16.mxu0 0
        %875 = vmatpush1.bf16.xpose.msra.mxu0 %v872
        %876 = vmatprep.subr.bf16.mxu0 0
        %877 = vmatpush1.bf16.xpose.msra.mxu0 0
        %878 = vmatprep.subr.bf16.mxu0 0
        %879 = vmatpush1.bf16.xpose.msra.mxu0 0
        %880 = vmatprep.subr.bf16.mxu0 0
        %881 = vmatpush1.bf16.xpose.msra.mxu0 0
        %882 = vmatprep.subr.bf16.mxu0 0
        %883 = vmatpush1.bf16.xpose.msra.mxu0 0
        %884 = vmatprep.subr.bf16.mxu0 0
        %885 = vmatpush1.bf16.xpose.msra.mxu0 0
        %886 = vmatprep.subr.bf16.mxu0 0
        %887 = vmatpush1.bf16.xpose.msra.mxu0 0
        %888 = vmatprep.subr.bf16.mxu0 0
        %889 = vmatpush1.bf16.xpose.msra.mxu0 0
        %890 = vmatprep.subr.bf16.mxu0 0
        %891 = vmatpush1.bf16.xpose.msra.mxu0 0
        %892 = vmatprep.subr.bf16.mxu0 0
        %893 = vmatpush1.bf16.xpose.msra.mxu0 0
        %894 = vmatprep.subr.bf16.mxu0 0
        %895 = vmatpush1.bf16.xpose.msra.mxu0 0
        %896 = vmatprep.subr.bf16.mxu0 0
        %897 = vmatpush1.bf16.xpose.msra.mxu0 0
        %898 = vmatprep.subr.bf16.mxu0 0
        %899 = vmatpush1.bf16.xpose.msra.mxu0 0
        %900 = vmatprep.subr.bf16.mxu0 0
        %901 = vmatpush1.bf16.xpose.msra.mxu0 0
        %902 = vmatprep.subr.bf16.mxu0 0
        %903 = vmatpush1.bf16.xpose.msra.mxu0 0
        %904 = vmatprep.subr.bf16.mxu0 0
        %905 = vmatpush1.bf16.xpose.msra.mxu0 0
        %906 = vmatprep.mubr.bf16.mxu0 0
        %907 = vmatmul.mubr.bf16.gmra.mrb[0].mxu0 %v869
        %v908 = vpop.f32.mrb[0].mxu0
        %v909 = vadd.f32 0.0, %v908
        %v910 = vpop.f32.mrb[0].mxu0
        %v911 = vpop.f32.mrb[0].mxu0
        %v912 = vpop.f32.mrb[0].mxu0
        %913 = vdwg.mxu0
        %v914 = vsel %vm472, %v909, -inf
        %915 = vmax.xlane.f32.xlu0 %v914
        %v916 = vpop.xlane.xlu0 %915
        %v917 = vsub.f32 %v909, %v916
        %v918 = vmul.f32 %v917, 1.442695
        %v919 = vpow.pop %v918
        %v920 = vsel %vm472, %v919, 0.0
        %921 = vadd.xlane.f32.xlu0 %v920
        %v922 = vpop.xlane.xlu0 %921
        %v923 = vpack.c.bf16 %v919, %v919
        %924 = vrot.lane.b32.xlu0 %v421, 48
        %v925 = vpop.permute.xlu0 %924
        %v927 = vsel %vm472, %v923, 0
        %v930 = vsel %vm488, %v925, 0
        %932 = vmatprep.subr.bf16.mxu0 0
        %933 = vmatpush1.bf16.msra.mxu0 %v930
        %934 = vmatprep.subr.bf16.mxu0 0
        %935 = vmatpush1.bf16.msra.mxu0 0
        %936 = vmatprep.subr.bf16.mxu0 0
        %937 = vmatpush1.bf16.msra.mxu0 0
        %938 = vmatprep.subr.bf16.mxu0 0
        %939 = vmatpush1.bf16.msra.mxu0 0
        %940 = vmatprep.subr.bf16.mxu0 0
        %941 = vmatpush1.bf16.msra.mxu0 0
        %942 = vmatprep.subr.bf16.mxu0 0
        %943 = vmatpush1.bf16.msra.mxu0 0
        %944 = vmatprep.subr.bf16.mxu0 0
        %945 = vmatpush1.bf16.msra.mxu0 0
        %946 = vmatprep.subr.bf16.mxu0 0
        %947 = vmatpush1.bf16.msra.mxu0 0
        %948 = vmatprep.subr.bf16.mxu0 0
        %949 = vmatpush1.bf16.msra.mxu0 0
        %950 = vmatprep.subr.bf16.mxu0 0
        %951 = vmatpush1.bf16.msra.mxu0 0
        %952 = vmatprep.subr.bf16.mxu0 0
        %953 = vmatpush1.bf16.msra.mxu0 0
        %954 = vmatprep.subr.bf16.mxu0 0
        %955 = vmatpush1.bf16.msra.mxu0 0
        %956 = vmatprep.subr.bf16.mxu0 0
        %957 = vmatpush1.bf16.msra.mxu0 0
        %958 = vmatprep.subr.bf16.mxu0 0
        %959 = vmatpush1.bf16.msra.mxu0 0
        %960 = vmatprep.subr.bf16.mxu0 0
        %961 = vmatpush1.bf16.msra.mxu0 0
        %962 = vmatprep.subr.bf16.mxu0 0
        %963 = vmatpush1.bf16.msra.mxu0 0
        %964 = vmatprep.mubr.bf16.mxu0 0
        %965 = vmatmul.mubr.bf16.gmra.mrb[0].mxu0 %v927
        %v966 = vpop.f32.mrb[0].mxu0
        %v967 = vadd.f32 0.0, %v966
        %v968 = vpop.f32.mrb[0].mxu0
        %v969 = vpop.f32.mrb[0].mxu0
        %v970 = vpop.f32.mrb[0].mxu0
        %971 = vdwg.mxu0
        %v972 = vrcp.pop %v922
        %v973 = vmul.f32 %v967, %v972
        %974 = vrot.lane.b32.xlu0 %v421, 108
        %v975 = vpop.permute.xlu0 %974
        %976 = vrot.lane.b32.xlu0 %v421, 76
        %v977 = vpop.permute.xlu0 %976
        %v979 = vsel %vm425, %v975, 0
        %v982 = vsel %vm425, %v977, 0
        %984 = vmatprep.subr.bf16.mxu0 0
        %985 = vmatpush1.bf16.xpose.msra.mxu0 %v982
        %986 = vmatprep.subr.bf16.mxu0 0
        %987 = vmatpush1.bf16.xpose.msra.mxu0 0
        %988 = vmatprep.subr.bf16.mxu0 0
        %989 = vmatpush1.bf16.xpose.msra.mxu0 0
        %990 = vmatprep.subr.bf16.mxu0 0
        %991 = vmatpush1.bf16.xpose.msra.mxu0 0
        %992 = vmatprep.subr.bf16.mxu0 0
        %993 = vmatpush1.bf16.xpose.msra.mxu0 0
        %994 = vmatprep.subr.bf16.mxu0 0
        %995 = vmatpush1.bf16.xpose.msra.mxu0 0
        %996 = vmatprep.subr.bf16.mxu0 0
        %997 = vmatpush1.bf16.xpose.msra.mxu0 0
        %998 = vmatprep.subr.bf16.mxu0 0
        %999 = vmatpush1.bf16.xpose.msra.mxu0 0
        %1000 = vmatprep.subr.bf16.mxu0 0
        %1001 = vmatpush1.bf16.xpose.msra.mxu0 0
        %1002 = vmatprep.subr.bf16.mxu0 0
        %1003 = vmatpush1.bf16.xpose.msra.mxu0 0
        %1004 = vmatprep.subr.bf16.mxu0 0
        %1005 = vmatpush1.bf16.xpose.msra.mxu0 0
        %1006 = vmatprep.subr.bf16.mxu0 0
        %1007 = vmatpush1.bf16.xpose.msra.mxu0 0
        %1008 = vmatprep.subr.bf16.mxu0 0
        %1009 = vmatpush1.bf16.xpose.msra.mxu0 0
        %1010 = vmatprep.subr.bf16.mxu0 0
        %1011 = vmatpush1.bf16.xpose.msra.mxu0 0
        %1012 = vmatprep.subr.bf16.mxu0 0
        %1013 = vmatpush1.bf16.xpose.msra.mxu0 0
        %1014 = vmatprep.subr.bf16.mxu0 0
        %1015 = vmatpush1.bf16.xpose.msra.mxu0 0
        %1016 = vmatprep.mubr.bf16.mxu0 0
        %1017 = vmatmul.mubr.bf16.gmra.mrb[0].mxu0 %v979
        %v1018 = vpop.f32.mrb[0].mxu0
        %v1019 = vadd.f32 0.0, %v1018
        %v1020 = vpop.f32.mrb[0].mxu0
        %v1021 = vpop.f32.mrb[0].mxu0
        %v1022 = vpop.f32.mrb[0].mxu0
        %1023 = vdwg.mxu0
        %v1024 = vsel %vm472, %v1019, -inf
        %1025 = vmax.xlane.f32.xlu0 %v1024
        %v1026 = vpop.xlane.xlu0 %1025
        %v1027 = vsub.f32 %v1019, %v1026
        %v1028 = vmul.f32 %v1027, 1.442695
        %v1029 = vpow.pop %v1028
        %v1030 = vsel %vm472, %v1029, 0.0
        %1031 = vadd.xlane.f32.xlu0 %v1030
        %v1032 = vpop.xlane.xlu0 %1031
        %v1033 = vpack.c.bf16 %v1029, %v1029
        %1034 = vrot.lane.b32.xlu0 %v421, 44
        %v1035 = vpop.permute.xlu0 %1034
        %v1037 = vsel %vm472, %v1033, 0
        %v1040 = vsel %vm488, %v1035, 0
        %1042 = vmatprep.subr.bf16.mxu0 0
        %1043 = vmatpush1.bf16.msra.mxu0 %v1040
        %1044 = vmatprep.subr.bf16.mxu0 0
        %1045 = vmatpush1.bf16.msra.mxu0 0
        %1046 = vmatprep.subr.bf16.mxu0 0
        %1047 = vmatpush1.bf16.msra.mxu0 0
        %1048 = vmatprep.subr.bf16.mxu0 0
        %1049 = vmatpush1.bf16.msra.mxu0 0
        %1050 = vmatprep.subr.bf16.mxu0 0
        %1051 = vmatpush1.bf16.msra.mxu0 0
        %1052 = vmatprep.subr.bf16.mxu0 0
        %1053 = vmatpush1.bf16.msra.mxu0 0
        %1054 = vmatprep.subr.bf16.mxu0 0
        %1055 = vmatpush1.bf16.msra.mxu0 0
        %1056 = vmatprep.subr.bf16.mxu0 0
        %1057 = vmatpush1.bf16.msra.mxu0 0
        %1058 = vmatprep.subr.bf16.mxu0 0
        %1059 = vmatpush1.bf16.msra.mxu0 0
        %1060 = vmatprep.subr.bf16.mxu0 0
        %1061 = vmatpush1.bf16.msra.mxu0 0
        %1062 = vmatprep.subr.bf16.mxu0 0
        %1063 = vmatpush1.bf16.msra.mxu0 0
        %1064 = vmatprep.subr.bf16.mxu0 0
        %1065 = vmatpush1.bf16.msra.mxu0 0
        %1066 = vmatprep.subr.bf16.mxu0 0
        %1067 = vmatpush1.bf16.msra.mxu0 0
        %1068 = vmatprep.subr.bf16.mxu0 0
        %1069 = vmatpush1.bf16.msra.mxu0 0
        %1070 = vmatprep.subr.bf16.mxu0 0
        %1071 = vmatpush1.bf16.msra.mxu0 0
        %1072 = vmatprep.subr.bf16.mxu0 0
        %1073 = vmatpush1.bf16.msra.mxu0 0
        %1074 = vmatprep.mubr.bf16.mxu0 0
        %1075 = vmatmul.mubr.bf16.gmra.mrb[0].mxu0 %v1037
        %v1076 = vpop.f32.mrb[0].mxu0
        %v1077 = vadd.f32 0.0, %v1076
        %v1078 = vpop.f32.mrb[0].mxu0
        %v1079 = vpop.f32.mrb[0].mxu0
        %v1080 = vpop.f32.mrb[0].mxu0
        %1081 = vdwg.mxu0
        %v1082 = vrcp.pop %v1032
        %v1083 = vmul.f32 %v1077, %v1082
        %1084 = vrot.lane.b32.xlu0 %v421, 104
        %v1085 = vpop.permute.xlu0 %1084
        %1086 = vrot.lane.b32.xlu0 %v421, 72
        %v1087 = vpop.permute.xlu0 %1086
        %v1089 = vsel %vm425, %v1085, 0
        %v1092 = vsel %vm425, %v1087, 0
        %1094 = vmatprep.subr.bf16.mxu0 0
        %1095 = vmatpush1.bf16.xpose.msra.mxu0 %v1092
        %1096 = vmatprep.subr.bf16.mxu0 0
        %1097 = vmatpush1.bf16.xpose.msra.mxu0 0
        %1098 = vmatprep.subr.bf16.mxu0 0
        %1099 = vmatpush1.bf16.xpose.msra.mxu0 0
        %1100 = vmatprep.subr.bf16.mxu0 0
        %1101 = vmatpush1.bf16.xpose.msra.mxu0 0
        %1102 = vmatprep.subr.bf16.mxu0 0
        %1103 = vmatpush1.bf16.xpose.msra.mxu0 0
        %1104 = vmatprep.subr.bf16.mxu0 0
        %1105 = vmatpush1.bf16.xpose.msra.mxu0 0
        %1106 = vmatprep.subr.bf16.mxu0 0
        %1107 = vmatpush1.bf16.xpose.msra.mxu0 0
        %1108 = vmatprep.subr.bf16.mxu0 0
        %1109 = vmatpush1.bf16.xpose.msra.mxu0 0
        %1110 = vmatprep.subr.bf16.mxu0 0
        %1111 = vmatpush1.bf16.xpose.msra.mxu0 0
        %1112 = vmatprep.subr.bf16.mxu0 0
        %1113 = vmatpush1.bf16.xpose.msra.mxu0 0
        %1114 = vmatprep.subr.bf16.mxu0 0
        %1115 = vmatpush1.bf16.xpose.msra.mxu0 0
        %1116 = vmatprep.subr.bf16.mxu0 0
        %1117 = vmatpush1.bf16.xpose.msra.mxu0 0
        %1118 = vmatprep.subr.bf16.mxu0 0
        %1119 = vmatpush1.bf16.xpose.msra.mxu0 0
        %1120 = vmatprep.subr.bf16.mxu0 0
        %1121 = vmatpush1.bf16.xpose.msra.mxu0 0
        %1122 = vmatprep.subr.bf16.mxu0 0
        %1123 = vmatpush1.bf16.xpose.msra.mxu0 0
        %1124 = vmatprep.subr.bf16.mxu0 0
        %1125 = vmatpush1.bf16.xpose.msra.mxu0 0
        %1126 = vmatprep.mubr.bf16.mxu0 0
        %1127 = vmatmul.mubr.bf16.gmra.mrb[0].mxu0 %v1089
        %v1128 = vpop.f32.mrb[0].mxu0
        %v1129 = vadd.f32 0.0, %v1128
        %v1130 = vpop.f32.mrb[0].mxu0
        %v1131 = vpop.f32.mrb[0].mxu0
        %v1132 = vpop.f32.mrb[0].mxu0
        %1133 = vdwg.mxu0
        %v1134 = vsel %vm472, %v1129, -inf
        %1135 = vmax.xlane.f32.xlu0 %v1134
        %v1136 = vpop.xlane.xlu0 %1135
        %v1137 = vsub.f32 %v1129, %v1136
        %v1138 = vmul.f32 %v1137, 1.442695
        %v1139 = vpow.pop %v1138
        %v1140 = vsel %vm472, %v1139, 0.0
        %1141 = vadd.xlane.f32.xlu0 %v1140
        %v1142 = vpop.xlane.xlu0 %1141
        %v1143 = vpack.c.bf16 %v1139, %v1139
        %1144 = vrot.lane.b32.xlu0 %v421, 40
        %v1145 = vpop.permute.xlu0 %1144
        %v1147 = vsel %vm472, %v1143, 0
        %v1150 = vsel %vm488, %v1145, 0
        %1152 = vmatprep.subr.bf16.mxu0 0
        %1153 = vmatpush1.bf16.msra.mxu0 %v1150
        %1154 = vmatprep.subr.bf16.mxu0 0
        %1155 = vmatpush1.bf16.msra.mxu0 0
        %1156 = vmatprep.subr.bf16.mxu0 0
        %1157 = vmatpush1.bf16.msra.mxu0 0
        %1158 = vmatprep.subr.bf16.mxu0 0
        %1159 = vmatpush1.bf16.msra.mxu0 0
        %1160 = vmatprep.subr.bf16.mxu0 0
        %1161 = vmatpush1.bf16.msra.mxu0 0
        %1162 = vmatprep.subr.bf16.mxu0 0
        %1163 = vmatpush1.bf16.msra.mxu0 0
        %1164 = vmatprep.subr.bf16.mxu0 0
        %1165 = vmatpush1.bf16.msra.mxu0 0
        %1166 = vmatprep.subr.bf16.mxu0 0
        %1167 = vmatpush1.bf16.msra.mxu0 0
        %1168 = vmatprep.subr.bf16.mxu0 0
        %1169 = vmatpush1.bf16.msra.mxu0 0
        %1170 = vmatprep.subr.bf16.mxu0 0
        %1171 = vmatpush1.bf16.msra.mxu0 0
        %1172 = vmatprep.subr.bf16.mxu0 0
        %1173 = vmatpush1.bf16.msra.mxu0 0
        %1174 = vmatprep.subr.bf16.mxu0 0
        %1175 = vmatpush1.bf16.msra.mxu0 0
        %1176 = vmatprep.subr.bf16.mxu0 0
        %1177 = vmatpush1.bf16.msra.mxu0 0
        %1178 = vmatprep.subr.bf16.mxu0 0
        %1179 = vmatpush1.bf16.msra.mxu0 0
        %1180 = vmatprep.subr.bf16.mxu0 0
        %1181 = vmatpush1.bf16.msra.mxu0 0
        %1182 = vmatprep.subr.bf16.mxu0 0
        %1183 = vmatpush1.bf16.msra.mxu0 0
        %1184 = vmatprep.mubr.bf16.mxu0 0
        %1185 = vmatmul.mubr.bf16.gmra.mrb[0].mxu0 %v1147
        %v1186 = vpop.f32.mrb[0].mxu0
        %v1187 = vadd.f32 0.0, %v1186
        %v1188 = vpop.f32.mrb[0].mxu0
        %v1189 = vpop.f32.mrb[0].mxu0
        %v1190 = vpop.f32.mrb[0].mxu0
        %1191 = vdwg.mxu0
        %v1192 = vrcp.pop %v1142
        %v1193 = vmul.f32 %v1187, %v1192
        %1194 = vrot.lane.b32.xlu0 %v421, 100
        %v1195 = vpop.permute.xlu0 %1194
        %1196 = vrot.lane.b32.xlu0 %v421, 68
        %v1197 = vpop.permute.xlu0 %1196
        %v1199 = vsel %vm425, %v1195, 0
        %v1202 = vsel %vm425, %v1197, 0
        %1204 = vmatprep.subr.bf16.mxu0 0
        %1205 = vmatpush1.bf16.xpose.msra.mxu0 %v1202
        %1206 = vmatprep.subr.bf16.mxu0 0
        %1207 = vmatpush1.bf16.xpose.msra.mxu0 0
        %1208 = vmatprep.subr.bf16.mxu0 0
        %1209 = vmatpush1.bf16.xpose.msra.mxu0 0
        %1210 = vmatprep.subr.bf16.mxu0 0
        %1211 = vmatpush1.bf16.xpose.msra.mxu0 0
        %1212 = vmatprep.subr.bf16.mxu0 0
        %1213 = vmatpush1.bf16.xpose.msra.mxu0 0
        %1214 = vmatprep.subr.bf16.mxu0 0
        %1215 = vmatpush1.bf16.xpose.msra.mxu0 0
        %1216 = vmatprep.subr.bf16.mxu0 0
        %1217 = vmatpush1.bf16.xpose.msra.mxu0 0
        %1218 = vmatprep.subr.bf16.mxu0 0
        %1219 = vmatpush1.bf16.xpose.msra.mxu0 0
        %1220 = vmatprep.subr.bf16.mxu0 0
        %1221 = vmatpush1.bf16.xpose.msra.mxu0 0
        %1222 = vmatprep.subr.bf16.mxu0 0
        %1223 = vmatpush1.bf16.xpose.msra.mxu0 0
        %1224 = vmatprep.subr.bf16.mxu0 0
        %1225 = vmatpush1.bf16.xpose.msra.mxu0 0
        %1226 = vmatprep.subr.bf16.mxu0 0
        %1227 = vmatpush1.bf16.xpose.msra.mxu0 0
        %1228 = vmatprep.subr.bf16.mxu0 0
        %1229 = vmatpush1.bf16.xpose.msra.mxu0 0
        %1230 = vmatprep.subr.bf16.mxu0 0
        %1231 = vmatpush1.bf16.xpose.msra.mxu0 0
        %1232 = vmatprep.subr.bf16.mxu0 0
        %1233 = vmatpush1.bf16.xpose.msra.mxu0 0
        %1234 = vmatprep.subr.bf16.mxu0 0
        %1235 = vmatpush1.bf16.xpose.msra.mxu0 0
        %1236 = vmatprep.mubr.bf16.mxu0 0
        %1237 = vmatmul.mubr.bf16.gmra.mrb[0].mxu0 %v1199
        %v1238 = vpop.f32.mrb[0].mxu0
        %v1239 = vadd.f32 0.0, %v1238
        %v1240 = vpop.f32.mrb[0].mxu0
        %v1241 = vpop.f32.mrb[0].mxu0
        %v1242 = vpop.f32.mrb[0].mxu0
        %1243 = vdwg.mxu0
        %v1244 = vsel %vm472, %v1239, -inf
        %1245 = vmax.xlane.f32.xlu0 %v1244
        %v1246 = vpop.xlane.xlu0 %1245
        %v1247 = vsub.f32 %v1239, %v1246
        %v1248 = vmul.f32 %v1247, 1.442695
        %v1249 = vpow.pop %v1248
        %v1250 = vsel %vm472, %v1249, 0.0
        %1251 = vadd.xlane.f32.xlu0 %v1250
        %v1252 = vpop.xlane.xlu0 %1251
        %v1253 = vpack.c.bf16 %v1249, %v1249
        %1254 = vrot.lane.b32.xlu0 %v421, 36
        %v1255 = vpop.permute.xlu0 %1254
        %v1257 = vsel %vm472, %v1253, 0
        %v1260 = vsel %vm488, %v1255, 0
        %1262 = vmatprep.subr.bf16.mxu0 0
        %1263 = vmatpush1.bf16.msra.mxu0 %v1260
        %1264 = vmatprep.subr.bf16.mxu0 0
        %1265 = vmatpush1.bf16.msra.mxu0 0
        %1266 = vmatprep.subr.bf16.mxu0 0
        %1267 = vmatpush1.bf16.msra.mxu0 0
        %1268 = vmatprep.subr.bf16.mxu0 0
        %1269 = vmatpush1.bf16.msra.mxu0 0
        %1270 = vmatprep.subr.bf16.mxu0 0
        %1271 = vmatpush1.bf16.msra.mxu0 0
        %1272 = vmatprep.subr.bf16.mxu0 0
        %1273 = vmatpush1.bf16.msra.mxu0 0
        %1274 = vmatprep.subr.bf16.mxu0 0
        %1275 = vmatpush1.bf16.msra.mxu0 0
        %1276 = vmatprep.subr.bf16.mxu0 0
        %1277 = vmatpush1.bf16.msra.mxu0 0
        %1278 = vmatprep.subr.bf16.mxu0 0
        %1279 = vmatpush1.bf16.msra.mxu0 0
        %1280 = vmatprep.subr.bf16.mxu0 0
        %1281 = vmatpush1.bf16.msra.mxu0 0
        %1282 = vmatprep.subr.bf16.mxu0 0
        %1283 = vmatpush1.bf16.msra.mxu0 0
        %1284 = vmatprep.subr.bf16.mxu0 0
        %1285 = vmatpush1.bf16.msra.mxu0 0
        %1286 = vmatprep.subr.bf16.mxu0 0
        %1287 = vmatpush1.bf16.msra.mxu0 0
        %1288 = vmatprep.subr.bf16.mxu0 0
        %1289 = vmatpush1.bf16.msra.mxu0 0
        %1290 = vmatprep.subr.bf16.mxu0 0
        %1291 = vmatpush1.bf16.msra.mxu0 0
        %1292 = vmatprep.subr.bf16.mxu0 0
        %1293 = vmatpush1.bf16.msra.mxu0 0
        %1294 = vmatprep.mubr.bf16.mxu0 0
        %1295 = vmatmul.mubr.bf16.gmra.mrb[0].mxu0 %v1257
        %v1296 = vpop.f32.mrb[0].mxu0
        %v1297 = vadd.f32 0.0, %v1296
        %v1298 = vpop.f32.mrb[0].mxu0
        %v1299 = vpop.f32.mrb[0].mxu0
        %v1300 = vpop.f32.mrb[0].mxu0
        %1301 = vdwg.mxu0
        %v1302 = vrcp.pop %v1252
        %v1303 = vmul.f32 %v1297, %v1302
        %1305 = vrot.lane.b32.xlu0 %v643, 4
        %v1306 = vpop.permute.xlu0 %1305
        %1309 = vrot.lane.b32.xlu0 %v753, 8
        %v1310 = vpop.permute.xlu0 %1309
        %1313 = vrot.lane.b32.xlu0 %v863, 12
        %v1314 = vpop.permute.xlu0 %1313
        %1317 = vrot.lane.b32.xlu0 %v973, 16
        %v1318 = vpop.permute.xlu0 %1317
        %1321 = vrot.lane.b32.xlu0 %v1083, 20
        %v1322 = vpop.permute.xlu0 %1321
        %1325 = vrot.lane.b32.xlu0 %v1193, 24
        %v1326 = vpop.permute.xlu0 %1325
        %1329 = vrot.lane.b32.xlu0 %v1303, 28
        %v1330 = vpop.permute.xlu0 %1329
        %v1332 = vsel %vm425, %v533, %v1306
        %v1333 = vsel %vm472, %v1332, %v1310
        %vm1334 = vcmask 97280
        %v1335 = vsel %vm1334, %v1333, %v1314
        %vm1336 = vcmask 130048
        %v1337 = vsel %vm1336, %v1335, %v1318
        %vm1338 = vcmask 162816
        %v1339 = vsel %vm1338, %v1337, %v1322
        %vm1340 = vcmask 195584
        %v1341 = vsel %vm1340, %v1339, %v1326
        %vm1342 = vcmask 228352
        %v1343 = vsel %vm1342, %v1341, %v1330
        %v1344 = vpack.c.bf16 %v1343, %v1343
        %v1345 = vld [vmem:[%s5] sm:$0xf]
        %v1346 = vld [vmem:[%s5 + $0x4] sm:$0xf]
        %v1347 = vld [vmem:[%s5 + $0x8] sm:$0xf]
        %v1348 = vld [vmem:[%s5 + $0xc] sm:$0xf]
        %v1353 = vunpack.c.l.b16 %v1345
        %v1354 = vunpack.c.l.b16 %v1346
        %v1355 = vunpack.c.l.b16 %v1347
        %v1356 = vunpack.c.l.b16 %v1348
        %v1357 = vpack.c.b16 %v1354, %v1353
        %v1358 = vpack.c.b16 %v1356, %v1355
        %v1362 = vsel %vm323, %v1344, 0
        %1364 = vmatprep.subr.bf16.mxu0 0
        %1365 = vmatpush1.bf16.msra.mxu0 %v1357
        %1366 = vmatprep.subr.bf16.mxu0 0
        %1367 = vmatpush1.bf16.msra.mxu0 %v1358
        %1368 = vmatprep.subr.bf16.mxu0 0
        %1369 = vmatpush1.bf16.msra.mxu0 0
        %1370 = vmatprep.subr.bf16.mxu0 0
        %1371 = vmatpush1.bf16.msra.mxu0 0
        %1372 = vmatprep.subr.bf16.mxu0 0
        %1373 = vmatpush1.bf16.msra.mxu0 0
        %1374 = vmatprep.subr.bf16.mxu0 0
        %1375 = vmatpush1.bf16.msra.mxu0 0
        %1376 = vmatprep.subr.bf16.mxu0 0
        %1377 = vmatpush1.bf16.msra.mxu0 0
        %1378 = vmatprep.subr.bf16.mxu0 0
        %1379 = vmatpush1.bf16.msra.mxu0 0
        %1380 = vmatprep.subr.bf16.mxu0 0
        %1381 = vmatpush1.bf16.msra.mxu0 0
        %1382 = vmatprep.subr.bf16.mxu0 0
        %1383 = vmatpush1.bf16.msra.mxu0 0
        %1384 = vmatprep.subr.bf16.mxu0 0
        %1385 = vmatpush1.bf16.msra.mxu0 0
        %1386 = vmatprep.subr.bf16.mxu0 0
        %1387 = vmatpush1.bf16.msra.mxu0 0
        %1388 = vmatprep.subr.bf16.mxu0 0
        %1389 = vmatpush1.bf16.msra.mxu0 0
        %1390 = vmatprep.subr.bf16.mxu0 0
        %1391 = vmatpush1.bf16.msra.mxu0 0
        %1392 = vmatprep.subr.bf16.mxu0 0
        %1393 = vmatpush1.bf16.msra.mxu0 0
        %1394 = vmatprep.subr.bf16.mxu0 0
        %1395 = vmatpush1.bf16.msra.mxu0 0
        %1396 = vmatprep.mubr.bf16.mxu0 0
        %1397 = vmatmul.mubr.bf16.gmra.mrb[0].mxu0 %v1362
        %v1398 = vpop.f32.mrb[0].mxu0
        %v1399 = vadd.f32 0.0, %v1398
        %v1400 = vpop.f32.mrb[0].mxu0
        %v1401 = vpop.f32.mrb[0].mxu0
        %v1402 = vpop.f32.mrb[0].mxu0
        %1403 = vdwg.mxu0
        %v1404 = vadd.f32 %v353, %v1399
        %v1405 = vld [vmem:[%s6] sm:$0x1]
        %v1407 = vlaneseq
        %v1408 = vshrl.u32 %v1407, 7
        %v1409 = vsub.s32 0, %v1408
        %v1410 = vrot.slane %v1405, %v1409
        %v1412 = vadd.f32 %v1404, %v1410
        %1413 = vst.msk [vmem:[%s320] sm:$0xff] %vm323, %v1412
        %s1414 = sand.u32 %s185, 1
        %s1415 = scalar_lea.sflag [#allocation4], %s1414
        %s1416 = sand.u32 %s185, 1
        %s1417 = smul.addr %s1416, 8
        %s1418 = scalar_lea.vmem [#allocation8], %s1417
        // Predicated region
        $region61: #{tpu_custom_call.1} parent=47 // pred_check
          %p1419 = pneg %p195
        $region62: #{tpu_custom_call.1} parent=47 // pred_check_branch
          %1421 = sbr.rel (%p1419) target = $region64
        $region63: #{tpu_custom_call.1} parent=47 // pred_region
          %s1423 = ssub.s32 128, 128
          %1424 = vsyncadd %s1415, %s1423
          %s1425 = smul.addr %s25, 128
          %s1426 = scalar_lea.hbm %s7, %s1425
          %s1428 = sshll.u32 %s1418, 4
          %s1429 = int_to_ptr.vmem [resolvable:$true] %s1428
          %1431 = dma.vmem_to_hbm [thread:$0]  %s1429, 128, %s1426, %s1415
        $region64: #{tpu_custom_call.1} parent=47 // pred_fallthru
          _
      $region48: #{tpu_custom_call.1} parent=5 // pred_fallthru
        _
      %p1432 = scmp.le.s32.totalorder 2, %s20
      // Predicated region
      $region65: #{tpu_custom_call.1} parent=5 // pred_check
        %p1433 = pneg %p1432
      $region66: #{tpu_custom_call.1} parent=5 // pred_check_branch
        %1435 = sbr.rel (%p1433) target = $region68
      $region67: #{tpu_custom_call.1} parent=5 // pred_region
        %s1436 = ssub.s32 %s20, 2
        // Predicated region
        $region69: #{tpu_custom_call.1} parent=67 // pred_check
          %p1437 = pneg %p201
        $region70: #{tpu_custom_call.1} parent=67 // pred_check_branch
          %1439 = sbr.rel (%p1437) target = $region72
        $region71: #{tpu_custom_call.1} parent=67 // pred_region
          %s1440 = sand.u32 %s186, 1
          %s1441 = scalar_lea.sflag [#allocation4], %s1440
          %s1442 = sand.u32 %s186, 1
          %s1443 = smul.addr %s1442, 8
          %s1444 = scalar_lea.vmem [#allocation8], %s1443
          %1445 = dma.done %s1441, 128
        $region72: #{tpu_custom_call.1} parent=67 // pred_fallthru
          _
      $region68: #{tpu_custom_call.1} parent=5 // pred_fallthru
        _
    $region6: #{tpu_custom_call.1} parent=1 // loop_footer
      %s24 = sadd.s32 1, %s20
    $region7: #{tpu_custom_call.1} parent=1 // loop_footer_branch
      %19 = sbr.rel target = $region3
    $region8: #{tpu_custom_call.1} parent=1 // loop_exit
      _
    %1446 = vsyncpa [#allocation3], 1
    %s1447 = scalar_lea.sflag [#allocation3], 1
    %1448 = vsyncpa %s1447, 1
    %1449 = vsyncpa [#allocation6], 1
    %1450 = vsyncpa [#allocation4], 1
    %s1451 = scalar_lea.sflag [#allocation4], 1
    %1452 = vsyncpa %s1451, 1

</llo_original>
